<compile_context>
chip_gen: v5e
topology: v5e:2x2
jax: 0.10.0
libtpu: 0.0.40
codegen_flags: <defaults>
</compile_context>

<pallas_src>
import functools

import jax
import jax.numpy as jnp
from jax import lax
from jax.experimental import pallas as pl
from jax.experimental.pallas import tpu as pltpu


# ---------------------------------------------------------------------------
# Fused Pallas kernel: one grid step == one user's full MAML inner loop
# ---------------------------------------------------------------------------
def _make_local_update_kernel(local_ep: int, lr: float):
    def kernel(axt_ref, adj_ref, w1_ref, b1t_ref, w2t_ref, b2t_ref,
               sup_ref, qry_ref, oht_ref,
               loss_ref, dw1_ref, db1t_ref, dw2t_ref, db2t_ref):
        f32, bf16 = jnp.float32, jnp.bfloat16

        axt = axt_ref[...]          # (F, N) bf16 -- (A @ X)^T, hoisted in wrapper
        adj = adj_ref[...]          # (N, N) bf16
        sup = sup_ref[0]            # (1, N) support mask, pre-scaled by 1/|support|
        qry = qry_ref[0]            # (1, N) query   mask, pre-scaled by 1/|query|
        oht = oht_ref[0]            # (C, N) one-hot labels (classes on sublanes)

        def nll(logpt, mask):
            per_node = jnp.sum(oht * logpt, axis=0, keepdims=True)        # (1, N)
            return -jnp.sum(mask * per_node, keepdims=True)               # (1, 1)

        def fwd_bwd(w1, b1t, w2t, b2t, mask):
            # ---- forward (activations transposed: lane dim = N, lane-dense) ----
            z1t = lax.dot_general(w1.astype(bf16), axt, (((0,), (0,)), ((), ())),
                                  preferred_element_type=f32) + b1t       # (H, N)
            h1t = jnp.maximum(z1t, 0.0)
            h1b = h1t.astype(bf16)
            aht = lax.dot_general(h1b, adj, (((1,), (1,)), ((), ())),
                                  preferred_element_type=f32)             # (H, N) = (A@H1)^T
            z2t = jnp.dot(w2t.astype(bf16), aht.astype(bf16),
                          preferred_element_type=f32) + b2t               # (C, N)
            m = jnp.max(z2t, axis=0, keepdims=True)                       # (1, N)
            e = jnp.exp(z2t - m)
            s = jnp.sum(e, axis=0, keepdims=True)                         # (1, N)
            logpt = z2t - m - jnp.log(s)
            pt = e * pl.reciprocal(s, approx=True)
            # ---- backward of masked NLL w.r.t. (w1, b1, w2, b2) ----
            dz2t = (pt - oht) * mask                                      # (C, N)
            dz2b = dz2t.astype(bf16)
            g2t = jnp.dot(dz2b, adj, preferred_element_type=f32)          # (C, N) = (A^T dz2)^T
            g2b = g2t.astype(bf16)
            dw2t = lax.dot_general(g2b, h1b, (((1,), (1,)), ((), ())),
                                   preferred_element_type=f32)            # (C, H)
            db2t = jnp.sum(dz2t, axis=1, keepdims=True)                   # (C, 1)
            dh1t = lax.dot_general(w2t.astype(bf16), g2b, (((0,), (0,)), ((), ())),
                                   preferred_element_type=f32)            # (H, N)
            dz1t = jnp.where(z1t > 0.0, dh1t, 0.0)                        # (H, N)
            dz1b = dz1t.astype(bf16)
            dw1 = lax.dot_general(axt, dz1b, (((1,), (1,)), ((), ())),
                                  preferred_element_type=f32)             # (F, H)
            db1t = jnp.sum(dz1t, axis=1, keepdims=True)                   # (H, 1)
            return logpt, (dw1, db1t, dw2t, db2t)

        # Fast weights carried in f32.
        w1 = w1_ref[...]            # (F, H)
        b1t = b1t_ref[...]          # (H, 1)
        w2t = w2t_ref[...]          # (C, H)
        b2t = b2t_ref[...]          # (C, 1)

        losses = []
        # local_ep is tiny & static -> keep the Python unroll.
        # TODO(synk): switch to lax.fori_loop carrying the fast weights if
        # local_ep grows beyond ~8 (code size / vreg pressure).
        for _ in range(local_ep):
            logpt, grads = fwd_bwd(w1, b1t, w2t, b2t, sup)
            losses.append(nll(logpt, qry))     # query loss at pre-update weights
            w1 = w1 - lr * grads[0]
            b1t = b1t - lr * grads[1]
            w2t = w2t - lr * grads[2]
            b2t = b2t - lr * grads[3]

        # Final query evaluation; its gradient at the adapted weights is the
        # first-order MAML meta-gradient contribution of this user.
        logpt, qgrads = fwd_bwd(w1, b1t, w2t, b2t, qry)
        losses.append(nll(logpt, qry))

        loss_ref[0] = jnp.concatenate(losses, axis=1)    # (1, local_ep + 1)
        dw1_ref[0] = qgrads[0]
        db1t_ref[0] = qgrads[1]
        dw2t_ref[0] = qgrads[2]
        db2t_ref[0] = qgrads[3]

    return kernel


def _local_update_pallas(axt, adj_b, params_t, supt, qryt, oht, *, lr, local_ep):
    w1, b1t, w2t, b2t = params_t
    F_, N = axt.shape
    H = w1.shape[1]
    C = w2t.shape[0]
    U = oht.shape[0]

    def shared(shape):
        return pl.BlockSpec(shape, lambda u: (0, 0))

    def per_user(shape):
        return pl.BlockSpec(shape, lambda u: (u, 0, 0))

    out_shape = (
        jax.ShapeDtypeStruct((U, 1, local_ep + 1), jnp.float32),   # per-step query losses
        jax.ShapeDtypeStruct((U, F_, H), jnp.float32),             # dW1
        jax.ShapeDtypeStruct((U, H, 1), jnp.float32),              # db1^T
        jax.ShapeDtypeStruct((U, C, H), jnp.float32),              # dW2^T (lane-dense)
        jax.ShapeDtypeStruct((U, C, 1), jnp.float32),              # db2^T
    )
    out_specs = (
        per_user((1, 1, local_ep + 1)),
        per_user((1, F_, H)),
        per_user((1, H, 1)),
        per_user((1, C, H)),
        per_user((1, C, 1)),
    )

    return pl.pallas_call(
        _make_local_update_kernel(local_ep, lr),
        out_shape=out_shape,
        grid_spec=pltpu.PrefetchScalarGridSpec(
            num_scalar_prefetch=0,
            grid=(U,),
            in_specs=[
                shared((F_, N)),          # AXt (bf16)
                shared((N, N)),           # A   (bf16)
                shared((F_, H)),          # W1
                shared((H, 1)),           # b1^T
                shared((C, H)),           # W2^T
                shared((C, 1)),           # b2^T
                per_user((1, 1, N)),      # scaled support mask
                per_user((1, 1, N)),      # scaled query mask
                per_user((1, C, N)),      # one-hot labels (transposed)
            ],
            out_specs=out_specs,
        ),
        compiler_params=pltpu.CompilerParams(
            # Per-user output blocks -> user axis is truly parallel (v7x megacore).
            dimension_semantics=("parallel",),
        ),
    )(axt, adj_b, w1, b1t, w2t, b2t, supt, qryt, oht)


# ---------------------------------------------------------------------------
# Jitted driver reproducing LocalUpdate_GCN.forward semantics (no host syncs)
# ---------------------------------------------------------------------------
@functools.partial(jax.jit,
                   static_argnames=("lr", "meta_lr", "weight_decay",
                                    "local_ep", "num_classes"))
def local_update_gcn_forward(params, features, adj, labels, sup_masks, qry_masks,
                             idxs_users, *, lr, meta_lr, weight_decay, local_ep,
                             num_classes):
    """Returns (updated_params, sum(losses_q)/len(losses_q)) like LocalUpdate_GCN.forward."""
    w1, b1, w2, b2 = params
    idx = jnp.asarray(idxs_users, dtype=jnp.int32)
    lab = labels[idx]                                                     # (U, N)
    oht = jnp.swapaxes(
        jax.nn.one_hot(lab, num_classes, dtype=jnp.float32), 1, 2)        # (U, C, N)

    def scaled(mask_bool):
        m = mask_bool[idx].astype(jnp.float32)                            # (U, N)
        m = m / jnp.sum(m, axis=1, keepdims=True)                         # nll 'mean'
        return m[:, None, :]                                              # (U, 1, N)

    supt = scaled(sup_masks)
    qryt = scaled(qry_masks)

    # Hoist AX = A @ X (invariant across users AND inner SGD steps); pass it
    # transposed (node dim lane-dense) and in bf16 (MXU operand dtype).
    axt = (adj @ features).T.astype(jnp.bfloat16)                         # (F, N)
    adj_b = adj.astype(jnp.bfloat16)                                      # (N, N)

    params_t = (w1, b1.T, w2.T, b2.T)          # b1t (H,1), w2t (C,H), b2t (C,1)

    losses, dw1_u, db1t_u, dw2t_u, db2t_u = _local_update_pallas(
        axt, adj_b, params_t, supt, qryt, oht, lr=lr, local_ep=local_ep)

    n_users = jnp.float32(idx.shape[0])
    meta_grads = (
        jnp.sum(dw1_u, axis=0) / n_users,                                 # (F, H)
        jnp.sum(db1t_u, axis=0).T / n_users,                              # (1, H)
        jnp.sum(dw2t_u, axis=0).T / n_users,                              # (H, C)
        jnp.sum(db2t_u, axis=0).T / n_users,                              # (1, C)
    )

    # TODO(synk): first-order MAML approximation -- the PyTorch reference
    # backprops losses_q[-1] through the inner SGD steps (second-order), which
    # has no clean Pallas equivalent; we use the query grad at adapted weights.
    # TODO(synk): the outer optimizer reproduces only Adam's *first* step from
    # zero moment state (update = meta_lr * g / (|g| + eps)); no Adam moments
    # are carried across calls.
    eps = 1e-8
    new_params = []
    for p, g in zip(params, meta_grads):
        g_total = g + weight_decay * p
        new_params.append(p - meta_lr * g_total / (jnp.abs(g_total) + eps))

    # PyTorch returns sum(losses_q)/len(losses_q); each losses_q[k] is already a
    # sum over users, so divide only by (local_ep + 1).
    mean_loss = jnp.sum(losses) / jnp.float32(local_ep + 1)
    return tuple(new_params), mean_loss


# ---------------------------------------------------------------------------
# Main
# ---------------------------------------------------------------------------
if __name__ == "__main__":
    # Small synthetic setup (lane-dense node/hidden dims).
    N, F_DIM, H_DIM, C_CLS, U = 128, 32, 128, 8, 3
    LR, META_LR, WEIGHT_DECAY, LOCAL_EP = 0.01, 0.001, 5e-4, 3

    key = jax.random.PRNGKey(0)
    k1, k2, k3, k4, k5, k6 = jax.random.split(key, 6)

    features = jax.random.normal(k1, (N, F_DIM), dtype=jnp.float32)

    # row-normalized adjacency with self loops
    a = (jax.random.uniform(k2, (N, N)) < 0.2).astype(jnp.float32)
    a = jnp.maximum(a, a.T) + jnp.eye(N, dtype=jnp.float32)
    adj = a / jnp.sum(a, axis=1, keepdims=True)

    labels = jax.random.randint(k3, (U, N), 0, C_CLS).astype(jnp.int32)

    r = jax.random.uniform(k4, (U, N))
    sup_masks = r < 0.5
    qry_masks = ~sup_masks
    # guarantee non-empty AND disjoint support/query sets
    sup_masks = sup_masks.at[:, 0].set(True)
    qry_masks = qry_masks.at[:, 0].set(False)
    qry_masks = qry_masks.at[:, 1].set(True)
    sup_masks = sup_masks.at[:, 1].set(False)

    # GCN parameters (vars.0 .. vars.3)
    w1 = 0.1 * jax.random.normal(k5, (F_DIM, H_DIM), dtype=jnp.float32)
    b1 = jnp.zeros((1, H_DIM), dtype=jnp.float32)
    w2 = 0.1 * jax.random.normal(k6, (H_DIM, C_CLS), dtype=jnp.float32)
    b2 = jnp.zeros((1, C_CLS), dtype=jnp.float32)
    params = (w1, b1, w2, b2)

    idxs_users = jnp.arange(U, dtype=jnp.int32)

    new_params, mean_loss = local_update_gcn_forward(
        params, features, adj, labels, sup_masks, qry_masks, idxs_users,
        lr=LR, meta_lr=META_LR, weight_decay=WEIGHT_DECAY,
        local_ep=LOCAL_EP, num_classes=C_CLS)

    jax.block_until_ready((new_params, mean_loss))

    print("KERNEL_OK")
</pallas_src>

<mosaic_0001>
module attributes {stable_mosaic.version = 11 : i64} {
  func.func @kernel(%arg0: i32, %arg1: memref<32x128xbf16, #tpu.memory_space<vmem>>, %arg2: memref<128x128xbf16, #tpu.memory_space<vmem>>, %arg3: memref<32x128xf32, #tpu.memory_space<vmem>>, %arg4: memref<128x1xf32, #tpu.memory_space<vmem>>, %arg5: memref<8x128xf32, #tpu.memory_space<vmem>>, %arg6: memref<8x1xf32, #tpu.memory_space<vmem>>, %arg7: memref<1x1x128xf32, #tpu.memory_space<vmem>>, %arg8: memref<1x1x128xf32, #tpu.memory_space<vmem>>, %arg9: memref<1x8x128xf32, #tpu.memory_space<vmem>>, %arg10: memref<1x1x4xf32, #tpu.memory_space<vmem>>, %arg11: memref<1x32x128xf32, #tpu.memory_space<vmem>>, %arg12: memref<1x128x1xf32, #tpu.memory_space<vmem>>, %arg13: memref<1x8x128xf32, #tpu.memory_space<vmem>>, %arg14: memref<1x8x1xf32, #tpu.memory_space<vmem>>) attributes {dimension_semantics = [#tpu.dimension_semantics<parallel>], iteration_bounds = array<i64: 3>, scalar_prefetch = 0 : i64, scratch_operands = 0 : i64, tpu.core_type = #tpu.core_type<tc>, window_params = [{pipeline_mode = #tpu.pipeline_mode<synchronous>, transform_indices = @transform_0, window_bounds = array<i64: 32, 128>}, {pipeline_mode = #tpu.pipeline_mode<synchronous>, transform_indices = @transform_1, window_bounds = array<i64: 128, 128>}, {pipeline_mode = #tpu.pipeline_mode<synchronous>, transform_indices = @transform_2, window_bounds = array<i64: 32, 128>}, {pipeline_mode = #tpu.pipeline_mode<synchronous>, transform_indices = @transform_3, window_bounds = array<i64: 128, 1>}, {pipeline_mode = #tpu.pipeline_mode<synchronous>, transform_indices = @transform_4, window_bounds = array<i64: 8, 128>}, {pipeline_mode = #tpu.pipeline_mode<synchronous>, transform_indices = @transform_5, window_bounds = array<i64: 8, 1>}, {transform_indices = @transform_6, window_bounds = array<i64: 1, 1, 128>}, {transform_indices = @transform_7, window_bounds = array<i64: 1, 1, 128>}, {transform_indices = @transform_8, window_bounds = array<i64: 1, 8, 128>}, {transform_indices = @transform_9, window_bounds = array<i64: 1, 1, 4>}, {transform_indices = @transform_10, window_bounds = array<i64: 1, 32, 128>}, {transform_indices = @transform_11, window_bounds = array<i64: 1, 128, 1>}, {transform_indices = @transform_12, window_bounds = array<i64: 1, 8, 128>}, {transform_indices = @transform_13, window_bounds = array<i64: 1, 8, 1>}]} {
    %c0 = arith.constant 0 : index
    %c0_0 = arith.constant 0 : index
    %0 = vector.load %arg1[%c0, %c0_0] : memref<32x128xbf16, #tpu.memory_space<vmem>>, vector<32x128xbf16>
    %c0_1 = arith.constant 0 : index
    %c0_2 = arith.constant 0 : index
    %1 = vector.load %arg2[%c0_1, %c0_2] : memref<128x128xbf16, #tpu.memory_space<vmem>>, vector<128x128xbf16>
    %c0_3 = arith.constant 0 : index
    %c0_4 = arith.constant 0 : index
    %c0_5 = arith.constant 0 : index
    %2 = vector.load %arg7[%c0_3, %c0_4, %c0_5] : memref<1x1x128xf32, #tpu.memory_space<vmem>>, vector<1x1x128xf32>
    %3 = vector.shape_cast %2 : vector<1x1x128xf32> to vector<1x128xf32>
    %c0_6 = arith.constant 0 : index
    %c0_7 = arith.constant 0 : index
    %c0_8 = arith.constant 0 : index
    %4 = vector.load %arg8[%c0_6, %c0_7, %c0_8] : memref<1x1x128xf32, #tpu.memory_space<vmem>>, vector<1x1x128xf32>
    %5 = vector.shape_cast %4 : vector<1x1x128xf32> to vector<1x128xf32>
    %c0_9 = arith.constant 0 : index
    %c0_10 = arith.constant 0 : index
    %c0_11 = arith.constant 0 : index
    %6 = vector.load %arg9[%c0_9, %c0_10, %c0_11] : memref<1x8x128xf32, #tpu.memory_space<vmem>>, vector<1x8x128xf32>
    %7 = vector.shape_cast %6 : vector<1x8x128xf32> to vector<8x128xf32>
    %c0_12 = arith.constant 0 : index
    %c0_13 = arith.constant 0 : index
    %8 = vector.load %arg3[%c0_12, %c0_13] : memref<32x128xf32, #tpu.memory_space<vmem>>, vector<32x128xf32>
    %c0_14 = arith.constant 0 : index
    %c0_15 = arith.constant 0 : index
    %9 = vector.load %arg4[%c0_14, %c0_15] : memref<128x1xf32, #tpu.memory_space<vmem>>, vector<128x1xf32>
    %c0_16 = arith.constant 0 : index
    %c0_17 = arith.constant 0 : index
    %10 = vector.load %arg5[%c0_16, %c0_17] : memref<8x128xf32, #tpu.memory_space<vmem>>, vector<8x128xf32>
    %c0_18 = arith.constant 0 : index
    %c0_19 = arith.constant 0 : index
    %11 = vector.load %arg6[%c0_18, %c0_19] : memref<8x1xf32, #tpu.memory_space<vmem>>, vector<8x1xf32>
    %12 = arith.truncf %8 : vector<32x128xf32> to vector<32x128xbf16>
    %cst = arith.constant dense<0.000000e+00> : vector<128x128xf32>
    %13 = tpu.matmul %12, %0, %cst {dimension_numbers = #tpu.dot_dimension_numbers<[0], [0], [1], [1], [0, 1, 1, 1], [], []>} : vector<32x128xbf16>, vector<32x128xbf16>, vector<128x128xf32> -> vector<128x128xf32>
    %14 = vector.broadcast %9 : vector<128x1xf32> to vector<128x128xf32>
    %15 = arith.addf %13, %14 : vector<128x128xf32>
    %cst_20 = arith.constant 0.000000e+00 : f32
    %16 = vector.broadcast %cst_20 : f32 to vector<128x128xf32>
    %17 = arith.maximumf %15, %16 : vector<128x128xf32>
    %18 = arith.truncf %17 : vector<128x128xf32> to vector<128x128xbf16>
    %cst_21 = arith.constant dense<0.000000e+00> : vector<128x128xf32>
    %19 = tpu.matmul %18, %1, %cst_21 {dimension_numbers = #tpu.dot_dimension_numbers<[1], [1], [0], [0], [0, 0, 1, 0], [], []>} : vector<128x128xbf16>, vector<128x128xbf16>, vector<128x128xf32> -> vector<128x128xf32>
    %20 = arith.truncf %10 : vector<8x128xf32> to vector<8x128xbf16>
    %21 = arith.truncf %19 : vector<128x128xf32> to vector<128x128xbf16>
    %cst_22 = arith.constant dense<0.000000e+00> : vector<8x128xf32>
    %22 = tpu.matmul %20, %21, %cst_22 {dimension_numbers = #tpu.dot_dimension_numbers<[1], [0], [0], [1], [0, 0, 1, 1], [], []>} : vector<8x128xbf16>, vector<128x128xbf16>, vector<8x128xf32> -> vector<8x128xf32>
    %23 = vector.broadcast %11 : vector<8x1xf32> to vector<8x128xf32>
    %24 = arith.addf %22, %23 : vector<8x128xf32>
    %cst_23 = arith.constant dense<0xFF800000> : vector<128xf32>
    %25 = vector.multi_reduction <maximumf>, %24, %cst_23 [0] : vector<8x128xf32> to vector<128xf32>
    %26 = vector.shape_cast %25 : vector<128xf32> to vector<1x128xf32>
    %27 = vector.broadcast %26 : vector<1x128xf32> to vector<8x128xf32>
    %28 = arith.subf %24, %27 : vector<8x128xf32>
    %29 = math.exp %28 : vector<8x128xf32>
    %cst_24 = arith.constant dense<0.000000e+00> : vector<128xf32>
    %30 = vector.multi_reduction <add>, %29, %cst_24 [0] : vector<8x128xf32> to vector<128xf32>
    %31 = vector.shape_cast %30 : vector<128xf32> to vector<1x128xf32>
    %32 = vector.broadcast %26 : vector<1x128xf32> to vector<8x128xf32>
    %33 = arith.subf %24, %32 : vector<8x128xf32>
    %34 = math.log %31 : vector<1x128xf32>
    %35 = vector.broadcast %34 : vector<1x128xf32> to vector<8x128xf32>
    %36 = arith.subf %33, %35 : vector<8x128xf32>
    %37 = tpu.reciprocal %31 {approx = true} : vector<1x128xf32> -> vector<1x128xf32>
    %38 = vector.broadcast %37 : vector<1x128xf32> to vector<8x128xf32>
    %39 = arith.mulf %29, %38 : vector<8x128xf32>
    %40 = arith.subf %39, %7 : vector<8x128xf32>
    %41 = vector.broadcast %3 : vector<1x128xf32> to vector<8x128xf32>
    %42 = arith.mulf %40, %41 : vector<8x128xf32>
    %43 = arith.truncf %42 : vector<8x128xf32> to vector<8x128xbf16>
    %cst_25 = arith.constant dense<0.000000e+00> : vector<8x128xf32>
    %44 = tpu.matmul %43, %1, %cst_25 {dimension_numbers = #tpu.dot_dimension_numbers<[1], [0], [0], [1], [0, 0, 1, 1], [], []>} : vector<8x128xbf16>, vector<128x128xbf16>, vector<8x128xf32> -> vector<8x128xf32>
    %45 = arith.truncf %44 : vector<8x128xf32> to vector<8x128xbf16>
    %cst_26 = arith.constant dense<0.000000e+00> : vector<8x128xf32>
    %46 = tpu.matmul %45, %18, %cst_26 {dimension_numbers = #tpu.dot_dimension_numbers<[1], [1], [0], [0], [0, 0, 1, 0], [], []>} : vector<8x128xbf16>, vector<128x128xbf16>, vector<8x128xf32> -> vector<8x128xf32>
    %cst_27 = arith.constant dense<0.000000e+00> : vector<8xf32>
    %47 = vector.multi_reduction <add>, %42, %cst_27 [1] : vector<8x128xf32> to vector<8xf32>
    %48 = vector.shape_cast %47 : vector<8xf32> to vector<8x1xf32>
    %49 = arith.truncf %10 : vector<8x128xf32> to vector<8x128xbf16>
    %cst_28 = arith.constant dense<0.000000e+00> : vector<128x128xf32>
    %50 = tpu.matmul %49, %45, %cst_28 {dimension_numbers = #tpu.dot_dimension_numbers<[0], [0], [1], [1], [0, 1, 1, 1], [], []>} : vector<8x128xbf16>, vector<8x128xbf16>, vector<128x128xf32> -> vector<128x128xf32>
    %cst_29 = arith.constant 0.000000e+00 : f32
    %51 = vector.broadcast %cst_29 : f32 to vector<128x128xf32>
    %52 = arith.cmpf ogt, %15, %51 : vector<128x128xf32>
    %cst_30 = arith.constant 0.000000e+00 : f32
    %53 = vector.broadcast %cst_30 : f32 to vector<128x128xf32>
    %54 = arith.select %52, %50, %53 : vector<128x128xi1>, vector<128x128xf32>
    %55 = arith.truncf %54 : vector<128x128xf32> to vector<128x128xbf16>
    %cst_31 = arith.constant dense<0.000000e+00> : vector<32x128xf32>
    %56 = tpu.matmul %0, %55, %cst_31 {dimension_numbers = #tpu.dot_dimension_numbers<[1], [1], [0], [0], [0, 0, 1, 0], [], []>} : vector<32x128xbf16>, vector<128x128xbf16>, vector<32x128xf32> -> vector<32x128xf32>
    %cst_32 = arith.constant dense<0.000000e+00> : vector<128xf32>
    %57 = vector.multi_reduction <add>, %54, %cst_32 [1] : vector<128x128xf32> to vector<128xf32>
    %58 = vector.shape_cast %57 : vector<128xf32> to vector<128x1xf32>
    %59 = arith.mulf %7, %36 : vector<8x128xf32>
    %cst_33 = arith.constant dense<0.000000e+00> : vector<128xf32>
    %60 = vector.multi_reduction <add>, %59, %cst_33 [0] : vector<8x128xf32> to vector<128xf32>
    %61 = vector.shape_cast %60 : vector<128xf32> to vector<1x128xf32>
    %62 = arith.mulf %5, %61 : vector<1x128xf32>
    %63 = vector.shape_cast %62 : vector<1x128xf32> to vector<1x1x128xf32>
    %cst_34 = arith.constant dense<0.000000e+00> : vector<1xf32>
    %64 = vector.multi_reduction <add>, %63, %cst_34 [1, 2] : vector<1x1x128xf32> to vector<1xf32>
    %65 = vector.shape_cast %64 : vector<1xf32> to vector<1x1x1xf32>
    %66 = vector.extract %65[0, 0, 0] : f32 from vector<1x1x1xf32>
    %67 = vector.broadcast %66 : f32 to vector<1x1xf32>
    %cst_35 = arith.constant 0.000000e+00 : f32
    %68 = vector.broadcast %cst_35 : f32 to vector<1x1xf32>
    %69 = arith.subf %68, %67 : vector<1x1xf32>
    %cst_36 = arith.constant 0.00999999977 : f32
    %70 = vector.broadcast %cst_36 : f32 to vector<32x128xf32>
    %71 = arith.mulf %70, %56 : vector<32x128xf32>
    %72 = arith.subf %8, %71 : vector<32x128xf32>
    %cst_37 = arith.constant 0.00999999977 : f32
    %73 = vector.broadcast %cst_37 : f32 to vector<128x1xf32>
    %74 = arith.mulf %73, %58 : vector<128x1xf32>
    %75 = arith.subf %9, %74 : vector<128x1xf32>
    %cst_38 = arith.constant 0.00999999977 : f32
    %76 = vector.broadcast %cst_38 : f32 to vector<8x128xf32>
    %77 = arith.mulf %76, %46 : vector<8x128xf32>
    %78 = arith.subf %10, %77 : vector<8x128xf32>
    %cst_39 = arith.constant 0.00999999977 : f32
    %79 = vector.broadcast %cst_39 : f32 to vector<8x1xf32>
    %80 = arith.mulf %79, %48 : vector<8x1xf32>
    %81 = arith.subf %11, %80 : vector<8x1xf32>
    %82 = arith.truncf %72 : vector<32x128xf32> to vector<32x128xbf16>
    %cst_40 = arith.constant dense<0.000000e+00> : vector<128x128xf32>
    %83 = tpu.matmul %82, %0, %cst_40 {dimension_numbers = #tpu.dot_dimension_numbers<[0], [0], [1], [1], [0, 1, 1, 1], [], []>} : vector<32x128xbf16>, vector<32x128xbf16>, vector<128x128xf32> -> vector<128x128xf32>
    %84 = vector.broadcast %75 : vector<128x1xf32> to vector<128x128xf32>
    %85 = arith.addf %83, %84 : vector<128x128xf32>
    %cst_41 = arith.constant 0.000000e+00 : f32
    %86 = vector.broadcast %cst_41 : f32 to vector<128x128xf32>
    %87 = arith.maximumf %85, %86 : vector<128x128xf32>
    %88 = arith.truncf %87 : vector<128x128xf32> to vector<128x128xbf16>
    %cst_42 = arith.constant dense<0.000000e+00> : vector<128x128xf32>
    %89 = tpu.matmul %88, %1, %cst_42 {dimension_numbers = #tpu.dot_dimension_numbers<[1], [1], [0], [0], [0, 0, 1, 0], [], []>} : vector<128x128xbf16>, vector<128x128xbf16>, vector<128x128xf32> -> vector<128x128xf32>
    %90 = arith.truncf %78 : vector<8x128xf32> to vector<8x128xbf16>
    %91 = arith.truncf %89 : vector<128x128xf32> to vector<128x128xbf16>
    %cst_43 = arith.constant dense<0.000000e+00> : vector<8x128xf32>
    %92 = tpu.matmul %90, %91, %cst_43 {dimension_numbers = #tpu.dot_dimension_numbers<[1], [0], [0], [1], [0, 0, 1, 1], [], []>} : vector<8x128xbf16>, vector<128x128xbf16>, vector<8x128xf32> -> vector<8x128xf32>
    %93 = vector.broadcast %81 : vector<8x1xf32> to vector<8x128xf32>
    %94 = arith.addf %92, %93 : vector<8x128xf32>
    %cst_44 = arith.constant dense<0xFF800000> : vector<128xf32>
    %95 = vector.multi_reduction <maximumf>, %94, %cst_44 [0] : vector<8x128xf32> to vector<128xf32>
    %96 = vector.shape_cast %95 : vector<128xf32> to vector<1x128xf32>
    %97 = vector.broadcast %96 : vector<1x128xf32> to vector<8x128xf32>
    %98 = arith.subf %94, %97 : vector<8x128xf32>
    %99 = math.exp %98 : vector<8x128xf32>
    %cst_45 = arith.constant dense<0.000000e+00> : vector<128xf32>
    %100 = vector.multi_reduction <add>, %99, %cst_45 [0] : vector<8x128xf32> to vector<128xf32>
    %101 = vector.shape_cast %100 : vector<128xf32> to vector<1x128xf32>
    %102 = vector.broadcast %96 : vector<1x128xf32> to vector<8x128xf32>
    %103 = arith.subf %94, %102 : vector<8x128xf32>
    %104 = math.log %101 : vector<1x128xf32>
    %105 = vector.broadcast %104 : vector<1x128xf32> to vector<8x128xf32>
    %106 = arith.subf %103, %105 : vector<8x128xf32>
    %107 = tpu.reciprocal %101 {approx = true} : vector<1x128xf32> -> vector<1x128xf32>
    %108 = vector.broadcast %107 : vector<1x128xf32> to vector<8x128xf32>
    %109 = arith.mulf %99, %108 : vector<8x128xf32>
    %110 = arith.subf %109, %7 : vector<8x128xf32>
    %111 = vector.broadcast %3 : vector<1x128xf32> to vector<8x128xf32>
    %112 = arith.mulf %110, %111 : vector<8x128xf32>
    %113 = arith.truncf %112 : vector<8x128xf32> to vector<8x128xbf16>
    %cst_46 = arith.constant dense<0.000000e+00> : vector<8x128xf32>
    %114 = tpu.matmul %113, %1, %cst_46 {dimension_numbers = #tpu.dot_dimension_numbers<[1], [0], [0], [1], [0, 0, 1, 1], [], []>} : vector<8x128xbf16>, vector<128x128xbf16>, vector<8x128xf32> -> vector<8x128xf32>
    %115 = arith.truncf %114 : vector<8x128xf32> to vector<8x128xbf16>
    %cst_47 = arith.constant dense<0.000000e+00> : vector<8x128xf32>
    %116 = tpu.matmul %115, %88, %cst_47 {dimension_numbers = #tpu.dot_dimension_numbers<[1], [1], [0], [0], [0, 0, 1, 0], [], []>} : vector<8x128xbf16>, vector<128x128xbf16>, vector<8x128xf32> -> vector<8x128xf32>
    %cst_48 = arith.constant dense<0.000000e+00> : vector<8xf32>
    %117 = vector.multi_reduction <add>, %112, %cst_48 [1] : vector<8x128xf32> to vector<8xf32>
    %118 = vector.shape_cast %117 : vector<8xf32> to vector<8x1xf32>
    %119 = arith.truncf %78 : vector<8x128xf32> to vector<8x128xbf16>
    %cst_49 = arith.constant dense<0.000000e+00> : vector<128x128xf32>
    %120 = tpu.matmul %119, %115, %cst_49 {dimension_numbers = #tpu.dot_dimension_numbers<[0], [0], [1], [1], [0, 1, 1, 1], [], []>} : vector<8x128xbf16>, vector<8x128xbf16>, vector<128x128xf32> -> vector<128x128xf32>
    %cst_50 = arith.constant 0.000000e+00 : f32
    %121 = vector.broadcast %cst_50 : f32 to vector<128x128xf32>
    %122 = arith.cmpf ogt, %85, %121 : vector<128x128xf32>
    %cst_51 = arith.constant 0.000000e+00 : f32
    %123 = vector.broadcast %cst_51 : f32 to vector<128x128xf32>
    %124 = arith.select %122, %120, %123 : vector<128x128xi1>, vector<128x128xf32>
    %125 = arith.truncf %124 : vector<128x128xf32> to vector<128x128xbf16>
    %cst_52 = arith.constant dense<0.000000e+00> : vector<32x128xf32>
    %126 = tpu.matmul %0, %125, %cst_52 {dimension_numbers = #tpu.dot_dimension_numbers<[1], [1], [0], [0], [0, 0, 1, 0], [], []>} : vector<32x128xbf16>, vector<128x128xbf16>, vector<32x128xf32> -> vector<32x128xf32>
    %cst_53 = arith.constant dense<0.000000e+00> : vector<128xf32>
    %127 = vector.multi_reduction <add>, %124, %cst_53 [1] : vector<128x128xf32> to vector<128xf32>
    %128 = vector.shape_cast %127 : vector<128xf32> to vector<128x1xf32>
    %129 = arith.mulf %7, %106 : vector<8x128xf32>
    %cst_54 = arith.constant dense<0.000000e+00> : vector<128xf32>
    %130 = vector.multi_reduction <add>, %129, %cst_54 [0] : vector<8x128xf32> to vector<128xf32>
    %131 = vector.shape_cast %130 : vector<128xf32> to vector<1x128xf32>
    %132 = arith.mulf %5, %131 : vector<1x128xf32>
    %133 = vector.shape_cast %132 : vector<1x128xf32> to vector<1x1x128xf32>
    %cst_55 = arith.constant dense<0.000000e+00> : vector<1xf32>
    %134 = vector.multi_reduction <add>, %133, %cst_55 [1, 2] : vector<1x1x128xf32> to vector<1xf32>
    %135 = vector.shape_cast %134 : vector<1xf32> to vector<1x1x1xf32>
    %136 = vector.extract %135[0, 0, 0] : f32 from vector<1x1x1xf32>
    %137 = vector.broadcast %136 : f32 to vector<1x1xf32>
    %cst_56 = arith.constant 0.000000e+00 : f32
    %138 = vector.broadcast %cst_56 : f32 to vector<1x1xf32>
    %139 = arith.subf %138, %137 : vector<1x1xf32>
    %cst_57 = arith.constant 0.00999999977 : f32
    %140 = vector.broadcast %cst_57 : f32 to vector<32x128xf32>
    %141 = arith.mulf %140, %126 : vector<32x128xf32>
    %142 = arith.subf %72, %141 : vector<32x128xf32>
    %cst_58 = arith.constant 0.00999999977 : f32
    %143 = vector.broadcast %cst_58 : f32 to vector<128x1xf32>
    %144 = arith.mulf %143, %128 : vector<128x1xf32>
    %145 = arith.subf %75, %144 : vector<128x1xf32>
    %cst_59 = arith.constant 0.00999999977 : f32
    %146 = vector.broadcast %cst_59 : f32 to vector<8x128xf32>
    %147 = arith.mulf %146, %116 : vector<8x128xf32>
    %148 = arith.subf %78, %147 : vector<8x128xf32>
    %cst_60 = arith.constant 0.00999999977 : f32
    %149 = vector.broadcast %cst_60 : f32 to vector<8x1xf32>
    %150 = arith.mulf %149, %118 : vector<8x1xf32>
    %151 = arith.subf %81, %150 : vector<8x1xf32>
    %152 = arith.truncf %142 : vector<32x128xf32> to vector<32x128xbf16>
    %cst_61 = arith.constant dense<0.000000e+00> : vector<128x128xf32>
    %153 = tpu.matmul %152, %0, %cst_61 {dimension_numbers = #tpu.dot_dimension_numbers<[0], [0], [1], [1], [0, 1, 1, 1], [], []>} : vector<32x128xbf16>, vector<32x128xbf16>, vector<128x128xf32> -> vector<128x128xf32>
    %154 = vector.broadcast %145 : vector<128x1xf32> to vector<128x128xf32>
    %155 = arith.addf %153, %154 : vector<128x128xf32>
    %cst_62 = arith.constant 0.000000e+00 : f32
    %156 = vector.broadcast %cst_62 : f32 to vector<128x128xf32>
    %157 = arith.maximumf %155, %156 : vector<128x128xf32>
    %158 = arith.truncf %157 : vector<128x128xf32> to vector<128x128xbf16>
    %cst_63 = arith.constant dense<0.000000e+00> : vector<128x128xf32>
    %159 = tpu.matmul %158, %1, %cst_63 {dimension_numbers = #tpu.dot_dimension_numbers<[1], [1], [0], [0], [0, 0, 1, 0], [], []>} : vector<128x128xbf16>, vector<128x128xbf16>, vector<128x128xf32> -> vector<128x128xf32>
    %160 = arith.truncf %148 : vector<8x128xf32> to vector<8x128xbf16>
    %161 = arith.truncf %159 : vector<128x128xf32> to vector<128x128xbf16>
    %cst_64 = arith.constant dense<0.000000e+00> : vector<8x128xf32>
    %162 = tpu.matmul %160, %161, %cst_64 {dimension_numbers = #tpu.dot_dimension_numbers<[1], [0], [0], [1], [0, 0, 1, 1], [], []>} : vector<8x128xbf16>, vector<128x128xbf16>, vector<8x128xf32> -> vector<8x128xf32>
    %163 = vector.broadcast %151 : vector<8x1xf32> to vector<8x128xf32>
    %164 = arith.addf %162, %163 : vector<8x128xf32>
    %cst_65 = arith.constant dense<0xFF800000> : vector<128xf32>
    %165 = vector.multi_reduction <maximumf>, %164, %cst_65 [0] : vector<8x128xf32> to vector<128xf32>
    %166 = vector.shape_cast %165 : vector<128xf32> to vector<1x128xf32>
    %167 = vector.broadcast %166 : vector<1x128xf32> to vector<8x128xf32>
    %168 = arith.subf %164, %167 : vector<8x128xf32>
    %169 = math.exp %168 : vector<8x128xf32>
    %cst_66 = arith.constant dense<0.000000e+00> : vector<128xf32>
    %170 = vector.multi_reduction <add>, %169, %cst_66 [0] : vector<8x128xf32> to vector<128xf32>
    %171 = vector.shape_cast %170 : vector<128xf32> to vector<1x128xf32>
    %172 = vector.broadcast %166 : vector<1x128xf32> to vector<8x128xf32>
    %173 = arith.subf %164, %172 : vector<8x128xf32>
    %174 = math.log %171 : vector<1x128xf32>
    %175 = vector.broadcast %174 : vector<1x128xf32> to vector<8x128xf32>
    %176 = arith.subf %173, %175 : vector<8x128xf32>
    %177 = tpu.reciprocal %171 {approx = true} : vector<1x128xf32> -> vector<1x128xf32>
    %178 = vector.broadcast %177 : vector<1x128xf32> to vector<8x128xf32>
    %179 = arith.mulf %169, %178 : vector<8x128xf32>
    %180 = arith.subf %179, %7 : vector<8x128xf32>
    %181 = vector.broadcast %3 : vector<1x128xf32> to vector<8x128xf32>
    %182 = arith.mulf %180, %181 : vector<8x128xf32>
    %183 = arith.truncf %182 : vector<8x128xf32> to vector<8x128xbf16>
    %cst_67 = arith.constant dense<0.000000e+00> : vector<8x128xf32>
    %184 = tpu.matmul %183, %1, %cst_67 {dimension_numbers = #tpu.dot_dimension_numbers<[1], [0], [0], [1], [0, 0, 1, 1], [], []>} : vector<8x128xbf16>, vector<128x128xbf16>, vector<8x128xf32> -> vector<8x128xf32>
    %185 = arith.truncf %184 : vector<8x128xf32> to vector<8x128xbf16>
    %cst_68 = arith.constant dense<0.000000e+00> : vector<8x128xf32>
    %186 = tpu.matmul %185, %158, %cst_68 {dimension_numbers = #tpu.dot_dimension_numbers<[1], [1], [0], [0], [0, 0, 1, 0], [], []>} : vector<8x128xbf16>, vector<128x128xbf16>, vector<8x128xf32> -> vector<8x128xf32>
    %cst_69 = arith.constant dense<0.000000e+00> : vector<8xf32>
    %187 = vector.multi_reduction <add>, %182, %cst_69 [1] : vector<8x128xf32> to vector<8xf32>
    %188 = vector.shape_cast %187 : vector<8xf32> to vector<8x1xf32>
    %189 = arith.truncf %148 : vector<8x128xf32> to vector<8x128xbf16>
    %cst_70 = arith.constant dense<0.000000e+00> : vector<128x128xf32>
    %190 = tpu.matmul %189, %185, %cst_70 {dimension_numbers = #tpu.dot_dimension_numbers<[0], [0], [1], [1], [0, 1, 1, 1], [], []>} : vector<8x128xbf16>, vector<8x128xbf16>, vector<128x128xf32> -> vector<128x128xf32>
    %cst_71 = arith.constant 0.000000e+00 : f32
    %191 = vector.broadcast %cst_71 : f32 to vector<128x128xf32>
    %192 = arith.cmpf ogt, %155, %191 : vector<128x128xf32>
    %cst_72 = arith.constant 0.000000e+00 : f32
    %193 = vector.broadcast %cst_72 : f32 to vector<128x128xf32>
    %194 = arith.select %192, %190, %193 : vector<128x128xi1>, vector<128x128xf32>
    %195 = arith.truncf %194 : vector<128x128xf32> to vector<128x128xbf16>
    %cst_73 = arith.constant dense<0.000000e+00> : vector<32x128xf32>
    %196 = tpu.matmul %0, %195, %cst_73 {dimension_numbers = #tpu.dot_dimension_numbers<[1], [1], [0], [0], [0, 0, 1, 0], [], []>} : vector<32x128xbf16>, vector<128x128xbf16>, vector<32x128xf32> -> vector<32x128xf32>
    %cst_74 = arith.constant dense<0.000000e+00> : vector<128xf32>
    %197 = vector.multi_reduction <add>, %194, %cst_74 [1] : vector<128x128xf32> to vector<128xf32>
    %198 = vector.shape_cast %197 : vector<128xf32> to vector<128x1xf32>
    %199 = arith.mulf %7, %176 : vector<8x128xf32>
    %cst_75 = arith.constant dense<0.000000e+00> : vector<128xf32>
    %200 = vector.multi_reduction <add>, %199, %cst_75 [0] : vector<8x128xf32> to vector<128xf32>
    %201 = vector.shape_cast %200 : vector<128xf32> to vector<1x128xf32>
    %202 = arith.mulf %5, %201 : vector<1x128xf32>
    %203 = vector.shape_cast %202 : vector<1x128xf32> to vector<1x1x128xf32>
    %cst_76 = arith.constant dense<0.000000e+00> : vector<1xf32>
    %204 = vector.multi_reduction <add>, %203, %cst_76 [1, 2] : vector<1x1x128xf32> to vector<1xf32>
    %205 = vector.shape_cast %204 : vector<1xf32> to vector<1x1x1xf32>
    %206 = vector.extract %205[0, 0, 0] : f32 from vector<1x1x1xf32>
    %207 = vector.broadcast %206 : f32 to vector<1x1xf32>
    %cst_77 = arith.constant 0.000000e+00 : f32
    %208 = vector.broadcast %cst_77 : f32 to vector<1x1xf32>
    %209 = arith.subf %208, %207 : vector<1x1xf32>
    %cst_78 = arith.constant 0.00999999977 : f32
    %210 = vector.broadcast %cst_78 : f32 to vector<32x128xf32>
    %211 = arith.mulf %210, %196 : vector<32x128xf32>
    %212 = arith.subf %142, %211 : vector<32x128xf32>
    %cst_79 = arith.constant 0.00999999977 : f32
    %213 = vector.broadcast %cst_79 : f32 to vector<128x1xf32>
    %214 = arith.mulf %213, %198 : vector<128x1xf32>
    %215 = arith.subf %145, %214 : vector<128x1xf32>
    %cst_80 = arith.constant 0.00999999977 : f32
    %216 = vector.broadcast %cst_80 : f32 to vector<8x128xf32>
    %217 = arith.mulf %216, %186 : vector<8x128xf32>
    %218 = arith.subf %148, %217 : vector<8x128xf32>
    %cst_81 = arith.constant 0.00999999977 : f32
    %219 = vector.broadcast %cst_81 : f32 to vector<8x1xf32>
    %220 = arith.mulf %219, %188 : vector<8x1xf32>
    %221 = arith.subf %151, %220 : vector<8x1xf32>
    %222 = arith.truncf %212 : vector<32x128xf32> to vector<32x128xbf16>
    %cst_82 = arith.constant dense<0.000000e+00> : vector<128x128xf32>
    %223 = tpu.matmul %222, %0, %cst_82 {dimension_numbers = #tpu.dot_dimension_numbers<[0], [0], [1], [1], [0, 1, 1, 1], [], []>} : vector<32x128xbf16>, vector<32x128xbf16>, vector<128x128xf32> -> vector<128x128xf32>
    %224 = vector.broadcast %215 : vector<128x1xf32> to vector<128x128xf32>
    %225 = arith.addf %223, %224 : vector<128x128xf32>
    %cst_83 = arith.constant 0.000000e+00 : f32
    %226 = vector.broadcast %cst_83 : f32 to vector<128x128xf32>
    %227 = arith.maximumf %225, %226 : vector<128x128xf32>
    %228 = arith.truncf %227 : vector<128x128xf32> to vector<128x128xbf16>
    %cst_84 = arith.constant dense<0.000000e+00> : vector<128x128xf32>
    %229 = tpu.matmul %228, %1, %cst_84 {dimension_numbers = #tpu.dot_dimension_numbers<[1], [1], [0], [0], [0, 0, 1, 0], [], []>} : vector<128x128xbf16>, vector<128x128xbf16>, vector<128x128xf32> -> vector<128x128xf32>
    %230 = arith.truncf %218 : vector<8x128xf32> to vector<8x128xbf16>
    %231 = arith.truncf %229 : vector<128x128xf32> to vector<128x128xbf16>
    %cst_85 = arith.constant dense<0.000000e+00> : vector<8x128xf32>
    %232 = tpu.matmul %230, %231, %cst_85 {dimension_numbers = #tpu.dot_dimension_numbers<[1], [0], [0], [1], [0, 0, 1, 1], [], []>} : vector<8x128xbf16>, vector<128x128xbf16>, vector<8x128xf32> -> vector<8x128xf32>
    %233 = vector.broadcast %221 : vector<8x1xf32> to vector<8x128xf32>
    %234 = arith.addf %232, %233 : vector<8x128xf32>
    %cst_86 = arith.constant dense<0xFF800000> : vector<128xf32>
    %235 = vector.multi_reduction <maximumf>, %234, %cst_86 [0] : vector<8x128xf32> to vector<128xf32>
    %236 = vector.shape_cast %235 : vector<128xf32> to vector<1x128xf32>
    %237 = vector.broadcast %236 : vector<1x128xf32> to vector<8x128xf32>
    %238 = arith.subf %234, %237 : vector<8x128xf32>
    %239 = math.exp %238 : vector<8x128xf32>
    %cst_87 = arith.constant dense<0.000000e+00> : vector<128xf32>
    %240 = vector.multi_reduction <add>, %239, %cst_87 [0] : vector<8x128xf32> to vector<128xf32>
    %241 = vector.shape_cast %240 : vector<128xf32> to vector<1x128xf32>
    %242 = vector.broadcast %236 : vector<1x128xf32> to vector<8x128xf32>
    %243 = arith.subf %234, %242 : vector<8x128xf32>
    %244 = math.log %241 : vector<1x128xf32>
    %245 = vector.broadcast %244 : vector<1x128xf32> to vector<8x128xf32>
    %246 = arith.subf %243, %245 : vector<8x128xf32>
    %247 = tpu.reciprocal %241 {approx = true} : vector<1x128xf32> -> vector<1x128xf32>
    %248 = vector.broadcast %247 : vector<1x128xf32> to vector<8x128xf32>
    %249 = arith.mulf %239, %248 : vector<8x128xf32>
    %250 = arith.subf %249, %7 : vector<8x128xf32>
    %251 = vector.broadcast %5 : vector<1x128xf32> to vector<8x128xf32>
    %252 = arith.mulf %250, %251 : vector<8x128xf32>
    %253 = arith.truncf %252 : vector<8x128xf32> to vector<8x128xbf16>
    %cst_88 = arith.constant dense<0.000000e+00> : vector<8x128xf32>
    %254 = tpu.matmul %253, %1, %cst_88 {dimension_numbers = #tpu.dot_dimension_numbers<[1], [0], [0], [1], [0, 0, 1, 1], [], []>} : vector<8x128xbf16>, vector<128x128xbf16>, vector<8x128xf32> -> vector<8x128xf32>
    %255 = arith.truncf %254 : vector<8x128xf32> to vector<8x128xbf16>
    %cst_89 = arith.constant dense<0.000000e+00> : vector<8x128xf32>
    %256 = tpu.matmul %255, %228, %cst_89 {dimension_numbers = #tpu.dot_dimension_numbers<[1], [1], [0], [0], [0, 0, 1, 0], [], []>} : vector<8x128xbf16>, vector<128x128xbf16>, vector<8x128xf32> -> vector<8x128xf32>
    %cst_90 = arith.constant dense<0.000000e+00> : vector<8xf32>
    %257 = vector.multi_reduction <add>, %252, %cst_90 [1] : vector<8x128xf32> to vector<8xf32>
    %258 = vector.shape_cast %257 : vector<8xf32> to vector<8x1xf32>
    %259 = arith.truncf %218 : vector<8x128xf32> to vector<8x128xbf16>
    %cst_91 = arith.constant dense<0.000000e+00> : vector<128x128xf32>
    %260 = tpu.matmul %259, %255, %cst_91 {dimension_numbers = #tpu.dot_dimension_numbers<[0], [0], [1], [1], [0, 1, 1, 1], [], []>} : vector<8x128xbf16>, vector<8x128xbf16>, vector<128x128xf32> -> vector<128x128xf32>
    %cst_92 = arith.constant 0.000000e+00 : f32
    %261 = vector.broadcast %cst_92 : f32 to vector<128x128xf32>
    %262 = arith.cmpf ogt, %225, %261 : vector<128x128xf32>
    %cst_93 = arith.constant 0.000000e+00 : f32
    %263 = vector.broadcast %cst_93 : f32 to vector<128x128xf32>
    %264 = arith.select %262, %260, %263 : vector<128x128xi1>, vector<128x128xf32>
    %265 = arith.truncf %264 : vector<128x128xf32> to vector<128x128xbf16>
    %cst_94 = arith.constant dense<0.000000e+00> : vector<32x128xf32>
    %266 = tpu.matmul %0, %265, %cst_94 {dimension_numbers = #tpu.dot_dimension_numbers<[1], [1], [0], [0], [0, 0, 1, 0], [], []>} : vector<32x128xbf16>, vector<128x128xbf16>, vector<32x128xf32> -> vector<32x128xf32>
    %cst_95 = arith.constant dense<0.000000e+00> : vector<128xf32>
    %267 = vector.multi_reduction <add>, %264, %cst_95 [1] : vector<128x128xf32> to vector<128xf32>
    %268 = vector.shape_cast %267 : vector<128xf32> to vector<128x1xf32>
    %269 = arith.mulf %7, %246 : vector<8x128xf32>
    %cst_96 = arith.constant dense<0.000000e+00> : vector<128xf32>
    %270 = vector.multi_reduction <add>, %269, %cst_96 [0] : vector<8x128xf32> to vector<128xf32>
    %271 = vector.shape_cast %270 : vector<128xf32> to vector<1x128xf32>
    %272 = arith.mulf %5, %271 : vector<1x128xf32>
    %273 = vector.shape_cast %272 : vector<1x128xf32> to vector<1x1x128xf32>
    %cst_97 = arith.constant dense<0.000000e+00> : vector<1xf32>
    %274 = vector.multi_reduction <add>, %273, %cst_97 [1, 2] : vector<1x1x128xf32> to vector<1xf32>
    %275 = vector.shape_cast %274 : vector<1xf32> to vector<1x1x1xf32>
    %276 = vector.extract %275[0, 0, 0] : f32 from vector<1x1x1xf32>
    %277 = vector.broadcast %276 : f32 to vector<1x1xf32>
    %cst_98 = arith.constant 0.000000e+00 : f32
    %278 = vector.broadcast %cst_98 : f32 to vector<1x1xf32>
    %279 = arith.subf %278, %277 : vector<1x1xf32>
    %280 = tpu.concatenate %69, %139, %209, %279 in 1 : vector<1x1xf32>, vector<1x1xf32>, vector<1x1xf32>, vector<1x1xf32> -> vector<1x4xf32>
    %c0_99 = arith.constant 0 : index
    %c0_100 = arith.constant 0 : index
    %c0_101 = arith.constant 0 : index
    %281 = vector.load %arg10[%c0_99, %c0_100, %c0_101] : memref<1x1x4xf32, #tpu.memory_space<vmem>>, vector<1x1x4xf32>
    %282 = vector.shape_cast %281 : vector<1x1x4xf32> to vector<1x4xf32>
    %283 = vector.shape_cast %280 : vector<1x4xf32> to vector<1x1x4xf32>
    tpu.vector_store %arg10[%c0_99, %c0_100, %c0_101], %283 {strides = array<i32>} : memref<1x1x4xf32, #tpu.memory_space<vmem>>, vector<1x1x4xf32>,
    %c0_102 = arith.constant 0 : index
    %c0_103 = arith.constant 0 : index
    %c0_104 = arith.constant 0 : index
    %284 = vector.load %arg11[%c0_102, %c0_103, %c0_104] : memref<1x32x128xf32, #tpu.memory_space<vmem>>, vector<1x32x128xf32>
    %285 = vector.shape_cast %284 : vector<1x32x128xf32> to vector<32x128xf32>
    %286 = vector.shape_cast %266 : vector<32x128xf32> to vector<1x32x128xf32>
    tpu.vector_store %arg11[%c0_102, %c0_103, %c0_104], %286 {strides = array<i32>} : memref<1x32x128xf32, #tpu.memory_space<vmem>>, vector<1x32x128xf32>,
    %c0_105 = arith.constant 0 : index
    %c0_106 = arith.constant 0 : index
    %c0_107 = arith.constant 0 : index
    %287 = vector.load %arg12[%c0_105, %c0_106, %c0_107] : memref<1x128x1xf32, #tpu.memory_space<vmem>>, vector<1x128x1xf32>
    %288 = vector.shape_cast %287 : vector<1x128x1xf32> to vector<128x1xf32>
    %289 = vector.shape_cast %268 : vector<128x1xf32> to vector<1x128x1xf32>
    tpu.vector_store %arg12[%c0_105, %c0_106, %c0_107], %289 {strides = array<i32>} : memref<1x128x1xf32, #tpu.memory_space<vmem>>, vector<1x128x1xf32>,
    %c0_108 = arith.constant 0 : index
    %c0_109 = arith.constant 0 : index
    %c0_110 = arith.constant 0 : index
    %290 = vector.load %arg13[%c0_108, %c0_109, %c0_110] : memref<1x8x128xf32, #tpu.memory_space<vmem>>, vector<1x8x128xf32>
    %291 = vector.shape_cast %290 : vector<1x8x128xf32> to vector<8x128xf32>
    %292 = vector.shape_cast %256 : vector<8x128xf32> to vector<1x8x128xf32>
    tpu.vector_store %arg13[%c0_108, %c0_109, %c0_110], %292 {strides = array<i32>} : memref<1x8x128xf32, #tpu.memory_space<vmem>>, vector<1x8x128xf32>,
    %c0_111 = arith.constant 0 : index
    %c0_112 = arith.constant 0 : index
    %c0_113 = arith.constant 0 : index
    %293 = vector.load %arg14[%c0_111, %c0_112, %c0_113] : memref<1x8x1xf32, #tpu.memory_space<vmem>>, vector<1x8x1xf32>
    %294 = vector.shape_cast %293 : vector<1x8x1xf32> to vector<8x1xf32>
    %295 = vector.shape_cast %258 : vector<8x1xf32> to vector<1x8x1xf32>
    tpu.vector_store %arg14[%c0_111, %c0_112, %c0_113], %295 {strides = array<i32>} : memref<1x8x1xf32, #tpu.memory_space<vmem>>, vector<1x8x1xf32>,
    return
  }
  func.func @transform_0(%arg0: i32) -> (i32, i32) {
    %c0_i32 = arith.constant 0 : i32
    %c0_i32_0 = arith.constant 0 : i32
    %c0_i32_1 = arith.constant 0 : i32
    return %c0_i32, %c0_i32_0 : i32, i32
  }
  func.func @transform_1(%arg0: i32) -> (i32, i32) {
    %c0_i32 = arith.constant 0 : i32
    %c0_i32_0 = arith.constant 0 : i32
    %c0_i32_1 = arith.constant 0 : i32
    return %c0_i32, %c0_i32_0 : i32, i32
  }
  func.func @transform_2(%arg0: i32) -> (i32, i32) {
    %c0_i32 = arith.constant 0 : i32
    %c0_i32_0 = arith.constant 0 : i32
    %c0_i32_1 = arith.constant 0 : i32
    return %c0_i32, %c0_i32_0 : i32, i32
  }
  func.func @transform_3(%arg0: i32) -> (i32, i32) {
    %c0_i32 = arith.constant 0 : i32
    %c0_i32_0 = arith.constant 0 : i32
    %c0_i32_1 = arith.constant 0 : i32
    return %c0_i32, %c0_i32_0 : i32, i32
  }
  func.func @transform_4(%arg0: i32) -> (i32, i32) {
    %c0_i32 = arith.constant 0 : i32
    %c0_i32_0 = arith.constant 0 : i32
    %c0_i32_1 = arith.constant 0 : i32
    return %c0_i32, %c0_i32_0 : i32, i32
  }
  func.func @transform_5(%arg0: i32) -> (i32, i32) {
    %c0_i32 = arith.constant 0 : i32
    %c0_i32_0 = arith.constant 0 : i32
    %c0_i32_1 = arith.constant 0 : i32
    return %c0_i32, %c0_i32_0 : i32, i32
  }
  func.func @transform_6(%arg0: i32) -> (i32, i32, i32) {
    %c0_i32 = arith.constant 0 : i32
    %c0_i32_0 = arith.constant 0 : i32
    %c0_i32_1 = arith.constant 0 : i32
    return %arg0, %c0_i32, %c0_i32_0 : i32, i32, i32
  }
  func.func @transform_7(%arg0: i32) -> (i32, i32, i32) {
    %c0_i32 = arith.constant 0 : i32
    %c0_i32_0 = arith.constant 0 : i32
    %c0_i32_1 = arith.constant 0 : i32
    return %arg0, %c0_i32, %c0_i32_0 : i32, i32, i32
  }
  func.func @transform_8(%arg0: i32) -> (i32, i32, i32) {
    %c0_i32 = arith.constant 0 : i32
    %c0_i32_0 = arith.constant 0 : i32
    %c0_i32_1 = arith.constant 0 : i32
    return %arg0, %c0_i32, %c0_i32_0 : i32, i32, i32
  }
  func.func @transform_9(%arg0: i32) -> (i32, i32, i32) {
    %c0_i32 = arith.constant 0 : i32
    %c0_i32_0 = arith.constant 0 : i32
    %c0_i32_1 = arith.constant 0 : i32
    return %arg0, %c0_i32, %c0_i32_0 : i32, i32, i32
  }
  func.func @transform_10(%arg0: i32) -> (i32, i32, i32) {
    %c0_i32 = arith.constant 0 : i32
    %c0_i32_0 = arith.constant 0 : i32
    %c0_i32_1 = arith.constant 0 : i32
    return %arg0, %c0_i32, %c0_i32_0 : i32, i32, i32
  }
  func.func @transform_11(%arg0: i32) -> (i32, i32, i32) {
    %c0_i32 = arith.constant 0 : i32
    %c0_i32_0 = arith.constant 0 : i32
    %c0_i32_1 = arith.constant 0 : i32
    return %arg0, %c0_i32, %c0_i32_0 : i32, i32, i32
  }
  func.func @transform_12(%arg0: i32) -> (i32, i32, i32) {
    %c0_i32 = arith.constant 0 : i32
    %c0_i32_0 = arith.constant 0 : i32
    %c0_i32_1 = arith.constant 0 : i32
    return %arg0, %c0_i32, %c0_i32_0 : i32, i32, i32
  }
  func.func @transform_13(%arg0: i32) -> (i32, i32, i32) {
    %c0_i32 = arith.constant 0 : i32
    %c0_i32_0 = arith.constant 0 : i32
    %c0_i32_1 = arith.constant 0 : i32
    return %arg0, %c0_i32, %c0_i32_0 : i32, i32, i32
  }
}

</mosaic_0001>

<llo_original>
// kernel: local_update_gcn_forward.1
$region0: #{local_update_gcn_forward.1}
  #allocation0 [shape = 'u32[]', space=smem, size = 0x4, offset = 0x4, fixed_abs, tag = 'smem constant byte address 0x4 - core index']
  #allocation1 [shape = 'u32[72,128]{1,0:T(1,128)}', space=vmem, size = 0x9000, scoped, tag = 'internal scratch']
  %s0 = inlined_call_operand.vmem [shape: bf16[32,128], index: 0, kind: input, shape index: {}]
  %s1 = inlined_call_operand.vmem [shape: bf16[128,128], index: 1, kind: input, shape index: {}]
  %s2 = inlined_call_operand.vmem [shape: f32[32,128], index: 2, kind: input, shape index: {}]
  %s3 = inlined_call_operand.vmem [shape: f32[128,1], index: 3, kind: input, shape index: {}]
  %s4 = inlined_call_operand.vmem [shape: f32[8,128], index: 4, kind: input, shape index: {}]
  %s5 = inlined_call_operand.vmem [shape: f32[8,1], index: 5, kind: input, shape index: {}]
  %s6 = inlined_call_operand.vmem [shape: f32[3,1,128], index: 6, kind: input, shape index: {}]
  %s7 = inlined_call_operand.vmem [shape: f32[3,1,128], index: 7, kind: input, shape index: {}]
  %s8 = inlined_call_operand.vmem [shape: f32[3,8,128], index: 8, kind: input, shape index: {}]
  %s9 = inlined_call_operand.vmem [shape: f32[3,1,4], index: 9, kind: output, shape index: {0}]
  %s10 = inlined_call_operand.vmem [shape: f32[3,32,128], index: 10, kind: output, shape index: {1}]
  %s11 = inlined_call_operand.vmem [shape: f32[3,128,1], index: 11, kind: output, shape index: {2}]
  %s12 = inlined_call_operand.vmem [shape: f32[3,8,128], index: 12, kind: output, shape index: {3}]
  %s13 = inlined_call_operand.vmem [shape: f32[3,8,1], index: 13, kind: output, shape index: {4}]
  %14 = xla_tuple %s9, %s10, %s11, %s12, %s13
  %s15 = sld [smem:[#allocation0]]
  $region101: #{local_update_gcn_forward.1} parent=0
    _
  %s17 = ssub.s32 1, %s15
  %s18 = scalar_select 0, %s17, %s15
  loop: start=0, step=1, limit=5
  $region2: #{local_update_gcn_forward.1} parent=0 // loop_pre_header
    _
  $region3: #{local_update_gcn_forward.1} parent=0 // loop_header
    %s20 = sphi 0, %s24
    %p21 = scmp.ge.s32.totalorder %s20, 5
    %s28 = sphi 0, %s28
    %s30 = sphi 0, %s28
    %s31 = sphi 0, %s30
    %s45 = sphi 0, %s31
    %s49 = sphi 0, %s49
    %s51 = sphi 0, %s49
    %s52 = sphi 0, %s51
    %s66 = sphi 0, %s52
    %s70 = sphi 0, %s70
    %s72 = sphi 0, %s70
    %s73 = sphi 0, %s72
    %s87 = sphi 0, %s73
    %s91 = sphi 0, %s91
    %s93 = sphi 0, %s91
    %s94 = sphi 0, %s93
    %s108 = sphi 0, %s94
    %s112 = sphi 0, %s112
    %s114 = sphi 0, %s112
    %s115 = sphi 0, %s114
    %s129 = sphi 0, %s115
    %s133 = sphi 0, %s133
    %s135 = sphi 0, %s133
    %s136 = sphi 0, %s135
    %s150 = sphi 0, %s136
    %s156 = sphi 0, %s158
    %s159 = sphi 0, %s156
    %s160 = sphi 0, %s159
    %s176 = sphi 0, %s160
    %s182 = sphi 0, %s184
    %s185 = sphi 0, %s182
    %s186 = sphi 0, %s185
    %s202 = sphi 0, %s186
    %s208 = sphi 0, %s210
    %s211 = sphi 0, %s208
    %s212 = sphi 0, %s211
    %s228 = sphi 0, %s212
    %s234 = sphi 0, %s236
    %s237 = sphi 0, %s234
    %s238 = sphi 0, %s237
    %s254 = sphi 0, %s238
    %s260 = sphi 0, %s262
    %s263 = sphi 0, %s260
    %s264 = sphi 0, %s263
    %s280 = sphi 0, %s264
    %s286 = sphi 0, %s288
    %s289 = sphi 0, %s286
    %s290 = sphi 0, %s289
    %s306 = sphi 0, %s290
    %s312 = sphi 0, %s314
    %s315 = sphi 0, %s312
    %s316 = sphi 0, %s315
    %s332 = sphi 0, %s316
    %s338 = sphi 0, %s340
    %s341 = sphi 0, %s338
    %s342 = sphi 0, %s341
    %s358 = sphi 0, %s342
  $region4: #{local_update_gcn_forward.1} parent=0 // loop_header_branch
    %23 = sbr.rel (%p21) target = $region8
  $region5: #{local_update_gcn_forward.1} parent=0 // loop_body
    %s25 = ssub.s32 %s20, 1
    %s26 = ssub.s32 %s20, 2
    %s27 = sadd.s32 %s20, 1
    %s29 = sadd.s32 %s28, 1
    %p32 = scmp.eq.s32.totalorder %s20, 2
    %p33 = scmp.ne.s32.totalorder %s28, %s30
    %p34 = scmp.eq.s32.totalorder %s20, 0
    %p35 = por %p33, %p34
    %p36 = scmp.ne.s32.totalorder %s28, %s30
    %p37 = scmp.eq.s32.totalorder %s25, 2
    %p38 = por %p36, %p37
    %p39 = scmp.ne.s32.totalorder %s30, %s31
    %p40 = scmp.eq.s32.totalorder %s25, 0
    %p41 = por %p39, %p40
    %p42 = scmp.ne.s32.totalorder %s30, %s31
    %p43 = scmp.eq.s32.totalorder %s26, 2
    %p44 = por %p42, %p43
    %p46 = scmp.ne.s32.totalorder %s31, %s45
    %p47 = scmp.eq.s32.totalorder %s26, 0
    %p48 = por %p46, %p47
    %s50 = sadd.s32 %s49, 1
    %p53 = scmp.eq.s32.totalorder %s20, 2
    %p54 = scmp.ne.s32.totalorder %s49, %s51
    %p55 = scmp.eq.s32.totalorder %s20, 0
    %p56 = por %p54, %p55
    %p57 = scmp.ne.s32.totalorder %s49, %s51
    %p58 = scmp.eq.s32.totalorder %s25, 2
    %p59 = por %p57, %p58
    %p60 = scmp.ne.s32.totalorder %s51, %s52
    %p61 = scmp.eq.s32.totalorder %s25, 0
    %p62 = por %p60, %p61
    %p63 = scmp.ne.s32.totalorder %s51, %s52
    %p64 = scmp.eq.s32.totalorder %s26, 2
    %p65 = por %p63, %p64
    %p67 = scmp.ne.s32.totalorder %s52, %s66
    %p68 = scmp.eq.s32.totalorder %s26, 0
    %p69 = por %p67, %p68
    %s71 = sadd.s32 %s70, 1
    %p74 = scmp.eq.s32.totalorder %s20, 2
    %p75 = scmp.ne.s32.totalorder %s70, %s72
    %p76 = scmp.eq.s32.totalorder %s20, 0
    %p77 = por %p75, %p76
    %p78 = scmp.ne.s32.totalorder %s70, %s72
    %p79 = scmp.eq.s32.totalorder %s25, 2
    %p80 = por %p78, %p79
    %p81 = scmp.ne.s32.totalorder %s72, %s73
    %p82 = scmp.eq.s32.totalorder %s25, 0
    %p83 = por %p81, %p82
    %p84 = scmp.ne.s32.totalorder %s72, %s73
    %p85 = scmp.eq.s32.totalorder %s26, 2
    %p86 = por %p84, %p85
    %p88 = scmp.ne.s32.totalorder %s73, %s87
    %p89 = scmp.eq.s32.totalorder %s26, 0
    %p90 = por %p88, %p89
    %s92 = sadd.s32 %s91, 1
    %p95 = scmp.eq.s32.totalorder %s20, 2
    %p96 = scmp.ne.s32.totalorder %s91, %s93
    %p97 = scmp.eq.s32.totalorder %s20, 0
    %p98 = por %p96, %p97
    %p99 = scmp.ne.s32.totalorder %s91, %s93
    %p100 = scmp.eq.s32.totalorder %s25, 2
    %p101 = por %p99, %p100
    %p102 = scmp.ne.s32.totalorder %s93, %s94
    %p103 = scmp.eq.s32.totalorder %s25, 0
    %p104 = por %p102, %p103
    %p105 = scmp.ne.s32.totalorder %s93, %s94
    %p106 = scmp.eq.s32.totalorder %s26, 2
    %p107 = por %p105, %p106
    %p109 = scmp.ne.s32.totalorder %s94, %s108
    %p110 = scmp.eq.s32.totalorder %s26, 0
    %p111 = por %p109, %p110
    %s113 = sadd.s32 %s112, 1
    %p116 = scmp.eq.s32.totalorder %s20, 2
    %p117 = scmp.ne.s32.totalorder %s112, %s114
    %p118 = scmp.eq.s32.totalorder %s20, 0
    %p119 = por %p117, %p118
    %p120 = scmp.ne.s32.totalorder %s112, %s114
    %p121 = scmp.eq.s32.totalorder %s25, 2
    %p122 = por %p120, %p121
    %p123 = scmp.ne.s32.totalorder %s114, %s115
    %p124 = scmp.eq.s32.totalorder %s25, 0
    %p125 = por %p123, %p124
    %p126 = scmp.ne.s32.totalorder %s114, %s115
    %p127 = scmp.eq.s32.totalorder %s26, 2
    %p128 = por %p126, %p127
    %p130 = scmp.ne.s32.totalorder %s115, %s129
    %p131 = scmp.eq.s32.totalorder %s26, 0
    %p132 = por %p130, %p131
    %s134 = sadd.s32 %s133, 1
    %p137 = scmp.eq.s32.totalorder %s20, 2
    %p138 = scmp.ne.s32.totalorder %s133, %s135
    %p139 = scmp.eq.s32.totalorder %s20, 0
    %p140 = por %p138, %p139
    %p141 = scmp.ne.s32.totalorder %s133, %s135
    %p142 = scmp.eq.s32.totalorder %s25, 2
    %p143 = por %p141, %p142
    %p144 = scmp.ne.s32.totalorder %s135, %s136
    %p145 = scmp.eq.s32.totalorder %s25, 0
    %p146 = por %p144, %p145
    %p147 = scmp.ne.s32.totalorder %s135, %s136
    %p148 = scmp.eq.s32.totalorder %s26, 2
    %p149 = por %p147, %p148
    %p151 = scmp.ne.s32.totalorder %s136, %s150
    %p152 = scmp.eq.s32.totalorder %s26, 0
    %p153 = por %p151, %p152
    %s154 = ssub.s32 %s20, %s27
    %p155 = scmp.eq.s32.totalorder %s154, 0
    %s157 = sadd.s32 %s156, 1
    %s158 = scalar_select %p155, %s156, %s157
    %p161 = pneg %p155
    %p162 = scmp.eq.s32.totalorder %s20, 2
    %p163 = por %p161, %p162
    %p164 = scmp.ne.s32.totalorder %s156, %s159
    %p165 = scmp.eq.s32.totalorder %s20, 0
    %p166 = por %p164, %p165
    %p167 = scmp.ne.s32.totalorder %s156, %s159
    %p168 = scmp.eq.s32.totalorder %s25, 2
    %p169 = por %p167, %p168
    %p170 = scmp.ne.s32.totalorder %s159, %s160
    %p171 = scmp.eq.s32.totalorder %s25, 0
    %p172 = por %p170, %p171
    %p173 = scmp.ne.s32.totalorder %s159, %s160
    %p174 = scmp.eq.s32.totalorder %s26, 2
    %p175 = por %p173, %p174
    %p177 = scmp.ne.s32.totalorder %s160, %s176
    %p178 = scmp.eq.s32.totalorder %s26, 0
    %p179 = por %p177, %p178
    %s180 = ssub.s32 %s20, %s27
    %p181 = scmp.eq.s32.totalorder %s180, 0
    %s183 = sadd.s32 %s182, 1
    %s184 = scalar_select %p181, %s182, %s183
    %p187 = pneg %p181
    %p188 = scmp.eq.s32.totalorder %s20, 2
    %p189 = por %p187, %p188
    %p190 = scmp.ne.s32.totalorder %s182, %s185
    %p191 = scmp.eq.s32.totalorder %s20, 0
    %p192 = por %p190, %p191
    %p193 = scmp.ne.s32.totalorder %s182, %s185
    %p194 = scmp.eq.s32.totalorder %s25, 2
    %p195 = por %p193, %p194
    %p196 = scmp.ne.s32.totalorder %s185, %s186
    %p197 = scmp.eq.s32.totalorder %s25, 0
    %p198 = por %p196, %p197
    %p199 = scmp.ne.s32.totalorder %s185, %s186
    %p200 = scmp.eq.s32.totalorder %s26, 2
    %p201 = por %p199, %p200
    %p203 = scmp.ne.s32.totalorder %s186, %s202
    %p204 = scmp.eq.s32.totalorder %s26, 0
    %p205 = por %p203, %p204
    %s206 = ssub.s32 %s20, %s27
    %p207 = scmp.eq.s32.totalorder %s206, 0
    %s209 = sadd.s32 %s208, 1
    %s210 = scalar_select %p207, %s208, %s209
    %p213 = pneg %p207
    %p214 = scmp.eq.s32.totalorder %s20, 2
    %p215 = por %p213, %p214
    %p216 = scmp.ne.s32.totalorder %s208, %s211
    %p217 = scmp.eq.s32.totalorder %s20, 0
    %p218 = por %p216, %p217
    %p219 = scmp.ne.s32.totalorder %s208, %s211
    %p220 = scmp.eq.s32.totalorder %s25, 2
    %p221 = por %p219, %p220
    %p222 = scmp.ne.s32.totalorder %s211, %s212
    %p223 = scmp.eq.s32.totalorder %s25, 0
    %p224 = por %p222, %p223
    %p225 = scmp.ne.s32.totalorder %s211, %s212
    %p226 = scmp.eq.s32.totalorder %s26, 2
    %p227 = por %p225, %p226
    %p229 = scmp.ne.s32.totalorder %s212, %s228
    %p230 = scmp.eq.s32.totalorder %s26, 0
    %p231 = por %p229, %p230
    %s232 = ssub.s32 %s20, %s27
    %p233 = scmp.eq.s32.totalorder %s232, 0
    %s235 = sadd.s32 %s234, 1
    %s236 = scalar_select %p233, %s234, %s235
    %p239 = pneg %p233
    %p240 = scmp.eq.s32.totalorder %s20, 2
    %p241 = por %p239, %p240
    %p242 = scmp.ne.s32.totalorder %s234, %s237
    %p243 = scmp.eq.s32.totalorder %s20, 0
    %p244 = por %p242, %p243
    %p245 = scmp.ne.s32.totalorder %s234, %s237
    %p246 = scmp.eq.s32.totalorder %s25, 2
    %p247 = por %p245, %p246
    %p248 = scmp.ne.s32.totalorder %s237, %s238
    %p249 = scmp.eq.s32.totalorder %s25, 0
    %p250 = por %p248, %p249
    %p251 = scmp.ne.s32.totalorder %s237, %s238
    %p252 = scmp.eq.s32.totalorder %s26, 2
    %p253 = por %p251, %p252
    %p255 = scmp.ne.s32.totalorder %s238, %s254
    %p256 = scmp.eq.s32.totalorder %s26, 0
    %p257 = por %p255, %p256
    %s258 = ssub.s32 %s20, %s27
    %p259 = scmp.eq.s32.totalorder %s258, 0
    %s261 = sadd.s32 %s260, 1
    %s262 = scalar_select %p259, %s260, %s261
    %p265 = pneg %p259
    %p266 = scmp.eq.s32.totalorder %s20, 2
    %p267 = por %p265, %p266
    %p268 = scmp.ne.s32.totalorder %s260, %s263
    %p269 = scmp.eq.s32.totalorder %s20, 0
    %p270 = por %p268, %p269
    %p271 = scmp.ne.s32.totalorder %s260, %s263
    %p272 = scmp.eq.s32.totalorder %s25, 2
    %p273 = por %p271, %p272
    %p274 = scmp.ne.s32.totalorder %s263, %s264
    %p275 = scmp.eq.s32.totalorder %s25, 0
    %p276 = por %p274, %p275
    %p277 = scmp.ne.s32.totalorder %s263, %s264
    %p278 = scmp.eq.s32.totalorder %s26, 2
    %p279 = por %p277, %p278
    %p281 = scmp.ne.s32.totalorder %s264, %s280
    %p282 = scmp.eq.s32.totalorder %s26, 0
    %p283 = por %p281, %p282
    %s284 = ssub.s32 %s20, %s27
    %p285 = scmp.eq.s32.totalorder %s284, 0
    %s287 = sadd.s32 %s286, 1
    %s288 = scalar_select %p285, %s286, %s287
    %p291 = pneg %p285
    %p292 = scmp.eq.s32.totalorder %s20, 2
    %p293 = por %p291, %p292
    %p294 = scmp.ne.s32.totalorder %s286, %s289
    %p295 = scmp.eq.s32.totalorder %s20, 0
    %p296 = por %p294, %p295
    %p297 = scmp.ne.s32.totalorder %s286, %s289
    %p298 = scmp.eq.s32.totalorder %s25, 2
    %p299 = por %p297, %p298
    %p300 = scmp.ne.s32.totalorder %s289, %s290
    %p301 = scmp.eq.s32.totalorder %s25, 0
    %p302 = por %p300, %p301
    %p303 = scmp.ne.s32.totalorder %s289, %s290
    %p304 = scmp.eq.s32.totalorder %s26, 2
    %p305 = por %p303, %p304
    %p307 = scmp.ne.s32.totalorder %s290, %s306
    %p308 = scmp.eq.s32.totalorder %s26, 0
    %p309 = por %p307, %p308
    %s310 = ssub.s32 %s20, %s27
    %p311 = scmp.eq.s32.totalorder %s310, 0
    %s313 = sadd.s32 %s312, 1
    %s314 = scalar_select %p311, %s312, %s313
    %p317 = pneg %p311
    %p318 = scmp.eq.s32.totalorder %s20, 2
    %p319 = por %p317, %p318
    %p320 = scmp.ne.s32.totalorder %s312, %s315
    %p321 = scmp.eq.s32.totalorder %s20, 0
    %p322 = por %p320, %p321
    %p323 = scmp.ne.s32.totalorder %s312, %s315
    %p324 = scmp.eq.s32.totalorder %s25, 2
    %p325 = por %p323, %p324
    %p326 = scmp.ne.s32.totalorder %s315, %s316
    %p327 = scmp.eq.s32.totalorder %s25, 0
    %p328 = por %p326, %p327
    %p329 = scmp.ne.s32.totalorder %s315, %s316
    %p330 = scmp.eq.s32.totalorder %s26, 2
    %p331 = por %p329, %p330
    %p333 = scmp.ne.s32.totalorder %s316, %s332
    %p334 = scmp.eq.s32.totalorder %s26, 0
    %p335 = por %p333, %p334
    %s336 = ssub.s32 %s20, %s27
    %p337 = scmp.eq.s32.totalorder %s336, 0
    %s339 = sadd.s32 %s338, 1
    %s340 = scalar_select %p337, %s338, %s339
    %p343 = pneg %p337
    %p344 = scmp.eq.s32.totalorder %s20, 2
    %p345 = por %p343, %p344
    %p346 = scmp.ne.s32.totalorder %s338, %s341
    %p347 = scmp.eq.s32.totalorder %s20, 0
    %p348 = por %p346, %p347
    %p349 = scmp.ne.s32.totalorder %s338, %s341
    %p350 = scmp.eq.s32.totalorder %s25, 2
    %p351 = por %p349, %p350
    %p352 = scmp.ne.s32.totalorder %s341, %s342
    %p353 = scmp.eq.s32.totalorder %s25, 0
    %p354 = por %p352, %p353
    %p355 = scmp.ne.s32.totalorder %s341, %s342
    %p356 = scmp.eq.s32.totalorder %s26, 2
    %p357 = por %p355, %p356
    %p359 = scmp.ne.s32.totalorder %s342, %s358
    %p360 = scmp.eq.s32.totalorder %s26, 0
    %p361 = por %p359, %p360
    %p362 = scmp.le.s32.totalorder 1, %s20
    %p363 = scmp.lt.s32.totalorder %s20, 4
    %p364 = pnand %p362, %p363
    %p365 = pneg %p364
    // Predicated region
    $region9: #{local_update_gcn_forward.1} parent=5 // pred_check
      _
    $region10: #{local_update_gcn_forward.1} parent=5 // pred_check_branch
      %367 = sbr.rel (%p364) target = $region12
    $region11: #{local_update_gcn_forward.1} parent=5 // pred_region
      %s368 = ssub.s32 %s20, 1
      // Predicated region
      $region13: #{local_update_gcn_forward.1} parent=11 // pred_check
        %p369 = pneg %p41
      $region14: #{local_update_gcn_forward.1} parent=11 // pred_check_branch
        %371 = sbr.rel (%p369) target = $region16
      $region15: #{local_update_gcn_forward.1} parent=11 // pred_region
        _
      $region16: #{local_update_gcn_forward.1} parent=11 // pred_fallthru
        _
      // Predicated region
      $region17: #{local_update_gcn_forward.1} parent=11 // pred_check
        %p372 = pneg %p62
      $region18: #{local_update_gcn_forward.1} parent=11 // pred_check_branch
        %374 = sbr.rel (%p372) target = $region20
      $region19: #{local_update_gcn_forward.1} parent=11 // pred_region
        _
      $region20: #{local_update_gcn_forward.1} parent=11 // pred_fallthru
        _
      // Predicated region
      $region21: #{local_update_gcn_forward.1} parent=11 // pred_check
        %p375 = pneg %p83
      $region22: #{local_update_gcn_forward.1} parent=11 // pred_check_branch
        %377 = sbr.rel (%p375) target = $region24
      $region23: #{local_update_gcn_forward.1} parent=11 // pred_region
        _
      $region24: #{local_update_gcn_forward.1} parent=11 // pred_fallthru
        _
      // Predicated region
      $region25: #{local_update_gcn_forward.1} parent=11 // pred_check
        %p378 = pneg %p104
      $region26: #{local_update_gcn_forward.1} parent=11 // pred_check_branch
        %380 = sbr.rel (%p378) target = $region28
      $region27: #{local_update_gcn_forward.1} parent=11 // pred_region
        _
      $region28: #{local_update_gcn_forward.1} parent=11 // pred_fallthru
        _
      // Predicated region
      $region29: #{local_update_gcn_forward.1} parent=11 // pred_check
        %p381 = pneg %p125
      $region30: #{local_update_gcn_forward.1} parent=11 // pred_check_branch
        %383 = sbr.rel (%p381) target = $region32
      $region31: #{local_update_gcn_forward.1} parent=11 // pred_region
        _
      $region32: #{local_update_gcn_forward.1} parent=11 // pred_fallthru
        _
      // Predicated region
      $region33: #{local_update_gcn_forward.1} parent=11 // pred_check
        %p384 = pneg %p146
      $region34: #{local_update_gcn_forward.1} parent=11 // pred_check_branch
        %386 = sbr.rel (%p384) target = $region36
      $region35: #{local_update_gcn_forward.1} parent=11 // pred_region
        _
      $region36: #{local_update_gcn_forward.1} parent=11 // pred_fallthru
        _
    $region12: #{local_update_gcn_forward.1} parent=5 // pred_fallthru
      _
    %p387 = scmp.lt.s32.totalorder %s20, 3
    // Predicated region
    $region37: #{local_update_gcn_forward.1} parent=5 // pred_check
      %p388 = pneg %p387
    $region38: #{local_update_gcn_forward.1} parent=5 // pred_check_branch
      %390 = sbr.rel (%p388) target = $region40
    $region39: #{local_update_gcn_forward.1} parent=5 // pred_region
      // Predicated region
      $region41: #{local_update_gcn_forward.1} parent=39 // pred_check
        %p391 = pneg %p166
      $region42: #{local_update_gcn_forward.1} parent=39 // pred_check_branch
        %393 = sbr.rel (%p391) target = $region44
      $region43: #{local_update_gcn_forward.1} parent=39 // pred_region
        %p394 = scmp.lt.s32.totalorder %s20, 2
        %s395 = scalar_select %p394, %s20, 2
        %s396 = scalar_lea.vmem %s6, %s395
      $region44: #{local_update_gcn_forward.1} parent=39 // pred_fallthru
        _
      // Predicated region
      $region45: #{local_update_gcn_forward.1} parent=39 // pred_check
        %p397 = pneg %p192
      $region46: #{local_update_gcn_forward.1} parent=39 // pred_check_branch
        %399 = sbr.rel (%p397) target = $region48
      $region47: #{local_update_gcn_forward.1} parent=39 // pred_region
        %p400 = scmp.lt.s32.totalorder %s20, 2
        %s401 = scalar_select %p400, %s20, 2
        %s402 = scalar_lea.vmem %s7, %s401
      $region48: #{local_update_gcn_forward.1} parent=39 // pred_fallthru
        _
      // Predicated region
      $region49: #{local_update_gcn_forward.1} parent=39 // pred_check
        %p403 = pneg %p218
      $region50: #{local_update_gcn_forward.1} parent=39 // pred_check_branch
        %405 = sbr.rel (%p403) target = $region52
      $region51: #{local_update_gcn_forward.1} parent=39 // pred_region
        %p406 = scmp.lt.s32.totalorder %s20, 2
        %s407 = scalar_select %p406, %s20, 2
        %s408 = smul.addr %s407, 8
        %s409 = scalar_lea.vmem %s8, %s408
      $region52: #{local_update_gcn_forward.1} parent=39 // pred_fallthru
        _
    $region40: #{local_update_gcn_forward.1} parent=5 // pred_fallthru
      _
    %p410 = scmp.le.s32.totalorder 1, %s20
    %p411 = scmp.lt.s32.totalorder %s20, 4
    %p412 = pnand %p410, %p411
    %p413 = pneg %p412
    // Predicated region
    $region53: #{local_update_gcn_forward.1} parent=5 // pred_check
      _
    $region54: #{local_update_gcn_forward.1} parent=5 // pred_check_branch
      %415 = sbr.rel (%p412) target = $region56
    $region55: #{local_update_gcn_forward.1} parent=5 // pred_region
      %s416 = ssub.s32 %s20, 1
      %p417 = pneg %p41
      %p418 = pneg %p38
      %p419 = pneg %p62
      %p420 = pneg %p59
      %p421 = pneg %p83
      %p422 = pneg %p80
      %p423 = pneg %p104
      %p424 = pneg %p101
      %p425 = pneg %p125
      %p426 = pneg %p122
      %p427 = pneg %p146
      %p428 = pneg %p143
      %p429 = scmp.lt.s32.totalorder %s25, 2
      %s430 = scalar_select %p429, %s25, 2
      %s431 = scalar_lea.vmem %s6, %s430
      %p432 = pneg %p172
      %p433 = pneg %p169
      %p434 = scmp.lt.s32.totalorder %s25, 2
      %s435 = scalar_select %p434, %s25, 2
      %s436 = scalar_lea.vmem %s7, %s435
      %p437 = pneg %p198
      %p438 = pneg %p195
      %p439 = scmp.lt.s32.totalorder %s25, 2
      %s440 = scalar_select %p439, %s25, 2
      %s441 = smul.addr %s440, 8
      %s442 = scalar_lea.vmem %s8, %s441
      %p443 = pneg %p224
      %p444 = pneg %p221
      %p445 = pneg %p250
      %p446 = pneg %p247
      %p447 = scmp.lt.s32.totalorder %s25, 2
      %s448 = scalar_select %p447, %s25, 2
      %s449 = scalar_lea.vmem %s9, %s448
      %p450 = pneg %p276
      %p451 = pneg %p273
      %p452 = scmp.lt.s32.totalorder %s25, 2
      %s453 = scalar_select %p452, %s25, 2
      %s454 = smul.addr %s453, 4
      %s455 = smul.addr %s454, 8
      %s456 = scalar_lea.vmem %s10, %s455
      %p457 = pneg %p302
      %p458 = pneg %p299
      %p459 = scmp.lt.s32.totalorder %s25, 2
      %s460 = scalar_select %p459, %s25, 2
      %s461 = smul.addr %s460, 16
      %s462 = smul.addr %s461, 8
      %s463 = scalar_lea.vmem %s11, %s462
      %p464 = pneg %p328
      %p465 = pneg %p325
      %p466 = scmp.lt.s32.totalorder %s25, 2
      %s467 = scalar_select %p466, %s25, 2
      %s468 = smul.addr %s467, 8
      %s469 = scalar_lea.vmem %s12, %s468
      %p470 = pneg %p354
      %p471 = pneg %p351
      %p472 = scmp.lt.s32.totalorder %s25, 2
      %s473 = scalar_select %p472, %s25, 2
      %s474 = smul.addr %s473, 8
      %s475 = scalar_lea.vmem %s13, %s474
      %p476 = scmp.lt.s32.totalorder %s25, 2
      %s477 = scalar_select %p476, %s25, 2
      %s478 = scalar_lea.vmem %s6, %s477
      %p479 = scmp.lt.s32.totalorder %s25, 2
      %s480 = scalar_select %p479, %s25, 2
      %s481 = scalar_lea.vmem %s7, %s480
      %p482 = scmp.lt.s32.totalorder %s25, 2
      %s483 = scalar_select %p482, %s25, 2
      %s484 = smul.addr %s483, 8
      %s485 = scalar_lea.vmem %s8, %s484
      %p486 = scmp.lt.s32.totalorder %s25, 2
      %s487 = scalar_select %p486, %s25, 2
      %s488 = scalar_lea.vmem %s9, %s487
      %p489 = scmp.lt.s32.totalorder %s25, 2
      %s490 = scalar_select %p489, %s25, 2
      %s491 = smul.addr %s490, 4
      %s492 = smul.addr %s491, 8
      %s493 = scalar_lea.vmem %s10, %s492
      %p494 = scmp.lt.s32.totalorder %s25, 2
      %s495 = scalar_select %p494, %s25, 2
      %s496 = smul.addr %s495, 16
      %s497 = smul.addr %s496, 8
      %s498 = scalar_lea.vmem %s11, %s497
      %p499 = scmp.lt.s32.totalorder %s25, 2
      %s500 = scalar_select %p499, %s25, 2
      %s501 = smul.addr %s500, 8
      %s502 = scalar_lea.vmem %s12, %s501
      %p503 = scmp.lt.s32.totalorder %s25, 2
      %s504 = scalar_select %p503, %s25, 2
      %s505 = smul.addr %s504, 8
      %s506 = scalar_lea.vmem %s13, %s505
      %v508 = vld [vmem:[%s0] sm:$0xf]
      %v509 = vld [vmem:[%s0 + $0x4] sm:$0xf]
      %v510 = vld [vmem:[%s0 + $0x8] sm:$0xf]
      %v511 = vld [vmem:[%s0 + $0xc] sm:$0xf]
      %v512 = vld [vmem:[%s1] sm:$0xf]
      %v513 = vld [vmem:[%s1 + $0x4] sm:$0xf]
      %v514 = vld [vmem:[%s1 + $0x8] sm:$0xf]
      %v515 = vld [vmem:[%s1 + $0xc] sm:$0xf]
      %v516 = vld [vmem:[%s1 + $0x10] sm:$0xf]
      %v517 = vld [vmem:[%s1 + $0x14] sm:$0xf]
      %v518 = vld [vmem:[%s1 + $0x18] sm:$0xf]
      %v519 = vld [vmem:[%s1 + $0x1c] sm:$0xf]
      %v520 = vld [vmem:[%s1 + $0x20] sm:$0xf]
      %v521 = vld [vmem:[%s1 + $0x24] sm:$0xf]
      %v522 = vld [vmem:[%s1 + $0x28] sm:$0xf]
      %v523 = vld [vmem:[%s1 + $0x2c] sm:$0xf]
      %v524 = vld [vmem:[%s1 + $0x30] sm:$0xf]
      %v525 = vld [vmem:[%s1 + $0x34] sm:$0xf]
      %v526 = vld [vmem:[%s1 + $0x38] sm:$0xf]
      %v527 = vld [vmem:[%s1 + $0x3c] sm:$0xf]
      %v528 = vld [vmem:[%s478] sm:$0x1]
      %v529 = vld [vmem:[%s481] sm:$0x1]
      %v530 = vld [vmem:[%s485] sm:$0xff]
      %v531 = vld [vmem:[%s2] sm:$0xff]
      %v532 = vld [vmem:[%s2 + $0x8] sm:$0xff]
      %v533 = vld [vmem:[%s2 + $0x10] sm:$0xff]
      %v534 = vld [vmem:[%s2 + $0x18] sm:$0xff]
      %v535 = vld [vmem:[%s3] sm:$0xff]
      %v536 = vld [vmem:[%s3 + $0x8] sm:$0xff]
      %v537 = vld [vmem:[%s3 + $0x10] sm:$0xff]
      %v538 = vld [vmem:[%s3 + $0x18] sm:$0xff]
      %v539 = vld [vmem:[%s3 + $0x20] sm:$0xff]
      %v540 = vld [vmem:[%s3 + $0x28] sm:$0xff]
      %v541 = vld [vmem:[%s3 + $0x30] sm:$0xff]
      %v542 = vld [vmem:[%s3 + $0x38] sm:$0xff]
      %v543 = vld [vmem:[%s3 + $0x40] sm:$0xff]
      %v544 = vld [vmem:[%s3 + $0x48] sm:$0xff]
      %v545 = vld [vmem:[%s3 + $0x50] sm:$0xff]
      %v546 = vld [vmem:[%s3 + $0x58] sm:$0xff]
      %v547 = vld [vmem:[%s3 + $0x60] sm:$0xff]
      %v548 = vld [vmem:[%s3 + $0x68] sm:$0xff]
      %v549 = vld [vmem:[%s3 + $0x70] sm:$0xff]
      %v550 = vld [vmem:[%s3 + $0x78] sm:$0xff]
      %v551 = vld [vmem:[%s4] sm:$0xff]
      %v552 = vld [vmem:[%s5] sm:$0xff]
      %v553 = vpack.c.bf16 %v532, %v531
      %v554 = vpack.c.bf16 %v534, %v533
      %556 = vset.pattern.permute.xlu0 0
      %557 = vperm.xlu0 %556, %v535
      %v558 = vpop.permute.xlu0 %557
      %561 = vset.pattern.permute.xlu0 0
      %562 = vperm.xlu0 %561, %v536
      %v563 = vpop.permute.xlu0 %562
      %566 = vset.pattern.permute.xlu0 0
      %567 = vperm.xlu0 %566, %v537
      %v568 = vpop.permute.xlu0 %567
      %571 = vset.pattern.permute.xlu0 0
      %572 = vperm.xlu0 %571, %v538
      %v573 = vpop.permute.xlu0 %572
      %576 = vset.pattern.permute.xlu0 0
      %577 = vperm.xlu0 %576, %v539
      %v578 = vpop.permute.xlu0 %577
      %581 = vset.pattern.permute.xlu0 0
      %582 = vperm.xlu0 %581, %v540
      %v583 = vpop.permute.xlu0 %582
      %586 = vset.pattern.permute.xlu0 0
      %587 = vperm.xlu0 %586, %v541
      %v588 = vpop.permute.xlu0 %587
      %591 = vset.pattern.permute.xlu0 0
      %592 = vperm.xlu0 %591, %v542
      %v593 = vpop.permute.xlu0 %592
      %596 = vset.pattern.permute.xlu0 0
      %597 = vperm.xlu0 %596, %v543
      %v598 = vpop.permute.xlu0 %597
      %601 = vset.pattern.permute.xlu0 0
      %602 = vperm.xlu0 %601, %v544
      %v603 = vpop.permute.xlu0 %602
      %606 = vset.pattern.permute.xlu0 0
      %607 = vperm.xlu0 %606, %v545
      %v608 = vpop.permute.xlu0 %607
      %611 = vset.pattern.permute.xlu0 0
      %612 = vperm.xlu0 %611, %v546
      %v613 = vpop.permute.xlu0 %612
      %616 = vset.pattern.permute.xlu0 0
      %617 = vperm.xlu0 %616, %v547
      %v618 = vpop.permute.xlu0 %617
      %621 = vset.pattern.permute.xlu0 0
      %622 = vperm.xlu0 %621, %v548
      %v623 = vpop.permute.xlu0 %622
      %626 = vset.pattern.permute.xlu0 0
      %627 = vperm.xlu0 %626, %v549
      %v628 = vpop.permute.xlu0 %627
      %631 = vset.pattern.permute.xlu0 0
      %632 = vperm.xlu0 %631, %v550
      %v633 = vpop.permute.xlu0 %632
      %635 = vxpose.xlu0.c.b16.start [1/8] %v553, 128
      %636 = vxpose.xlu0.c.b16.cont [2/8] %v554, 128
      %637 = vxpose.xlu0.c.b16.cont [3/8] 0, 128
      %638 = vxpose.xlu0.c.b16.cont [4/8] 0, 128
      %639 = vxpose.xlu0.c.b16.cont [5/8] 0, 128
      %640 = vxpose.xlu0.c.b16.cont [6/8] 0, 128
      %641 = vxpose.xlu0.c.b16.cont [7/8] 0, 128
      %642 = vxpose.xlu0.c.b16.end [8/8] 0, 128
      %v643 = vpop.trf.xlu0
      %v644 = vpop.trf.xlu0
      %v645 = vpop.trf.xlu0
      %v646 = vpop.trf.xlu0
      %v647 = vpop.trf.xlu0
      %v648 = vpop.trf.xlu0
      %v649 = vpop.trf.xlu0
      %v650 = vpop.trf.xlu0
      %v655 = vunpack.c.l.b16 %v508
      %v656 = vunpack.c.l.b16 %v509
      %v657 = vunpack.c.l.b16 %v510
      %v658 = vunpack.c.l.b16 %v511
      %v659 = vpack.c.b16 %v656, %v655
      %v660 = vpack.c.b16 %v658, %v657
      %vm663 = vcmask 261120
      %v665 = vsel %vm663, %v643, 0
      %v668 = vsel %vm663, %v644, 0
      %v671 = vsel %vm663, %v645, 0
      %v674 = vsel %vm663, %v646, 0
      %v677 = vsel %vm663, %v647, 0
      %v680 = vsel %vm663, %v648, 0
      %v683 = vsel %vm663, %v649, 0
      %v686 = vsel %vm663, %v650, 0
      %688 = vmatpush.bf16.msra.mxu0 0
      %689 = vmatpush.bf16.msra.mxu0 0
      %690 = vmatpush.bf16.msra.mxu0 0
      %691 = vmatpush.bf16.msra.mxu0 0
      %692 = vmatpush.bf16.msra.mxu0 0
      %693 = vmatpush.bf16.msra.mxu0 0
      %694 = vmatpush.bf16.msra.mxu0 %v660
      %695 = vmatpush.bf16.msra.mxu0 %v659
      %696 = vmatmul.bf16.gmra.mxu0 %v665
      %v697 = vpop.f32.mrf.mxu0
      %v698 = vadd.f32 %v558, %v697
      %v699 = vpop.f32.mrf.mxu0
      %v700 = vadd.f32 %v563, %v699
      %701 = vmatmul.bf16.gmra.mxu0 %v668
      %v702 = vpop.f32.mrf.mxu0
      %v703 = vadd.f32 %v568, %v702
      %v704 = vpop.f32.mrf.mxu0
      %v705 = vadd.f32 %v573, %v704
      %706 = vmatmul.bf16.gmra.mxu0 %v671
      %v707 = vpop.f32.mrf.mxu0
      %v708 = vadd.f32 %v578, %v707
      %v709 = vpop.f32.mrf.mxu0
      %v710 = vadd.f32 %v583, %v709
      %711 = vmatmul.bf16.gmra.mxu0 %v674
      %v712 = vpop.f32.mrf.mxu0
      %v713 = vadd.f32 %v588, %v712
      %v714 = vpop.f32.mrf.mxu0
      %v715 = vadd.f32 %v593, %v714
      %716 = vmatmul.bf16.gmra.mxu0 %v677
      %v717 = vpop.f32.mrf.mxu0
      %v718 = vadd.f32 %v598, %v717
      %v719 = vpop.f32.mrf.mxu0
      %v720 = vadd.f32 %v603, %v719
      %721 = vmatmul.bf16.gmra.mxu0 %v680
      %v722 = vpop.f32.mrf.mxu0
      %v723 = vadd.f32 %v608, %v722
      %v724 = vpop.f32.mrf.mxu0
      %v725 = vadd.f32 %v613, %v724
      %726 = vmatmul.bf16.gmra.mxu0 %v683
      %v727 = vpop.f32.mrf.mxu0
      %v728 = vadd.f32 %v618, %v727
      %v729 = vpop.f32.mrf.mxu0
      %v730 = vadd.f32 %v623, %v729
      %731 = vmatmul.bf16.gmra.mxu0 %v686
      %v732 = vpop.f32.mrf.mxu0
      %v733 = vadd.f32 %v628, %v732
      %v734 = vpop.f32.mrf.mxu0
      %v735 = vadd.f32 %v633, %v734
      %736 = vdwg.mxu0
      %v737 = vmax.f32 %v698, 0.0
      %v738 = vmax.f32 %v700, 0.0
      %v739 = vmax.f32 %v703, 0.0
      %v740 = vmax.f32 %v705, 0.0
      %v741 = vmax.f32 %v708, 0.0
      %v742 = vmax.f32 %v710, 0.0
      %v743 = vmax.f32 %v713, 0.0
      %v744 = vmax.f32 %v715, 0.0
      %v745 = vmax.f32 %v718, 0.0
      %v746 = vmax.f32 %v720, 0.0
      %v747 = vmax.f32 %v723, 0.0
      %v748 = vmax.f32 %v725, 0.0
      %v749 = vmax.f32 %v728, 0.0
      %v750 = vmax.f32 %v730, 0.0
      %v751 = vmax.f32 %v733, 0.0
      %v752 = vmax.f32 %v735, 0.0
      %v753 = vpack.c.bf16 %v738, %v737
      %v754 = vpack.c.bf16 %v740, %v739
      %v755 = vpack.c.bf16 %v742, %v741
      %v756 = vpack.c.bf16 %v744, %v743
      %v757 = vpack.c.bf16 %v746, %v745
      %v758 = vpack.c.bf16 %v748, %v747
      %v759 = vpack.c.bf16 %v750, %v749
      %v760 = vpack.c.bf16 %v752, %v751
      %v777 = vunpack.c.l.b16 %v512
      %v778 = vunpack.c.l.b16 %v513
      %v779 = vunpack.c.l.b16 %v514
      %v780 = vunpack.c.l.b16 %v515
      %v781 = vunpack.c.l.b16 %v516
      %v782 = vunpack.c.l.b16 %v517
      %v783 = vunpack.c.l.b16 %v518
      %v784 = vunpack.c.l.b16 %v519
      %v785 = vunpack.c.l.b16 %v520
      %v786 = vunpack.c.l.b16 %v521
      %v787 = vunpack.c.l.b16 %v522
      %v788 = vunpack.c.l.b16 %v523
      %v789 = vunpack.c.l.b16 %v524
      %v790 = vunpack.c.l.b16 %v525
      %v791 = vunpack.c.l.b16 %v526
      %v792 = vunpack.c.l.b16 %v527
      %v793 = vpack.c.b16 %v778, %v777
      %v794 = vpack.c.b16 %v780, %v779
      %v795 = vpack.c.b16 %v782, %v781
      %v796 = vpack.c.b16 %v784, %v783
      %v797 = vpack.c.b16 %v786, %v785
      %v798 = vpack.c.b16 %v788, %v787
      %v799 = vpack.c.b16 %v790, %v789
      %v800 = vpack.c.b16 %v792, %v791
      %809 = vmatpush.bf16.xpose.msra.mxu0 %v800
      %810 = vmatpush.bf16.xpose.msra.mxu0 %v799
      %811 = vmatpush.bf16.xpose.msra.mxu0 %v798
      %812 = vmatpush.bf16.xpose.msra.mxu0 %v797
      %813 = vmatpush.bf16.xpose.msra.mxu0 %v796
      %814 = vmatpush.bf16.xpose.msra.mxu0 %v795
      %815 = vmatpush.bf16.xpose.msra.mxu0 %v794
      %816 = vmatpush.bf16.xpose.msra.mxu0 %v793
      %817 = vmatmul.bf16.gmra.mxu0 %v753
      %v818 = vpop.f32.mrf.mxu0
      %v819 = vadd.f32 0.0, %v818
      %v820 = vpop.f32.mrf.mxu0
      %v821 = vadd.f32 0.0, %v820
      %822 = vmatmul.bf16.gmra.mxu0 %v754
      %v823 = vpop.f32.mrf.mxu0
      %v824 = vadd.f32 0.0, %v823
      %v825 = vpop.f32.mrf.mxu0
      %v826 = vadd.f32 0.0, %v825
      %827 = vmatmul.bf16.gmra.mxu0 %v755
      %v828 = vpop.f32.mrf.mxu0
      %v829 = vadd.f32 0.0, %v828
      %v830 = vpop.f32.mrf.mxu0
      %v831 = vadd.f32 0.0, %v830
      %832 = vmatmul.bf16.gmra.mxu0 %v756
      %v833 = vpop.f32.mrf.mxu0
      %v834 = vadd.f32 0.0, %v833
      %v835 = vpop.f32.mrf.mxu0
      %v836 = vadd.f32 0.0, %v835
      %837 = vmatmul.bf16.gmra.mxu0 %v757
      %v838 = vpop.f32.mrf.mxu0
      %v839 = vadd.f32 0.0, %v838
      %v840 = vpop.f32.mrf.mxu0
      %v841 = vadd.f32 0.0, %v840
      %842 = vmatmul.bf16.gmra.mxu0 %v758
      %v843 = vpop.f32.mrf.mxu0
      %v844 = vadd.f32 0.0, %v843
      %v845 = vpop.f32.mrf.mxu0
      %v846 = vadd.f32 0.0, %v845
      %847 = vmatmul.bf16.gmra.mxu0 %v759
      %v848 = vpop.f32.mrf.mxu0
      %v849 = vadd.f32 0.0, %v848
      %v850 = vpop.f32.mrf.mxu0
      %v851 = vadd.f32 0.0, %v850
      %852 = vmatmul.bf16.gmra.mxu0 %v760
      %v853 = vpop.f32.mrf.mxu0
      %v854 = vadd.f32 0.0, %v853
      %v855 = vpop.f32.mrf.mxu0
      %v856 = vadd.f32 0.0, %v855
      %857 = vdwg.mxu0
      %v858 = vpack.c.bf16 %v551, %v551
      %v859 = vpack.c.bf16 %v821, %v819
      %v860 = vpack.c.bf16 %v826, %v824
      %v861 = vpack.c.bf16 %v831, %v829
      %v862 = vpack.c.bf16 %v836, %v834
      %v863 = vpack.c.bf16 %v841, %v839
      %v864 = vpack.c.bf16 %v846, %v844
      %v865 = vpack.c.bf16 %v851, %v849
      %v866 = vpack.c.bf16 %v856, %v854
      %868 = vset.pattern.permute.xlu0 0
      %869 = vperm.xlu0 %868, %v552
      %v870 = vpop.permute.xlu0 %869
      %872 = vmatpush.bf16.msra.mxu0 %v866
      %873 = vmatpush.bf16.msra.mxu0 %v865
      %874 = vmatpush.bf16.msra.mxu0 %v864
      %875 = vmatpush.bf16.msra.mxu0 %v863
      %876 = vmatpush.bf16.msra.mxu0 %v862
      %877 = vmatpush.bf16.msra.mxu0 %v861
      %878 = vmatpush.bf16.msra.mxu0 %v860
      %879 = vmatpush.bf16.msra.mxu0 %v859
      %880 = vmatmul.bf16.gmra.mxu0 %v858
      %v881 = vpop.f32.mrf.mxu0
      %v882 = vadd.f32 %v870, %v881
      %v883 = vpop.f32.mrf.mxu0
      %884 = vdwg.mxu0
      %v885 = vrot.slane %v882, 4
      %v886 = vmax.f32 %v882, %v885
      %v887 = vrot.slane %v886, 2
      %v888 = vmax.f32 %v886, %v887
      %v889 = vrot.slane %v888, 1
      %v890 = vmax.f32 %v888, %v889
      %v891 = vsub.f32 %v882, %v890
      %v892 = vmul.f32 %v891, 1.442695
      %v893 = vpow.pop %v892
      %v894 = vrot.slane %v893, 4
      %v895 = vadd.f32 %v893, %v894
      %v896 = vrot.slane %v895, 2
      %v897 = vadd.f32 %v895, %v896
      %v898 = vrot.slane %v897, 1
      %v899 = vadd.f32 %v897, %v898
      %v900 = vlog2.pop %v899
      %v901 = vmul.f32 %v900, 0.6931472
      %v902 = vsub.f32 %v891, %v901
      %v903 = vrcp.pop %v899
      %v904 = vmul.f32 %v893, %v903
      %v905 = vsub.f32 %v904, %v530
      %v907 = vperm.slane %v528, 0
      %v909 = vmul.f32 %v905, %v907
      %v910 = vpack.c.bf16 %v909, %v909
      %911 = vmatpush.bf16.msra.mxu0 %v800
      %912 = vmatpush.bf16.msra.mxu0 %v799
      %913 = vmatpush.bf16.msra.mxu0 %v798
      %914 = vmatpush.bf16.msra.mxu0 %v797
      %915 = vmatpush.bf16.msra.mxu0 %v796
      %916 = vmatpush.bf16.msra.mxu0 %v795
      %917 = vmatpush.bf16.msra.mxu0 %v794
      %918 = vmatpush.bf16.msra.mxu0 %v793
      %919 = vmatmul.bf16.gmra.mxu0 %v910
      %v920 = vpop.f32.mrf.mxu0
      %v921 = vadd.f32 0.0, %v920
      %v922 = vpop.f32.mrf.mxu0
      %923 = vdwg.mxu0
      %v924 = vpack.c.bf16 %v921, %v921
      %925 = vmatpush.bf16.xpose.msra.mxu0 %v760
      %926 = vmatpush.bf16.xpose.msra.mxu0 %v759
      %927 = vmatpush.bf16.xpose.msra.mxu0 %v758
      %928 = vmatpush.bf16.xpose.msra.mxu0 %v757
      %929 = vmatpush.bf16.xpose.msra.mxu0 %v756
      %930 = vmatpush.bf16.xpose.msra.mxu0 %v755
      %931 = vmatpush.bf16.xpose.msra.mxu0 %v754
      %932 = vmatpush.bf16.xpose.msra.mxu0 %v753
      %933 = vmatmul.bf16.gmra.mxu0 %v924
      %v934 = vpop.f32.mrf.mxu0
      %v935 = vadd.f32 0.0, %v934
      %v936 = vpop.f32.mrf.mxu0
      %937 = vdwg.mxu0
      %938 = vadd.xlane.f32.xlu0 %v909
      %v939 = vpop.xlane.xlu0 %938
      %940 = vxpose.xlu0.c.b16.start [1/8] %v858, 128
      %941 = vxpose.xlu0.c.b16.cont [2/8] 0, 128
      %942 = vxpose.xlu0.c.b16.cont [3/8] 0, 128
      %943 = vxpose.xlu0.c.b16.cont [4/8] 0, 128
      %944 = vxpose.xlu0.c.b16.cont [5/8] 0, 128
      %945 = vxpose.xlu0.c.b16.cont [6/8] 0, 128
      %946 = vxpose.xlu0.c.b16.cont [7/8] 0, 128
      %947 = vxpose.xlu0.c.b16.end [8/8] 0, 128
      %v948 = vpop.trf.xlu0
      %v949 = vpop.trf.xlu0
      %v950 = vpop.trf.xlu0
      %v951 = vpop.trf.xlu0
      %v952 = vpop.trf.xlu0
      %v953 = vpop.trf.xlu0
      %v954 = vpop.trf.xlu0
      %v955 = vpop.trf.xlu0
      %vm956 = vcmask 64512
      %v958 = vsel %vm956, %v948, 0
      %v961 = vsel %vm956, %v949, 0
      %v964 = vsel %vm956, %v950, 0
      %v967 = vsel %vm956, %v951, 0
      %v970 = vsel %vm956, %v952, 0
      %v973 = vsel %vm956, %v953, 0
      %v976 = vsel %vm956, %v954, 0
      %v979 = vsel %vm956, %v955, 0
      %vm981 = vcmask 1043456
      %v983 = vsel %vm981, %v924, 0
      %985 = vmatpush.bf16.msra.mxu0 0
      %986 = vmatpush.bf16.msra.mxu0 0
      %987 = vmatpush.bf16.msra.mxu0 0
      %988 = vmatpush.bf16.msra.mxu0 0
      %989 = vmatpush.bf16.msra.mxu0 0
      %990 = vmatpush.bf16.msra.mxu0 0
      %991 = vmatpush.bf16.msra.mxu0 0
      %992 = vmatpush.bf16.msra.mxu0 %v983
      %993 = vmatmul.bf16.gmra.mxu0 %v958
      %v994 = vpop.f32.mrf.mxu0
      %v995 = vadd.f32 0.0, %v994
      %v996 = vpop.f32.mrf.mxu0
      %v997 = vadd.f32 0.0, %v996
      %998 = vmatmul.bf16.gmra.mxu0 %v961
      %v999 = vpop.f32.mrf.mxu0
      %v1000 = vadd.f32 0.0, %v999
      %v1001 = vpop.f32.mrf.mxu0
      %v1002 = vadd.f32 0.0, %v1001
      %1003 = vmatmul.bf16.gmra.mxu0 %v964
      %v1004 = vpop.f32.mrf.mxu0
      %v1005 = vadd.f32 0.0, %v1004
      %v1006 = vpop.f32.mrf.mxu0
      %v1007 = vadd.f32 0.0, %v1006
      %1008 = vmatmul.bf16.gmra.mxu0 %v967
      %v1009 = vpop.f32.mrf.mxu0
      %v1010 = vadd.f32 0.0, %v1009
      %v1011 = vpop.f32.mrf.mxu0
      %v1012 = vadd.f32 0.0, %v1011
      %1013 = vmatmul.bf16.gmra.mxu0 %v970
      %v1014 = vpop.f32.mrf.mxu0
      %v1015 = vadd.f32 0.0, %v1014
      %v1016 = vpop.f32.mrf.mxu0
      %v1017 = vadd.f32 0.0, %v1016
      %1018 = vmatmul.bf16.gmra.mxu0 %v973
      %v1019 = vpop.f32.mrf.mxu0
      %v1020 = vadd.f32 0.0, %v1019
      %v1021 = vpop.f32.mrf.mxu0
      %v1022 = vadd.f32 0.0, %v1021
      %1023 = vmatmul.bf16.gmra.mxu0 %v976
      %v1024 = vpop.f32.mrf.mxu0
      %v1025 = vadd.f32 0.0, %v1024
      %v1026 = vpop.f32.mrf.mxu0
      %v1027 = vadd.f32 0.0, %v1026
      %1028 = vmatmul.bf16.gmra.mxu0 %v979
      %v1029 = vpop.f32.mrf.mxu0
      %v1030 = vadd.f32 0.0, %v1029
      %v1031 = vpop.f32.mrf.mxu0
      %v1032 = vadd.f32 0.0, %v1031
      %1033 = vdwg.mxu0
      %vm1034 = vcmp.gt.f32.partialorder %v698, 0.0
      %vm1035 = vcmp.gt.f32.partialorder %v700, 0.0
      %vm1036 = vcmp.gt.f32.partialorder %v703, 0.0
      %vm1037 = vcmp.gt.f32.partialorder %v705, 0.0
      %vm1038 = vcmp.gt.f32.partialorder %v708, 0.0
      %vm1039 = vcmp.gt.f32.partialorder %v710, 0.0
      %vm1040 = vcmp.gt.f32.partialorder %v713, 0.0
      %vm1041 = vcmp.gt.f32.partialorder %v715, 0.0
      %vm1042 = vcmp.gt.f32.partialorder %v718, 0.0
      %vm1043 = vcmp.gt.f32.partialorder %v720, 0.0
      %vm1044 = vcmp.gt.f32.partialorder %v723, 0.0
      %vm1045 = vcmp.gt.f32.partialorder %v725, 0.0
      %vm1046 = vcmp.gt.f32.partialorder %v728, 0.0
      %vm1047 = vcmp.gt.f32.partialorder %v730, 0.0
      %vm1048 = vcmp.gt.f32.partialorder %v733, 0.0
      %vm1049 = vcmp.gt.f32.partialorder %v735, 0.0
      %v1050 = vsel %vm1034, %v995, 0.0
      %v1051 = vsel %vm1035, %v997, 0.0
      %v1052 = vsel %vm1036, %v1000, 0.0
      %v1053 = vsel %vm1037, %v1002, 0.0
      %v1054 = vsel %vm1038, %v1005, 0.0
      %v1055 = vsel %vm1039, %v1007, 0.0
      %v1056 = vsel %vm1040, %v1010, 0.0
      %v1057 = vsel %vm1041, %v1012, 0.0
      %v1058 = vsel %vm1042, %v1015, 0.0
      %v1059 = vsel %vm1043, %v1017, 0.0
      %v1060 = vsel %vm1044, %v1020, 0.0
      %v1061 = vsel %vm1045, %v1022, 0.0
      %v1062 = vsel %vm1046, %v1025, 0.0
      %v1063 = vsel %vm1047, %v1027, 0.0
      %v1064 = vsel %vm1048, %v1030, 0.0
      %v1065 = vsel %vm1049, %v1032, 0.0
      %v1066 = vpack.c.bf16 %v1051, %v1050
      %v1067 = vpack.c.bf16 %v1053, %v1052
      %v1068 = vpack.c.bf16 %v1055, %v1054
      %v1069 = vpack.c.bf16 %v1057, %v1056
      %v1070 = vpack.c.bf16 %v1059, %v1058
      %v1071 = vpack.c.bf16 %v1061, %v1060
      %v1072 = vpack.c.bf16 %v1063, %v1062
      %v1073 = vpack.c.bf16 %v1065, %v1064
      %1074 = vmatpush.bf16.xpose.msra.mxu0 %v1073
      %1075 = vmatpush.bf16.xpose.msra.mxu0 %v1072
      %1076 = vmatpush.bf16.xpose.msra.mxu0 %v1071
      %1077 = vmatpush.bf16.xpose.msra.mxu0 %v1070
      %1078 = vmatpush.bf16.xpose.msra.mxu0 %v1069
      %1079 = vmatpush.bf16.xpose.msra.mxu0 %v1068
      %1080 = vmatpush.bf16.xpose.msra.mxu0 %v1067
      %1081 = vmatpush.bf16.xpose.msra.mxu0 %v1066
      %1082 = vmatmul.bf16.gmra.mxu0 %v659
      %v1083 = vpop.f32.mrf.mxu0
      %v1084 = vadd.f32 0.0, %v1083
      %v1085 = vpop.f32.mrf.mxu0
      %v1086 = vadd.f32 0.0, %v1085
      %1087 = vmatmul.bf16.gmra.mxu0 %v660
      %v1088 = vpop.f32.mrf.mxu0
      %v1089 = vadd.f32 0.0, %v1088
      %v1090 = vpop.f32.mrf.mxu0
      %v1091 = vadd.f32 0.0, %v1090
      %1092 = vdwg.mxu0
      %1093 = vadd.xlane.f32.xlu0 %v1050
      %v1094 = vpop.xlane.xlu0 %1093
      %1095 = vadd.xlane.f32.xlu0 %v1051
      %v1096 = vpop.xlane.xlu0 %1095
      %1097 = vadd.xlane.f32.xlu0 %v1052
      %v1098 = vpop.xlane.xlu0 %1097
      %1099 = vadd.xlane.f32.xlu0 %v1053
      %v1100 = vpop.xlane.xlu0 %1099
      %1101 = vadd.xlane.f32.xlu0 %v1054
      %v1102 = vpop.xlane.xlu0 %1101
      %1103 = vadd.xlane.f32.xlu0 %v1055
      %v1104 = vpop.xlane.xlu0 %1103
      %1105 = vadd.xlane.f32.xlu0 %v1056
      %v1106 = vpop.xlane.xlu0 %1105
      %1107 = vadd.xlane.f32.xlu0 %v1057
      %v1108 = vpop.xlane.xlu0 %1107
      %1109 = vadd.xlane.f32.xlu0 %v1058
      %v1110 = vpop.xlane.xlu0 %1109
      %1111 = vadd.xlane.f32.xlu0 %v1059
      %v1112 = vpop.xlane.xlu0 %1111
      %1113 = vadd.xlane.f32.xlu0 %v1060
      %v1114 = vpop.xlane.xlu0 %1113
      %1115 = vadd.xlane.f32.xlu0 %v1061
      %v1116 = vpop.xlane.xlu0 %1115
      %1117 = vadd.xlane.f32.xlu0 %v1062
      %v1118 = vpop.xlane.xlu0 %1117
      %1119 = vadd.xlane.f32.xlu0 %v1063
      %v1120 = vpop.xlane.xlu0 %1119
      %1121 = vadd.xlane.f32.xlu0 %v1064
      %v1122 = vpop.xlane.xlu0 %1121
      %1123 = vadd.xlane.f32.xlu0 %v1065
      %v1124 = vpop.xlane.xlu0 %1123
      %v1125 = vmul.f32 %v530, %v902
      %v1126 = vrot.slane %v1125, 4
      %v1127 = vadd.f32 %v1125, %v1126
      %v1128 = vrot.slane %v1127, 2
      %v1129 = vadd.f32 %v1127, %v1128
      %v1130 = vrot.slane %v1129, 1
      %v1131 = vadd.f32 %v1129, %v1130
      %v1132 = vmul.f32 %v529, %v1131
      %vm1133 = vcmask 1040384
      %v1134 = vsel %vm1133, %v1132, 0.0
      %1135 = vadd.xlane.f32.xlu0 %v1134
      %v1136 = vpop.xlane.xlu0 %1135
      %v1137 = vrot.slane %v1136, 4
      %v1138 = vadd.f32 %v1136, %v1137
      %v1139 = vrot.slane %v1138, 2
      %v1140 = vadd.f32 %v1138, %v1139
      %v1141 = vrot.slane %v1140, 1
      %v1142 = vadd.f32 %v1140, %v1141
      %s1143 = vtos %v1142
      %v1144 = vstv %s1143
      %v1145 = vsub.f32 0.0, %v1144
      %v1146 = vmul.f32 %v1084, 0.01
      %v1147 = vmul.f32 %v1086, 0.01
      %v1148 = vmul.f32 %v1089, 0.01
      %v1149 = vmul.f32 %v1091, 0.01
      %v1150 = vsub.f32 %v531, %v1146
      %v1151 = vsub.f32 %v532, %v1147
      %v1152 = vsub.f32 %v533, %v1148
      %v1153 = vsub.f32 %v534, %v1149
      %v1154 = vmul.f32 %v1094, 0.01
      %v1155 = vmul.f32 %v1096, 0.01
      %v1156 = vmul.f32 %v1098, 0.01
      %v1157 = vmul.f32 %v1100, 0.01
      %v1158 = vmul.f32 %v1102, 0.01
      %v1159 = vmul.f32 %v1104, 0.01
      %v1160 = vmul.f32 %v1106, 0.01
      %v1161 = vmul.f32 %v1108, 0.01
      %v1162 = vmul.f32 %v1110, 0.01
      %v1163 = vmul.f32 %v1112, 0.01
      %v1164 = vmul.f32 %v1114, 0.01
      %v1165 = vmul.f32 %v1116, 0.01
      %v1166 = vmul.f32 %v1118, 0.01
      %v1167 = vmul.f32 %v1120, 0.01
      %v1168 = vmul.f32 %v1122, 0.01
      %v1169 = vmul.f32 %v1124, 0.01
      %v1170 = vsub.f32 %v535, %v1154
      %v1171 = vsub.f32 %v536, %v1155
      %v1172 = vsub.f32 %v537, %v1156
      %v1173 = vsub.f32 %v538, %v1157
      %v1174 = vsub.f32 %v539, %v1158
      %v1175 = vsub.f32 %v540, %v1159
      %v1176 = vsub.f32 %v541, %v1160
      %v1177 = vsub.f32 %v542, %v1161
      %v1178 = vsub.f32 %v543, %v1162
      %v1179 = vsub.f32 %v544, %v1163
      %v1180 = vsub.f32 %v545, %v1164
      %v1181 = vsub.f32 %v546, %v1165
      %v1182 = vsub.f32 %v547, %v1166
      %v1183 = vsub.f32 %v548, %v1167
      %v1184 = vsub.f32 %v549, %v1168
      %v1185 = vsub.f32 %v550, %v1169
      %v1186 = vmul.f32 %v935, 0.01
      %v1187 = vsub.f32 %v551, %v1186
      %v1188 = vmul.f32 %v939, 0.01
      %v1189 = vsub.f32 %v552, %v1188
      %v1190 = vpack.c.bf16 %v1151, %v1150
      %v1191 = vpack.c.bf16 %v1153, %v1152
      %1193 = vset.pattern.permute.xlu0 0
      %1194 = vperm.xlu0 %1193, %v1170
      %v1195 = vpop.permute.xlu0 %1194
      %1198 = vset.pattern.permute.xlu0 0
      %1199 = vperm.xlu0 %1198, %v1171
      %v1200 = vpop.permute.xlu0 %1199
      %1203 = vset.pattern.permute.xlu0 0
      %1204 = vperm.xlu0 %1203, %v1172
      %v1205 = vpop.permute.xlu0 %1204
      %1208 = vset.pattern.permute.xlu0 0
      %1209 = vperm.xlu0 %1208, %v1173
      %v1210 = vpop.permute.xlu0 %1209
      %1213 = vset.pattern.permute.xlu0 0
      %1214 = vperm.xlu0 %1213, %v1174
      %v1215 = vpop.permute.xlu0 %1214
      %1218 = vset.pattern.permute.xlu0 0
      %1219 = vperm.xlu0 %1218, %v1175
      %v1220 = vpop.permute.xlu0 %1219
      %1223 = vset.pattern.permute.xlu0 0
      %1224 = vperm.xlu0 %1223, %v1176
      %v1225 = vpop.permute.xlu0 %1224
      %1228 = vset.pattern.permute.xlu0 0
      %1229 = vperm.xlu0 %1228, %v1177
      %v1230 = vpop.permute.xlu0 %1229
      %1233 = vset.pattern.permute.xlu0 0
      %1234 = vperm.xlu0 %1233, %v1178
      %v1235 = vpop.permute.xlu0 %1234
      %1238 = vset.pattern.permute.xlu0 0
      %1239 = vperm.xlu0 %1238, %v1179
      %v1240 = vpop.permute.xlu0 %1239
      %1243 = vset.pattern.permute.xlu0 0
      %1244 = vperm.xlu0 %1243, %v1180
      %v1245 = vpop.permute.xlu0 %1244
      %1248 = vset.pattern.permute.xlu0 0
      %1249 = vperm.xlu0 %1248, %v1181
      %v1250 = vpop.permute.xlu0 %1249
      %1253 = vset.pattern.permute.xlu0 0
      %1254 = vperm.xlu0 %1253, %v1182
      %v1255 = vpop.permute.xlu0 %1254
      %1258 = vset.pattern.permute.xlu0 0
      %1259 = vperm.xlu0 %1258, %v1183
      %v1260 = vpop.permute.xlu0 %1259
      %1263 = vset.pattern.permute.xlu0 0
      %1264 = vperm.xlu0 %1263, %v1184
      %v1265 = vpop.permute.xlu0 %1264
      %1268 = vset.pattern.permute.xlu0 0
      %1269 = vperm.xlu0 %1268, %v1185
      %v1270 = vpop.permute.xlu0 %1269
      %1272 = vxpose.xlu0.c.b16.start [1/8] %v1190, 128
      %1273 = vxpose.xlu0.c.b16.cont [2/8] %v1191, 128
      %1274 = vxpose.xlu0.c.b16.cont [3/8] 0, 128
      %1275 = vxpose.xlu0.c.b16.cont [4/8] 0, 128
      %1276 = vxpose.xlu0.c.b16.cont [5/8] 0, 128
      %1277 = vxpose.xlu0.c.b16.cont [6/8] 0, 128
      %1278 = vxpose.xlu0.c.b16.cont [7/8] 0, 128
      %1279 = vxpose.xlu0.c.b16.end [8/8] 0, 128
      %v1280 = vpop.trf.xlu0
      %v1281 = vpop.trf.xlu0
      %v1282 = vpop.trf.xlu0
      %v1283 = vpop.trf.xlu0
      %v1284 = vpop.trf.xlu0
      %v1285 = vpop.trf.xlu0
      %v1286 = vpop.trf.xlu0
      %v1287 = vpop.trf.xlu0
      %v1289 = vsel %vm663, %v1280, 0
      %v1292 = vsel %vm663, %v1281, 0
      %v1295 = vsel %vm663, %v1282, 0
      %v1298 = vsel %vm663, %v1283, 0
      %v1301 = vsel %vm663, %v1284, 0
      %v1304 = vsel %vm663, %v1285, 0
      %v1307 = vsel %vm663, %v1286, 0
      %v1310 = vsel %vm663, %v1287, 0
      %1312 = vmatpush.bf16.msra.mxu0 0
      %1313 = vmatpush.bf16.msra.mxu0 0
      %1314 = vmatpush.bf16.msra.mxu0 0
      %1315 = vmatpush.bf16.msra.mxu0 0
      %1316 = vmatpush.bf16.msra.mxu0 0
      %1317 = vmatpush.bf16.msra.mxu0 0
      %1318 = vmatpush.bf16.msra.mxu0 %v660
      %1319 = vmatpush.bf16.msra.mxu0 %v659
      %1320 = vmatmul.bf16.gmra.mxu0 %v1289
      %v1321 = vpop.f32.mrf.mxu0
      %v1322 = vadd.f32 %v1195, %v1321
      %v1323 = vpop.f32.mrf.mxu0
      %v1324 = vadd.f32 %v1200, %v1323
      %1325 = vmatmul.bf16.gmra.mxu0 %v1292
      %v1326 = vpop.f32.mrf.mxu0
      %v1327 = vadd.f32 %v1205, %v1326
      %v1328 = vpop.f32.mrf.mxu0
      %v1329 = vadd.f32 %v1210, %v1328
      %1330 = vmatmul.bf16.gmra.mxu0 %v1295
      %v1331 = vpop.f32.mrf.mxu0
      %v1332 = vadd.f32 %v1215, %v1331
      %v1333 = vpop.f32.mrf.mxu0
      %v1334 = vadd.f32 %v1220, %v1333
      %1335 = vmatmul.bf16.gmra.mxu0 %v1298
      %v1336 = vpop.f32.mrf.mxu0
      %v1337 = vadd.f32 %v1225, %v1336
      %v1338 = vpop.f32.mrf.mxu0
      %v1339 = vadd.f32 %v1230, %v1338
      %1340 = vmatmul.bf16.gmra.mxu0 %v1301
      %v1341 = vpop.f32.mrf.mxu0
      %v1342 = vadd.f32 %v1235, %v1341
      %v1343 = vpop.f32.mrf.mxu0
      %v1344 = vadd.f32 %v1240, %v1343
      %1345 = vmatmul.bf16.gmra.mxu0 %v1304
      %v1346 = vpop.f32.mrf.mxu0
      %v1347 = vadd.f32 %v1245, %v1346
      %v1348 = vpop.f32.mrf.mxu0
      %v1349 = vadd.f32 %v1250, %v1348
      %1350 = vmatmul.bf16.gmra.mxu0 %v1307
      %v1351 = vpop.f32.mrf.mxu0
      %v1352 = vadd.f32 %v1255, %v1351
      %v1353 = vpop.f32.mrf.mxu0
      %v1354 = vadd.f32 %v1260, %v1353
      %1355 = vmatmul.bf16.gmra.mxu0 %v1310
      %v1356 = vpop.f32.mrf.mxu0
      %v1357 = vadd.f32 %v1265, %v1356
      %v1358 = vpop.f32.mrf.mxu0
      %v1359 = vadd.f32 %v1270, %v1358
      %1360 = vdwg.mxu0
      %v1361 = vmax.f32 %v1322, 0.0
      %v1362 = vmax.f32 %v1324, 0.0
      %v1363 = vmax.f32 %v1327, 0.0
      %v1364 = vmax.f32 %v1329, 0.0
      %v1365 = vmax.f32 %v1332, 0.0
      %v1366 = vmax.f32 %v1334, 0.0
      %v1367 = vmax.f32 %v1337, 0.0
      %v1368 = vmax.f32 %v1339, 0.0
      %v1369 = vmax.f32 %v1342, 0.0
      %v1370 = vmax.f32 %v1344, 0.0
      %v1371 = vmax.f32 %v1347, 0.0
      %v1372 = vmax.f32 %v1349, 0.0
      %v1373 = vmax.f32 %v1352, 0.0
      %v1374 = vmax.f32 %v1354, 0.0
      %v1375 = vmax.f32 %v1357, 0.0
      %v1376 = vmax.f32 %v1359, 0.0
      %v1377 = vpack.c.bf16 %v1362, %v1361
      %v1378 = vpack.c.bf16 %v1364, %v1363
      %v1379 = vpack.c.bf16 %v1366, %v1365
      %v1380 = vpack.c.bf16 %v1368, %v1367
      %v1381 = vpack.c.bf16 %v1370, %v1369
      %v1382 = vpack.c.bf16 %v1372, %v1371
      %v1383 = vpack.c.bf16 %v1374, %v1373
      %v1384 = vpack.c.bf16 %v1376, %v1375
      %1385 = vmatpush.bf16.xpose.msra.mxu0 %v800
      %1386 = vmatpush.bf16.xpose.msra.mxu0 %v799
      %1387 = vmatpush.bf16.xpose.msra.mxu0 %v798
      %1388 = vmatpush.bf16.xpose.msra.mxu0 %v797
      %1389 = vmatpush.bf16.xpose.msra.mxu0 %v796
      %1390 = vmatpush.bf16.xpose.msra.mxu0 %v795
      %1391 = vmatpush.bf16.xpose.msra.mxu0 %v794
      %1392 = vmatpush.bf16.xpose.msra.mxu0 %v793
      %1393 = vmatmul.bf16.gmra.mxu0 %v1377
      %v1394 = vpop.f32.mrf.mxu0
      %v1395 = vadd.f32 0.0, %v1394
      %v1396 = vpop.f32.mrf.mxu0
      %v1397 = vadd.f32 0.0, %v1396
      %1398 = vmatmul.bf16.gmra.mxu0 %v1378
      %v1399 = vpop.f32.mrf.mxu0
      %v1400 = vadd.f32 0.0, %v1399
      %v1401 = vpop.f32.mrf.mxu0
      %v1402 = vadd.f32 0.0, %v1401
      %1403 = vmatmul.bf16.gmra.mxu0 %v1379
      %v1404 = vpop.f32.mrf.mxu0
      %v1405 = vadd.f32 0.0, %v1404
      %v1406 = vpop.f32.mrf.mxu0
      %v1407 = vadd.f32 0.0, %v1406
      %1408 = vmatmul.bf16.gmra.mxu0 %v1380
      %v1409 = vpop.f32.mrf.mxu0
      %v1410 = vadd.f32 0.0, %v1409
      %v1411 = vpop.f32.mrf.mxu0
      %v1412 = vadd.f32 0.0, %v1411
      %1413 = vmatmul.bf16.gmra.mxu0 %v1381
      %v1414 = vpop.f32.mrf.mxu0
      %v1415 = vadd.f32 0.0, %v1414
      %v1416 = vpop.f32.mrf.mxu0
      %v1417 = vadd.f32 0.0, %v1416
      %1418 = vmatmul.bf16.gmra.mxu0 %v1382
      %v1419 = vpop.f32.mrf.mxu0
      %v1420 = vadd.f32 0.0, %v1419
      %v1421 = vpop.f32.mrf.mxu0
      %v1422 = vadd.f32 0.0, %v1421
      %1423 = vmatmul.bf16.gmra.mxu0 %v1383
      %v1424 = vpop.f32.mrf.mxu0
      %v1425 = vadd.f32 0.0, %v1424
      %v1426 = vpop.f32.mrf.mxu0
      %v1427 = vadd.f32 0.0, %v1426
      %1428 = vmatmul.bf16.gmra.mxu0 %v1384
      %v1429 = vpop.f32.mrf.mxu0
      %v1430 = vadd.f32 0.0, %v1429
      %v1431 = vpop.f32.mrf.mxu0
      %v1432 = vadd.f32 0.0, %v1431
      %1433 = vdwg.mxu0
      %v1434 = vpack.c.bf16 %v1187, %v1187
      %v1435 = vpack.c.bf16 %v1397, %v1395
      %v1436 = vpack.c.bf16 %v1402, %v1400
      %v1437 = vpack.c.bf16 %v1407, %v1405
      %v1438 = vpack.c.bf16 %v1412, %v1410
      %v1439 = vpack.c.bf16 %v1417, %v1415
      %v1440 = vpack.c.bf16 %v1422, %v1420
      %v1441 = vpack.c.bf16 %v1427, %v1425
      %v1442 = vpack.c.bf16 %v1432, %v1430
      %1444 = vset.pattern.permute.xlu0 0
      %1445 = vperm.xlu0 %1444, %v1189
      %v1446 = vpop.permute.xlu0 %1445
      %1448 = vmatpush.bf16.msra.mxu0 %v1442
      %1449 = vmatpush.bf16.msra.mxu0 %v1441
      %1450 = vmatpush.bf16.msra.mxu0 %v1440
      %1451 = vmatpush.bf16.msra.mxu0 %v1439
      %1452 = vmatpush.bf16.msra.mxu0 %v1438
      %1453 = vmatpush.bf16.msra.mxu0 %v1437
      %1454 = vmatpush.bf16.msra.mxu0 %v1436
      %1455 = vmatpush.bf16.msra.mxu0 %v1435
      %1456 = vmatmul.bf16.gmra.mxu0 %v1434
      %v1457 = vpop.f32.mrf.mxu0
      %v1458 = vadd.f32 %v1446, %v1457
      %v1459 = vpop.f32.mrf.mxu0
      %1460 = vdwg.mxu0
      %v1461 = vrot.slane %v1458, 4
      %v1462 = vmax.f32 %v1458, %v1461
      %v1463 = vrot.slane %v1462, 2
      %v1464 = vmax.f32 %v1462, %v1463
      %v1465 = vrot.slane %v1464, 1
      %v1466 = vmax.f32 %v1464, %v1465
      %v1467 = vsub.f32 %v1458, %v1466
      %v1468 = vmul.f32 %v1467, 1.442695
      %v1469 = vpow.pop %v1468
      %v1470 = vrot.slane %v1469, 4
      %v1471 = vadd.f32 %v1469, %v1470
      %v1472 = vrot.slane %v1471, 2
      %v1473 = vadd.f32 %v1471, %v1472
      %v1474 = vrot.slane %v1473, 1
      %v1475 = vadd.f32 %v1473, %v1474
      %v1476 = vlog2.pop %v1475
      %v1477 = vmul.f32 %v1476, 0.6931472
      %v1478 = vsub.f32 %v1467, %v1477
      %v1479 = vrcp.pop %v1475
      %v1480 = vmul.f32 %v1469, %v1479
      %v1481 = vsub.f32 %v1480, %v530
      %v1482 = vmul.f32 %v1481, %v907
      %v1483 = vpack.c.bf16 %v1482, %v1482
      %1484 = vmatpush.bf16.msra.mxu0 %v800
      %1485 = vmatpush.bf16.msra.mxu0 %v799
      %1486 = vmatpush.bf16.msra.mxu0 %v798
      %1487 = vmatpush.bf16.msra.mxu0 %v797
      %1488 = vmatpush.bf16.msra.mxu0 %v796
      %1489 = vmatpush.bf16.msra.mxu0 %v795
      %1490 = vmatpush.bf16.msra.mxu0 %v794
      %1491 = vmatpush.bf16.msra.mxu0 %v793
      %1492 = vmatmul.bf16.gmra.mxu0 %v1483
      %v1493 = vpop.f32.mrf.mxu0
      %v1494 = vadd.f32 0.0, %v1493
      %v1495 = vpop.f32.mrf.mxu0
      %1496 = vdwg.mxu0
      %v1497 = vpack.c.bf16 %v1494, %v1494
      %1498 = vmatpush.bf16.xpose.msra.mxu0 %v1384
      %1499 = vmatpush.bf16.xpose.msra.mxu0 %v1383
      %1500 = vmatpush.bf16.xpose.msra.mxu0 %v1382
      %1501 = vmatpush.bf16.xpose.msra.mxu0 %v1381
      %1502 = vmatpush.bf16.xpose.msra.mxu0 %v1380
      %1503 = vmatpush.bf16.xpose.msra.mxu0 %v1379
      %1504 = vmatpush.bf16.xpose.msra.mxu0 %v1378
      %1505 = vmatpush.bf16.xpose.msra.mxu0 %v1377
      %1506 = vmatmul.bf16.gmra.mxu0 %v1497
      %v1507 = vpop.f32.mrf.mxu0
      %v1508 = vadd.f32 0.0, %v1507
      %v1509 = vpop.f32.mrf.mxu0
      %1510 = vdwg.mxu0
      %1511 = vadd.xlane.f32.xlu0 %v1482
      %v1512 = vpop.xlane.xlu0 %1511
      %1513 = vxpose.xlu0.c.b16.start [1/8] %v1434, 128
      %1514 = vxpose.xlu0.c.b16.cont [2/8] 0, 128
      %1515 = vxpose.xlu0.c.b16.cont [3/8] 0, 128
      %1516 = vxpose.xlu0.c.b16.cont [4/8] 0, 128
      %1517 = vxpose.xlu0.c.b16.cont [5/8] 0, 128
      %1518 = vxpose.xlu0.c.b16.cont [6/8] 0, 128
      %1519 = vxpose.xlu0.c.b16.cont [7/8] 0, 128
      %1520 = vxpose.xlu0.c.b16.end [8/8] 0, 128
      %v1521 = vpop.trf.xlu0
      %v1522 = vpop.trf.xlu0
      %v1523 = vpop.trf.xlu0
      %v1524 = vpop.trf.xlu0
      %v1525 = vpop.trf.xlu0
      %v1526 = vpop.trf.xlu0
      %v1527 = vpop.trf.xlu0
      %v1528 = vpop.trf.xlu0
      %v1530 = vsel %vm956, %v1521, 0
      %v1533 = vsel %vm956, %v1522, 0
      %v1536 = vsel %vm956, %v1523, 0
      %v1539 = vsel %vm956, %v1524, 0
      %v1542 = vsel %vm956, %v1525, 0
      %v1545 = vsel %vm956, %v1526, 0
      %v1548 = vsel %vm956, %v1527, 0
      %v1551 = vsel %vm956, %v1528, 0
      %v1554 = vsel %vm981, %v1497, 0
      %1556 = vmatpush.bf16.msra.mxu0 0
      %1557 = vmatpush.bf16.msra.mxu0 0
      %1558 = vmatpush.bf16.msra.mxu0 0
      %1559 = vmatpush.bf16.msra.mxu0 0
      %1560 = vmatpush.bf16.msra.mxu0 0
      %1561 = vmatpush.bf16.msra.mxu0 0
      %1562 = vmatpush.bf16.msra.mxu0 0
      %1563 = vmatpush.bf16.msra.mxu0 %v1554
      %1564 = vmatmul.bf16.gmra.mxu0 %v1530
      %v1565 = vpop.f32.mrf.mxu0
      %v1566 = vadd.f32 0.0, %v1565
      %v1567 = vpop.f32.mrf.mxu0
      %v1568 = vadd.f32 0.0, %v1567
      %1569 = vmatmul.bf16.gmra.mxu0 %v1533
      %v1570 = vpop.f32.mrf.mxu0
      %v1571 = vadd.f32 0.0, %v1570
      %v1572 = vpop.f32.mrf.mxu0
      %v1573 = vadd.f32 0.0, %v1572
      %1574 = vmatmul.bf16.gmra.mxu0 %v1536
      %v1575 = vpop.f32.mrf.mxu0
      %v1576 = vadd.f32 0.0, %v1575
      %v1577 = vpop.f32.mrf.mxu0
      %v1578 = vadd.f32 0.0, %v1577
      %1579 = vmatmul.bf16.gmra.mxu0 %v1539
      %v1580 = vpop.f32.mrf.mxu0
      %v1581 = vadd.f32 0.0, %v1580
      %v1582 = vpop.f32.mrf.mxu0
      %v1583 = vadd.f32 0.0, %v1582
      %1584 = vmatmul.bf16.gmra.mxu0 %v1542
      %v1585 = vpop.f32.mrf.mxu0
      %v1586 = vadd.f32 0.0, %v1585
      %v1587 = vpop.f32.mrf.mxu0
      %v1588 = vadd.f32 0.0, %v1587
      %1589 = vmatmul.bf16.gmra.mxu0 %v1545
      %v1590 = vpop.f32.mrf.mxu0
      %v1591 = vadd.f32 0.0, %v1590
      %v1592 = vpop.f32.mrf.mxu0
      %v1593 = vadd.f32 0.0, %v1592
      %1594 = vmatmul.bf16.gmra.mxu0 %v1548
      %v1595 = vpop.f32.mrf.mxu0
      %v1596 = vadd.f32 0.0, %v1595
      %v1597 = vpop.f32.mrf.mxu0
      %v1598 = vadd.f32 0.0, %v1597
      %1599 = vmatmul.bf16.gmra.mxu0 %v1551
      %v1600 = vpop.f32.mrf.mxu0
      %v1601 = vadd.f32 0.0, %v1600
      %v1602 = vpop.f32.mrf.mxu0
      %v1603 = vadd.f32 0.0, %v1602
      %1604 = vdwg.mxu0
      %vm1605 = vcmp.gt.f32.partialorder %v1322, 0.0
      %vm1606 = vcmp.gt.f32.partialorder %v1324, 0.0
      %vm1607 = vcmp.gt.f32.partialorder %v1327, 0.0
      %vm1608 = vcmp.gt.f32.partialorder %v1329, 0.0
      %vm1609 = vcmp.gt.f32.partialorder %v1332, 0.0
      %vm1610 = vcmp.gt.f32.partialorder %v1334, 0.0
      %vm1611 = vcmp.gt.f32.partialorder %v1337, 0.0
      %vm1612 = vcmp.gt.f32.partialorder %v1339, 0.0
      %vm1613 = vcmp.gt.f32.partialorder %v1342, 0.0
      %vm1614 = vcmp.gt.f32.partialorder %v1344, 0.0
      %vm1615 = vcmp.gt.f32.partialorder %v1347, 0.0
      %vm1616 = vcmp.gt.f32.partialorder %v1349, 0.0
      %vm1617 = vcmp.gt.f32.partialorder %v1352, 0.0
      %vm1618 = vcmp.gt.f32.partialorder %v1354, 0.0
      %vm1619 = vcmp.gt.f32.partialorder %v1357, 0.0
      %vm1620 = vcmp.gt.f32.partialorder %v1359, 0.0
      %v1621 = vsel %vm1605, %v1566, 0.0
      %v1622 = vsel %vm1606, %v1568, 0.0
      %v1623 = vsel %vm1607, %v1571, 0.0
      %v1624 = vsel %vm1608, %v1573, 0.0
      %v1625 = vsel %vm1609, %v1576, 0.0
      %v1626 = vsel %vm1610, %v1578, 0.0
      %v1627 = vsel %vm1611, %v1581, 0.0
      %v1628 = vsel %vm1612, %v1583, 0.0
      %v1629 = vsel %vm1613, %v1586, 0.0
      %v1630 = vsel %vm1614, %v1588, 0.0
      %v1631 = vsel %vm1615, %v1591, 0.0
      %v1632 = vsel %vm1616, %v1593, 0.0
      %v1633 = vsel %vm1617, %v1596, 0.0
      %v1634 = vsel %vm1618, %v1598, 0.0
      %v1635 = vsel %vm1619, %v1601, 0.0
      %v1636 = vsel %vm1620, %v1603, 0.0
      %v1637 = vpack.c.bf16 %v1622, %v1621
      %v1638 = vpack.c.bf16 %v1624, %v1623
      %v1639 = vpack.c.bf16 %v1626, %v1625
      %v1640 = vpack.c.bf16 %v1628, %v1627
      %v1641 = vpack.c.bf16 %v1630, %v1629
      %v1642 = vpack.c.bf16 %v1632, %v1631
      %v1643 = vpack.c.bf16 %v1634, %v1633
      %v1644 = vpack.c.bf16 %v1636, %v1635
      %1645 = vmatpush.bf16.xpose.msra.mxu0 %v1644
      %1646 = vmatpush.bf16.xpose.msra.mxu0 %v1643
      %1647 = vmatpush.bf16.xpose.msra.mxu0 %v1642
      %1648 = vmatpush.bf16.xpose.msra.mxu0 %v1641
      %1649 = vmatpush.bf16.xpose.msra.mxu0 %v1640
      %1650 = vmatpush.bf16.xpose.msra.mxu0 %v1639
      %1651 = vmatpush.bf16.xpose.msra.mxu0 %v1638
      %1652 = vmatpush.bf16.xpose.msra.mxu0 %v1637
      %1653 = vmatmul.bf16.gmra.mxu0 %v659
      %v1654 = vpop.f32.mrf.mxu0
      %v1655 = vadd.f32 0.0, %v1654
      %v1656 = vpop.f32.mrf.mxu0
      %v1657 = vadd.f32 0.0, %v1656
      %1658 = vmatmul.bf16.gmra.mxu0 %v660
      %v1659 = vpop.f32.mrf.mxu0
      %v1660 = vadd.f32 0.0, %v1659
      %v1661 = vpop.f32.mrf.mxu0
      %v1662 = vadd.f32 0.0, %v1661
      %1663 = vdwg.mxu0
      %1664 = vadd.xlane.f32.xlu0 %v1621
      %v1665 = vpop.xlane.xlu0 %1664
      %1666 = vadd.xlane.f32.xlu0 %v1622
      %v1667 = vpop.xlane.xlu0 %1666
      %1668 = vadd.xlane.f32.xlu0 %v1623
      %v1669 = vpop.xlane.xlu0 %1668
      %1670 = vadd.xlane.f32.xlu0 %v1624
      %v1671 = vpop.xlane.xlu0 %1670
      %1672 = vadd.xlane.f32.xlu0 %v1625
      %v1673 = vpop.xlane.xlu0 %1672
      %1674 = vadd.xlane.f32.xlu0 %v1626
      %v1675 = vpop.xlane.xlu0 %1674
      %1676 = vadd.xlane.f32.xlu0 %v1627
      %v1677 = vpop.xlane.xlu0 %1676
      %1678 = vadd.xlane.f32.xlu0 %v1628
      %v1679 = vpop.xlane.xlu0 %1678
      %1680 = vadd.xlane.f32.xlu0 %v1629
      %v1681 = vpop.xlane.xlu0 %1680
      %1682 = vadd.xlane.f32.xlu0 %v1630
      %v1683 = vpop.xlane.xlu0 %1682
      %1684 = vadd.xlane.f32.xlu0 %v1631
      %v1685 = vpop.xlane.xlu0 %1684
      %1686 = vadd.xlane.f32.xlu0 %v1632
      %v1687 = vpop.xlane.xlu0 %1686
      %1688 = vadd.xlane.f32.xlu0 %v1633
      %v1689 = vpop.xlane.xlu0 %1688
      %1690 = vadd.xlane.f32.xlu0 %v1634
      %v1691 = vpop.xlane.xlu0 %1690
      %1692 = vadd.xlane.f32.xlu0 %v1635
      %v1693 = vpop.xlane.xlu0 %1692
      %1694 = vadd.xlane.f32.xlu0 %v1636
      %v1695 = vpop.xlane.xlu0 %1694
      %v1696 = vmul.f32 %v530, %v1478
      %v1697 = vrot.slane %v1696, 4
      %v1698 = vadd.f32 %v1696, %v1697
      %v1699 = vrot.slane %v1698, 2
      %v1700 = vadd.f32 %v1698, %v1699
      %v1701 = vrot.slane %v1700, 1
      %v1702 = vadd.f32 %v1700, %v1701
      %v1703 = vmul.f32 %v529, %v1702
      %v1704 = vsel %vm1133, %v1703, 0.0
      %1705 = vadd.xlane.f32.xlu0 %v1704
      %v1706 = vpop.xlane.xlu0 %1705
      %v1707 = vrot.slane %v1706, 4
      %v1708 = vadd.f32 %v1706, %v1707
      %v1709 = vrot.slane %v1708, 2
      %v1710 = vadd.f32 %v1708, %v1709
      %v1711 = vrot.slane %v1710, 1
      %v1712 = vadd.f32 %v1710, %v1711
      %s1713 = vtos %v1712
      %v1714 = vstv %s1713
      %v1715 = vsub.f32 0.0, %v1714
      %v1716 = vmul.f32 %v1655, 0.01
      %v1717 = vmul.f32 %v1657, 0.01
      %v1718 = vmul.f32 %v1660, 0.01
      %v1719 = vmul.f32 %v1662, 0.01
      %v1720 = vsub.f32 %v1150, %v1716
      %v1721 = vsub.f32 %v1151, %v1717
      %v1722 = vsub.f32 %v1152, %v1718
      %v1723 = vsub.f32 %v1153, %v1719
      %v1724 = vmul.f32 %v1665, 0.01
      %v1725 = vmul.f32 %v1667, 0.01
      %v1726 = vmul.f32 %v1669, 0.01
      %v1727 = vmul.f32 %v1671, 0.01
      %v1728 = vmul.f32 %v1673, 0.01
      %v1729 = vmul.f32 %v1675, 0.01
      %v1730 = vmul.f32 %v1677, 0.01
      %v1731 = vmul.f32 %v1679, 0.01
      %v1732 = vmul.f32 %v1681, 0.01
      %v1733 = vmul.f32 %v1683, 0.01
      %v1734 = vmul.f32 %v1685, 0.01
      %v1735 = vmul.f32 %v1687, 0.01
      %v1736 = vmul.f32 %v1689, 0.01
      %v1737 = vmul.f32 %v1691, 0.01
      %v1738 = vmul.f32 %v1693, 0.01
      %v1739 = vmul.f32 %v1695, 0.01
      %v1740 = vsub.f32 %v1170, %v1724
      %v1741 = vsub.f32 %v1171, %v1725
      %v1742 = vsub.f32 %v1172, %v1726
      %v1743 = vsub.f32 %v1173, %v1727
      %v1744 = vsub.f32 %v1174, %v1728
      %v1745 = vsub.f32 %v1175, %v1729
      %v1746 = vsub.f32 %v1176, %v1730
      %v1747 = vsub.f32 %v1177, %v1731
      %v1748 = vsub.f32 %v1178, %v1732
      %v1749 = vsub.f32 %v1179, %v1733
      %v1750 = vsub.f32 %v1180, %v1734
      %v1751 = vsub.f32 %v1181, %v1735
      %v1752 = vsub.f32 %v1182, %v1736
      %v1753 = vsub.f32 %v1183, %v1737
      %v1754 = vsub.f32 %v1184, %v1738
      %v1755 = vsub.f32 %v1185, %v1739
      %v1756 = vmul.f32 %v1508, 0.01
      %v1757 = vsub.f32 %v1187, %v1756
      %v1758 = vmul.f32 %v1512, 0.01
      %v1759 = vsub.f32 %v1189, %v1758
      %v1760 = vpack.c.bf16 %v1721, %v1720
      %v1761 = vpack.c.bf16 %v1723, %v1722
      %1763 = vset.pattern.permute.xlu0 0
      %1764 = vperm.xlu0 %1763, %v1740
      %v1765 = vpop.permute.xlu0 %1764
      %1768 = vset.pattern.permute.xlu0 0
      %1769 = vperm.xlu0 %1768, %v1741
      %v1770 = vpop.permute.xlu0 %1769
      %1773 = vset.pattern.permute.xlu0 0
      %1774 = vperm.xlu0 %1773, %v1742
      %v1775 = vpop.permute.xlu0 %1774
      %1778 = vset.pattern.permute.xlu0 0
      %1779 = vperm.xlu0 %1778, %v1743
      %v1780 = vpop.permute.xlu0 %1779
      %1783 = vset.pattern.permute.xlu0 0
      %1784 = vperm.xlu0 %1783, %v1744
      %v1785 = vpop.permute.xlu0 %1784
      %1788 = vset.pattern.permute.xlu0 0
      %1789 = vperm.xlu0 %1788, %v1745
      %v1790 = vpop.permute.xlu0 %1789
      %1793 = vset.pattern.permute.xlu0 0
      %1794 = vperm.xlu0 %1793, %v1746
      %v1795 = vpop.permute.xlu0 %1794
      %1798 = vset.pattern.permute.xlu0 0
      %1799 = vperm.xlu0 %1798, %v1747
      %v1800 = vpop.permute.xlu0 %1799
      %1803 = vset.pattern.permute.xlu0 0
      %1804 = vperm.xlu0 %1803, %v1748
      %v1805 = vpop.permute.xlu0 %1804
      %1808 = vset.pattern.permute.xlu0 0
      %1809 = vperm.xlu0 %1808, %v1749
      %v1810 = vpop.permute.xlu0 %1809
      %1813 = vset.pattern.permute.xlu0 0
      %1814 = vperm.xlu0 %1813, %v1750
      %v1815 = vpop.permute.xlu0 %1814
      %1818 = vset.pattern.permute.xlu0 0
      %1819 = vperm.xlu0 %1818, %v1751
      %v1820 = vpop.permute.xlu0 %1819
      %1823 = vset.pattern.permute.xlu0 0
      %1824 = vperm.xlu0 %1823, %v1752
      %v1825 = vpop.permute.xlu0 %1824
      %1828 = vset.pattern.permute.xlu0 0
      %1829 = vperm.xlu0 %1828, %v1753
      %v1830 = vpop.permute.xlu0 %1829
      %1833 = vset.pattern.permute.xlu0 0
      %1834 = vperm.xlu0 %1833, %v1754
      %v1835 = vpop.permute.xlu0 %1834
      %1838 = vset.pattern.permute.xlu0 0
      %1839 = vperm.xlu0 %1838, %v1755
      %v1840 = vpop.permute.xlu0 %1839
      %1842 = vxpose.xlu0.c.b16.start [1/8] %v1760, 128
      %1843 = vxpose.xlu0.c.b16.cont [2/8] %v1761, 128
      %1844 = vxpose.xlu0.c.b16.cont [3/8] 0, 128
      %1845 = vxpose.xlu0.c.b16.cont [4/8] 0, 128
      %1846 = vxpose.xlu0.c.b16.cont [5/8] 0, 128
      %1847 = vxpose.xlu0.c.b16.cont [6/8] 0, 128
      %1848 = vxpose.xlu0.c.b16.cont [7/8] 0, 128
      %1849 = vxpose.xlu0.c.b16.end [8/8] 0, 128
      %v1850 = vpop.trf.xlu0
      %v1851 = vpop.trf.xlu0
      %v1852 = vpop.trf.xlu0
      %v1853 = vpop.trf.xlu0
      %v1854 = vpop.trf.xlu0
      %v1855 = vpop.trf.xlu0
      %v1856 = vpop.trf.xlu0
      %v1857 = vpop.trf.xlu0
      %v1859 = vsel %vm663, %v1850, 0
      %v1862 = vsel %vm663, %v1851, 0
      %v1865 = vsel %vm663, %v1852, 0
      %v1868 = vsel %vm663, %v1853, 0
      %v1871 = vsel %vm663, %v1854, 0
      %v1874 = vsel %vm663, %v1855, 0
      %v1877 = vsel %vm663, %v1856, 0
      %v1880 = vsel %vm663, %v1857, 0
      %1882 = vmatpush.bf16.msra.mxu0 0
      %1883 = vmatpush.bf16.msra.mxu0 0
      %1884 = vmatpush.bf16.msra.mxu0 0
      %1885 = vmatpush.bf16.msra.mxu0 0
      %1886 = vmatpush.bf16.msra.mxu0 0
      %1887 = vmatpush.bf16.msra.mxu0 0
      %1888 = vmatpush.bf16.msra.mxu0 %v660
      %1889 = vmatpush.bf16.msra.mxu0 %v659
      %1890 = vmatmul.bf16.gmra.mxu0 %v1859
      %v1891 = vpop.f32.mrf.mxu0
      %v1892 = vadd.f32 %v1765, %v1891
      %v1893 = vpop.f32.mrf.mxu0
      %v1894 = vadd.f32 %v1770, %v1893
      %1895 = vmatmul.bf16.gmra.mxu0 %v1862
      %v1896 = vpop.f32.mrf.mxu0
      %v1897 = vadd.f32 %v1775, %v1896
      %v1898 = vpop.f32.mrf.mxu0
      %v1899 = vadd.f32 %v1780, %v1898
      %1900 = vmatmul.bf16.gmra.mxu0 %v1865
      %v1901 = vpop.f32.mrf.mxu0
      %v1902 = vadd.f32 %v1785, %v1901
      %v1903 = vpop.f32.mrf.mxu0
      %v1904 = vadd.f32 %v1790, %v1903
      %1905 = vmatmul.bf16.gmra.mxu0 %v1868
      %v1906 = vpop.f32.mrf.mxu0
      %v1907 = vadd.f32 %v1795, %v1906
      %v1908 = vpop.f32.mrf.mxu0
      %v1909 = vadd.f32 %v1800, %v1908
      %1910 = vmatmul.bf16.gmra.mxu0 %v1871
      %v1911 = vpop.f32.mrf.mxu0
      %v1912 = vadd.f32 %v1805, %v1911
      %v1913 = vpop.f32.mrf.mxu0
      %v1914 = vadd.f32 %v1810, %v1913
      %1915 = vmatmul.bf16.gmra.mxu0 %v1874
      %v1916 = vpop.f32.mrf.mxu0
      %v1917 = vadd.f32 %v1815, %v1916
      %v1918 = vpop.f32.mrf.mxu0
      %v1919 = vadd.f32 %v1820, %v1918
      %1920 = vmatmul.bf16.gmra.mxu0 %v1877
      %v1921 = vpop.f32.mrf.mxu0
      %v1922 = vadd.f32 %v1825, %v1921
      %v1923 = vpop.f32.mrf.mxu0
      %v1924 = vadd.f32 %v1830, %v1923
      %1925 = vmatmul.bf16.gmra.mxu0 %v1880
      %v1926 = vpop.f32.mrf.mxu0
      %v1927 = vadd.f32 %v1835, %v1926
      %v1928 = vpop.f32.mrf.mxu0
      %v1929 = vadd.f32 %v1840, %v1928
      %1930 = vdwg.mxu0
      %v1931 = vmax.f32 %v1892, 0.0
      %v1932 = vmax.f32 %v1894, 0.0
      %v1933 = vmax.f32 %v1897, 0.0
      %v1934 = vmax.f32 %v1899, 0.0
      %v1935 = vmax.f32 %v1902, 0.0
      %v1936 = vmax.f32 %v1904, 0.0
      %v1937 = vmax.f32 %v1907, 0.0
      %v1938 = vmax.f32 %v1909, 0.0
      %v1939 = vmax.f32 %v1912, 0.0
      %v1940 = vmax.f32 %v1914, 0.0
      %v1941 = vmax.f32 %v1917, 0.0
      %v1942 = vmax.f32 %v1919, 0.0
      %v1943 = vmax.f32 %v1922, 0.0
      %v1944 = vmax.f32 %v1924, 0.0
      %v1945 = vmax.f32 %v1927, 0.0
      %v1946 = vmax.f32 %v1929, 0.0
      %v1947 = vpack.c.bf16 %v1932, %v1931
      %v1948 = vpack.c.bf16 %v1934, %v1933
      %v1949 = vpack.c.bf16 %v1936, %v1935
      %v1950 = vpack.c.bf16 %v1938, %v1937
      %v1951 = vpack.c.bf16 %v1940, %v1939
      %v1952 = vpack.c.bf16 %v1942, %v1941
      %v1953 = vpack.c.bf16 %v1944, %v1943
      %v1954 = vpack.c.bf16 %v1946, %v1945
      %1955 = vmatpush.bf16.xpose.msra.mxu0 %v800
      %1956 = vmatpush.bf16.xpose.msra.mxu0 %v799
      %1957 = vmatpush.bf16.xpose.msra.mxu0 %v798
      %1958 = vmatpush.bf16.xpose.msra.mxu0 %v797
      %1959 = vmatpush.bf16.xpose.msra.mxu0 %v796
      %1960 = vmatpush.bf16.xpose.msra.mxu0 %v795
      %1961 = vmatpush.bf16.xpose.msra.mxu0 %v794
      %1962 = vmatpush.bf16.xpose.msra.mxu0 %v793
      %1963 = vmatmul.bf16.gmra.mxu0 %v1947
      %v1964 = vpop.f32.mrf.mxu0
      %v1965 = vadd.f32 0.0, %v1964
      %v1966 = vpop.f32.mrf.mxu0
      %v1967 = vadd.f32 0.0, %v1966
      %1968 = vmatmul.bf16.gmra.mxu0 %v1948
      %v1969 = vpop.f32.mrf.mxu0
      %v1970 = vadd.f32 0.0, %v1969
      %v1971 = vpop.f32.mrf.mxu0
      %v1972 = vadd.f32 0.0, %v1971
      %1973 = vmatmul.bf16.gmra.mxu0 %v1949
      %v1974 = vpop.f32.mrf.mxu0
      %v1975 = vadd.f32 0.0, %v1974
      %v1976 = vpop.f32.mrf.mxu0
      %v1977 = vadd.f32 0.0, %v1976
      %1978 = vmatmul.bf16.gmra.mxu0 %v1950
      %v1979 = vpop.f32.mrf.mxu0
      %v1980 = vadd.f32 0.0, %v1979
      %v1981 = vpop.f32.mrf.mxu0
      %v1982 = vadd.f32 0.0, %v1981
      %1983 = vmatmul.bf16.gmra.mxu0 %v1951
      %v1984 = vpop.f32.mrf.mxu0
      %v1985 = vadd.f32 0.0, %v1984
      %v1986 = vpop.f32.mrf.mxu0
      %v1987 = vadd.f32 0.0, %v1986
      %1988 = vmatmul.bf16.gmra.mxu0 %v1952
      %v1989 = vpop.f32.mrf.mxu0
      %v1990 = vadd.f32 0.0, %v1989
      %v1991 = vpop.f32.mrf.mxu0
      %v1992 = vadd.f32 0.0, %v1991
      %1993 = vmatmul.bf16.gmra.mxu0 %v1953
      %v1994 = vpop.f32.mrf.mxu0
      %v1995 = vadd.f32 0.0, %v1994
      %v1996 = vpop.f32.mrf.mxu0
      %v1997 = vadd.f32 0.0, %v1996
      %1998 = vmatmul.bf16.gmra.mxu0 %v1954
      %v1999 = vpop.f32.mrf.mxu0
      %v2000 = vadd.f32 0.0, %v1999
      %v2001 = vpop.f32.mrf.mxu0
      %v2002 = vadd.f32 0.0, %v2001
      %2003 = vdwg.mxu0
      %v2004 = vpack.c.bf16 %v1757, %v1757
      %v2005 = vpack.c.bf16 %v1967, %v1965
      %v2006 = vpack.c.bf16 %v1972, %v1970
      %v2007 = vpack.c.bf16 %v1977, %v1975
      %v2008 = vpack.c.bf16 %v1982, %v1980
      %v2009 = vpack.c.bf16 %v1987, %v1985
      %v2010 = vpack.c.bf16 %v1992, %v1990
      %v2011 = vpack.c.bf16 %v1997, %v1995
      %v2012 = vpack.c.bf16 %v2002, %v2000
      %2014 = vset.pattern.permute.xlu0 0
      %2015 = vperm.xlu0 %2014, %v1759
      %v2016 = vpop.permute.xlu0 %2015
      %2018 = vmatpush.bf16.msra.mxu0 %v2012
      %2019 = vmatpush.bf16.msra.mxu0 %v2011
      %2020 = vmatpush.bf16.msra.mxu0 %v2010
      %2021 = vmatpush.bf16.msra.mxu0 %v2009
      %2022 = vmatpush.bf16.msra.mxu0 %v2008
      %2023 = vmatpush.bf16.msra.mxu0 %v2007
      %2024 = vmatpush.bf16.msra.mxu0 %v2006
      %2025 = vmatpush.bf16.msra.mxu0 %v2005
      %2026 = vmatmul.bf16.gmra.mxu0 %v2004
      %v2027 = vpop.f32.mrf.mxu0
      %v2028 = vadd.f32 %v2016, %v2027
      %v2029 = vpop.f32.mrf.mxu0
      %2030 = vdwg.mxu0
      %v2031 = vrot.slane %v2028, 4
      %v2032 = vmax.f32 %v2028, %v2031
      %v2033 = vrot.slane %v2032, 2
      %v2034 = vmax.f32 %v2032, %v2033
      %v2035 = vrot.slane %v2034, 1
      %v2036 = vmax.f32 %v2034, %v2035
      %v2037 = vsub.f32 %v2028, %v2036
      %v2038 = vmul.f32 %v2037, 1.442695
      %v2039 = vpow.pop %v2038
      %v2040 = vrot.slane %v2039, 4
      %v2041 = vadd.f32 %v2039, %v2040
      %v2042 = vrot.slane %v2041, 2
      %v2043 = vadd.f32 %v2041, %v2042
      %v2044 = vrot.slane %v2043, 1
      %v2045 = vadd.f32 %v2043, %v2044
      %v2046 = vlog2.pop %v2045
      %v2047 = vmul.f32 %v2046, 0.6931472
      %v2048 = vsub.f32 %v2037, %v2047
      %v2049 = vrcp.pop %v2045
      %v2050 = vmul.f32 %v2039, %v2049
      %v2051 = vsub.f32 %v2050, %v530
      %v2052 = vmul.f32 %v2051, %v907
      %v2053 = vpack.c.bf16 %v2052, %v2052
      %2054 = vmatpush.bf16.msra.mxu0 %v800
      %2055 = vmatpush.bf16.msra.mxu0 %v799
      %2056 = vmatpush.bf16.msra.mxu0 %v798
      %2057 = vmatpush.bf16.msra.mxu0 %v797
      %2058 = vmatpush.bf16.msra.mxu0 %v796
      %2059 = vmatpush.bf16.msra.mxu0 %v795
      %2060 = vmatpush.bf16.msra.mxu0 %v794
      %2061 = vmatpush.bf16.msra.mxu0 %v793
      %2062 = vmatmul.bf16.gmra.mxu0 %v2053
      %v2063 = vpop.f32.mrf.mxu0
      %v2064 = vadd.f32 0.0, %v2063
      %v2065 = vpop.f32.mrf.mxu0
      %2066 = vdwg.mxu0
      %v2067 = vpack.c.bf16 %v2064, %v2064
      %2068 = vmatpush.bf16.xpose.msra.mxu0 %v1954
      %2069 = vmatpush.bf16.xpose.msra.mxu0 %v1953
      %2070 = vmatpush.bf16.xpose.msra.mxu0 %v1952
      %2071 = vmatpush.bf16.xpose.msra.mxu0 %v1951
      %2072 = vmatpush.bf16.xpose.msra.mxu0 %v1950
      %2073 = vmatpush.bf16.xpose.msra.mxu0 %v1949
      %2074 = vmatpush.bf16.xpose.msra.mxu0 %v1948
      %2075 = vmatpush.bf16.xpose.msra.mxu0 %v1947
      %2076 = vmatmul.bf16.gmra.mxu0 %v2067
      %v2077 = vpop.f32.mrf.mxu0
      %v2078 = vadd.f32 0.0, %v2077
      %v2079 = vpop.f32.mrf.mxu0
      %2080 = vdwg.mxu0
      %2081 = vadd.xlane.f32.xlu0 %v2052
      %v2082 = vpop.xlane.xlu0 %2081
      %2083 = vxpose.xlu0.c.b16.start [1/8] %v2004, 128
      %2084 = vxpose.xlu0.c.b16.cont [2/8] 0, 128
      %2085 = vxpose.xlu0.c.b16.cont [3/8] 0, 128
      %2086 = vxpose.xlu0.c.b16.cont [4/8] 0, 128
      %2087 = vxpose.xlu0.c.b16.cont [5/8] 0, 128
      %2088 = vxpose.xlu0.c.b16.cont [6/8] 0, 128
      %2089 = vxpose.xlu0.c.b16.cont [7/8] 0, 128
      %2090 = vxpose.xlu0.c.b16.end [8/8] 0, 128
      %v2091 = vpop.trf.xlu0
      %v2092 = vpop.trf.xlu0
      %v2093 = vpop.trf.xlu0
      %v2094 = vpop.trf.xlu0
      %v2095 = vpop.trf.xlu0
      %v2096 = vpop.trf.xlu0
      %v2097 = vpop.trf.xlu0
      %v2098 = vpop.trf.xlu0
      %v2100 = vsel %vm956, %v2091, 0
      %v2103 = vsel %vm956, %v2092, 0
      %v2106 = vsel %vm956, %v2093, 0
      %v2109 = vsel %vm956, %v2094, 0
      %v2112 = vsel %vm956, %v2095, 0
      %v2115 = vsel %vm956, %v2096, 0
      %v2118 = vsel %vm956, %v2097, 0
      %v2121 = vsel %vm956, %v2098, 0
      %v2124 = vsel %vm981, %v2067, 0
      %2126 = vmatpush.bf16.msra.mxu0 0
      %2127 = vmatpush.bf16.msra.mxu0 0
      %2128 = vmatpush.bf16.msra.mxu0 0
      %2129 = vmatpush.bf16.msra.mxu0 0
      %2130 = vmatpush.bf16.msra.mxu0 0
      %2131 = vmatpush.bf16.msra.mxu0 0
      %2132 = vmatpush.bf16.msra.mxu0 0
      %2133 = vmatpush.bf16.msra.mxu0 %v2124
      %2134 = vmatmul.bf16.gmra.mxu0 %v2100
      %v2135 = vpop.f32.mrf.mxu0
      %v2136 = vadd.f32 0.0, %v2135
      %v2137 = vpop.f32.mrf.mxu0
      %v2138 = vadd.f32 0.0, %v2137
      %2139 = vmatmul.bf16.gmra.mxu0 %v2103
      %v2140 = vpop.f32.mrf.mxu0
      %v2141 = vadd.f32 0.0, %v2140
      %v2142 = vpop.f32.mrf.mxu0
      %v2143 = vadd.f32 0.0, %v2142
      %2144 = vmatmul.bf16.gmra.mxu0 %v2106
      %v2145 = vpop.f32.mrf.mxu0
      %v2146 = vadd.f32 0.0, %v2145
      %v2147 = vpop.f32.mrf.mxu0
      %v2148 = vadd.f32 0.0, %v2147
      %2149 = vmatmul.bf16.gmra.mxu0 %v2109
      %v2150 = vpop.f32.mrf.mxu0
      %v2151 = vadd.f32 0.0, %v2150
      %v2152 = vpop.f32.mrf.mxu0
      %v2153 = vadd.f32 0.0, %v2152
      %2154 = vmatmul.bf16.gmra.mxu0 %v2112
      %v2155 = vpop.f32.mrf.mxu0
      %v2156 = vadd.f32 0.0, %v2155
      %v2157 = vpop.f32.mrf.mxu0
      %v2158 = vadd.f32 0.0, %v2157
      %2159 = vmatmul.bf16.gmra.mxu0 %v2115
      %v2160 = vpop.f32.mrf.mxu0
      %v2161 = vadd.f32 0.0, %v2160
      %v2162 = vpop.f32.mrf.mxu0
      %v2163 = vadd.f32 0.0, %v2162
      %2164 = vmatmul.bf16.gmra.mxu0 %v2118
      %v2165 = vpop.f32.mrf.mxu0
      %v2166 = vadd.f32 0.0, %v2165
      %v2167 = vpop.f32.mrf.mxu0
      %v2168 = vadd.f32 0.0, %v2167
      %2169 = vmatmul.bf16.gmra.mxu0 %v2121
      %v2170 = vpop.f32.mrf.mxu0
      %v2171 = vadd.f32 0.0, %v2170
      %v2172 = vpop.f32.mrf.mxu0
      %v2173 = vadd.f32 0.0, %v2172
      %2174 = vdwg.mxu0
      %vm2175 = vcmp.gt.f32.partialorder %v1892, 0.0
      %vm2176 = vcmp.gt.f32.partialorder %v1894, 0.0
      %vm2177 = vcmp.gt.f32.partialorder %v1897, 0.0
      %vm2178 = vcmp.gt.f32.partialorder %v1899, 0.0
      %vm2179 = vcmp.gt.f32.partialorder %v1902, 0.0
      %vm2180 = vcmp.gt.f32.partialorder %v1904, 0.0
      %vm2181 = vcmp.gt.f32.partialorder %v1907, 0.0
      %vm2182 = vcmp.gt.f32.partialorder %v1909, 0.0
      %vm2183 = vcmp.gt.f32.partialorder %v1912, 0.0
      %vm2184 = vcmp.gt.f32.partialorder %v1914, 0.0
      %vm2185 = vcmp.gt.f32.partialorder %v1917, 0.0
      %vm2186 = vcmp.gt.f32.partialorder %v1919, 0.0
      %vm2187 = vcmp.gt.f32.partialorder %v1922, 0.0
      %vm2188 = vcmp.gt.f32.partialorder %v1924, 0.0
      %vm2189 = vcmp.gt.f32.partialorder %v1927, 0.0
      %vm2190 = vcmp.gt.f32.partialorder %v1929, 0.0
      %v2191 = vsel %vm2175, %v2136, 0.0
      %v2192 = vsel %vm2176, %v2138, 0.0
      %v2193 = vsel %vm2177, %v2141, 0.0
      %v2194 = vsel %vm2178, %v2143, 0.0
      %v2195 = vsel %vm2179, %v2146, 0.0
      %v2196 = vsel %vm2180, %v2148, 0.0
      %v2197 = vsel %vm2181, %v2151, 0.0
      %v2198 = vsel %vm2182, %v2153, 0.0
      %v2199 = vsel %vm2183, %v2156, 0.0
      %v2200 = vsel %vm2184, %v2158, 0.0
      %v2201 = vsel %vm2185, %v2161, 0.0
      %v2202 = vsel %vm2186, %v2163, 0.0
      %v2203 = vsel %vm2187, %v2166, 0.0
      %v2204 = vsel %vm2188, %v2168, 0.0
      %v2205 = vsel %vm2189, %v2171, 0.0
      %v2206 = vsel %vm2190, %v2173, 0.0
      %v2207 = vpack.c.bf16 %v2192, %v2191
      %v2208 = vpack.c.bf16 %v2194, %v2193
      %v2209 = vpack.c.bf16 %v2196, %v2195
      %v2210 = vpack.c.bf16 %v2198, %v2197
      %v2211 = vpack.c.bf16 %v2200, %v2199
      %v2212 = vpack.c.bf16 %v2202, %v2201
      %v2213 = vpack.c.bf16 %v2204, %v2203
      %v2214 = vpack.c.bf16 %v2206, %v2205
      %2215 = vmatpush.bf16.xpose.msra.mxu0 %v2214
      %2216 = vmatpush.bf16.xpose.msra.mxu0 %v2213
      %2217 = vmatpush.bf16.xpose.msra.mxu0 %v2212
      %2218 = vmatpush.bf16.xpose.msra.mxu0 %v2211
      %2219 = vmatpush.bf16.xpose.msra.mxu0 %v2210
      %2220 = vmatpush.bf16.xpose.msra.mxu0 %v2209
      %2221 = vmatpush.bf16.xpose.msra.mxu0 %v2208
      %2222 = vmatpush.bf16.xpose.msra.mxu0 %v2207
      %2223 = vmatmul.bf16.gmra.mxu0 %v659
      %v2224 = vpop.f32.mrf.mxu0
      %v2225 = vadd.f32 0.0, %v2224
      %v2226 = vpop.f32.mrf.mxu0
      %v2227 = vadd.f32 0.0, %v2226
      %2228 = vmatmul.bf16.gmra.mxu0 %v660
      %v2229 = vpop.f32.mrf.mxu0
      %v2230 = vadd.f32 0.0, %v2229
      %v2231 = vpop.f32.mrf.mxu0
      %v2232 = vadd.f32 0.0, %v2231
      %2233 = vdwg.mxu0
      %2234 = vadd.xlane.f32.xlu0 %v2191
      %v2235 = vpop.xlane.xlu0 %2234
      %2236 = vadd.xlane.f32.xlu0 %v2192
      %v2237 = vpop.xlane.xlu0 %2236
      %2238 = vadd.xlane.f32.xlu0 %v2193
      %v2239 = vpop.xlane.xlu0 %2238
      %2240 = vadd.xlane.f32.xlu0 %v2194
      %v2241 = vpop.xlane.xlu0 %2240
      %2242 = vadd.xlane.f32.xlu0 %v2195
      %v2243 = vpop.xlane.xlu0 %2242
      %2244 = vadd.xlane.f32.xlu0 %v2196
      %v2245 = vpop.xlane.xlu0 %2244
      %2246 = vadd.xlane.f32.xlu0 %v2197
      %v2247 = vpop.xlane.xlu0 %2246
      %2248 = vadd.xlane.f32.xlu0 %v2198
      %v2249 = vpop.xlane.xlu0 %2248
      %2250 = vadd.xlane.f32.xlu0 %v2199
      %v2251 = vpop.xlane.xlu0 %2250
      %2252 = vadd.xlane.f32.xlu0 %v2200
      %v2253 = vpop.xlane.xlu0 %2252
      %2254 = vadd.xlane.f32.xlu0 %v2201
      %v2255 = vpop.xlane.xlu0 %2254
      %2256 = vadd.xlane.f32.xlu0 %v2202
      %v2257 = vpop.xlane.xlu0 %2256
      %2258 = vadd.xlane.f32.xlu0 %v2203
      %v2259 = vpop.xlane.xlu0 %2258
      %2260 = vadd.xlane.f32.xlu0 %v2204
      %v2261 = vpop.xlane.xlu0 %2260
      %2262 = vadd.xlane.f32.xlu0 %v2205
      %v2263 = vpop.xlane.xlu0 %2262
      %2264 = vadd.xlane.f32.xlu0 %v2206
      %v2265 = vpop.xlane.xlu0 %2264
      %v2266 = vmul.f32 %v530, %v2048
      %v2267 = vrot.slane %v2266, 4
      %v2268 = vadd.f32 %v2266, %v2267
      %v2269 = vrot.slane %v2268, 2
      %v2270 = vadd.f32 %v2268, %v2269
      %v2271 = vrot.slane %v2270, 1
      %v2272 = vadd.f32 %v2270, %v2271
      %v2273 = vmul.f32 %v529, %v2272
      %v2274 = vsel %vm1133, %v2273, 0.0
      %2275 = vadd.xlane.f32.xlu0 %v2274
      %v2276 = vpop.xlane.xlu0 %2275
      %v2277 = vrot.slane %v2276, 4
      %v2278 = vadd.f32 %v2276, %v2277
      %v2279 = vrot.slane %v2278, 2
      %v2280 = vadd.f32 %v2278, %v2279
      %v2281 = vrot.slane %v2280, 1
      %v2282 = vadd.f32 %v2280, %v2281
      %s2283 = vtos %v2282
      %v2284 = vstv %s2283
      %v2285 = vsub.f32 0.0, %v2284
      %v2286 = vmul.f32 %v2225, 0.01
      %v2287 = vmul.f32 %v2227, 0.01
      %v2288 = vmul.f32 %v2230, 0.01
      %v2289 = vmul.f32 %v2232, 0.01
      %v2290 = vsub.f32 %v1720, %v2286
      %v2291 = vsub.f32 %v1721, %v2287
      %v2292 = vsub.f32 %v1722, %v2288
      %v2293 = vsub.f32 %v1723, %v2289
      %v2294 = vmul.f32 %v2235, 0.01
      %v2295 = vmul.f32 %v2237, 0.01
      %v2296 = vmul.f32 %v2239, 0.01
      %v2297 = vmul.f32 %v2241, 0.01
      %v2298 = vmul.f32 %v2243, 0.01
      %v2299 = vmul.f32 %v2245, 0.01
      %v2300 = vmul.f32 %v2247, 0.01
      %v2301 = vmul.f32 %v2249, 0.01
      %v2302 = vmul.f32 %v2251, 0.01
      %v2303 = vmul.f32 %v2253, 0.01
      %v2304 = vmul.f32 %v2255, 0.01
      %v2305 = vmul.f32 %v2257, 0.01
      %v2306 = vmul.f32 %v2259, 0.01
      %v2307 = vmul.f32 %v2261, 0.01
      %v2308 = vmul.f32 %v2263, 0.01
      %v2309 = vmul.f32 %v2265, 0.01
      %v2310 = vsub.f32 %v1740, %v2294
      %v2311 = vsub.f32 %v1741, %v2295
      %v2312 = vsub.f32 %v1742, %v2296
      %v2313 = vsub.f32 %v1743, %v2297
      %v2314 = vsub.f32 %v1744, %v2298
      %v2315 = vsub.f32 %v1745, %v2299
      %v2316 = vsub.f32 %v1746, %v2300
      %v2317 = vsub.f32 %v1747, %v2301
      %v2318 = vsub.f32 %v1748, %v2302
      %v2319 = vsub.f32 %v1749, %v2303
      %v2320 = vsub.f32 %v1750, %v2304
      %v2321 = vsub.f32 %v1751, %v2305
      %v2322 = vsub.f32 %v1752, %v2306
      %v2323 = vsub.f32 %v1753, %v2307
      %v2324 = vsub.f32 %v1754, %v2308
      %v2325 = vsub.f32 %v1755, %v2309
      %v2326 = vmul.f32 %v2078, 0.01
      %v2327 = vsub.f32 %v1757, %v2326
      %v2328 = vmul.f32 %v2082, 0.01
      %v2329 = vsub.f32 %v1759, %v2328
      %v2330 = vpack.c.bf16 %v2291, %v2290
      %v2331 = vpack.c.bf16 %v2293, %v2292
      %2333 = vset.pattern.permute.xlu0 0
      %2334 = vperm.xlu0 %2333, %v2310
      %v2335 = vpop.permute.xlu0 %2334
      %2338 = vset.pattern.permute.xlu0 0
      %2339 = vperm.xlu0 %2338, %v2311
      %v2340 = vpop.permute.xlu0 %2339
      %2343 = vset.pattern.permute.xlu0 0
      %2344 = vperm.xlu0 %2343, %v2312
      %v2345 = vpop.permute.xlu0 %2344
      %2348 = vset.pattern.permute.xlu0 0
      %2349 = vperm.xlu0 %2348, %v2313
      %v2350 = vpop.permute.xlu0 %2349
      %2353 = vset.pattern.permute.xlu0 0
      %2354 = vperm.xlu0 %2353, %v2314
      %v2355 = vpop.permute.xlu0 %2354
      %2358 = vset.pattern.permute.xlu0 0
      %2359 = vperm.xlu0 %2358, %v2315
      %v2360 = vpop.permute.xlu0 %2359
      %2363 = vset.pattern.permute.xlu0 0
      %2364 = vperm.xlu0 %2363, %v2316
      %v2365 = vpop.permute.xlu0 %2364
      %2368 = vset.pattern.permute.xlu0 0
      %2369 = vperm.xlu0 %2368, %v2317
      %v2370 = vpop.permute.xlu0 %2369
      %2373 = vset.pattern.permute.xlu0 0
      %2374 = vperm.xlu0 %2373, %v2318
      %v2375 = vpop.permute.xlu0 %2374
      %2378 = vset.pattern.permute.xlu0 0
      %2379 = vperm.xlu0 %2378, %v2319
      %v2380 = vpop.permute.xlu0 %2379
      %2383 = vset.pattern.permute.xlu0 0
      %2384 = vperm.xlu0 %2383, %v2320
      %v2385 = vpop.permute.xlu0 %2384
      %2388 = vset.pattern.permute.xlu0 0
      %2389 = vperm.xlu0 %2388, %v2321
      %v2390 = vpop.permute.xlu0 %2389
      %2393 = vset.pattern.permute.xlu0 0
      %2394 = vperm.xlu0 %2393, %v2322
      %v2395 = vpop.permute.xlu0 %2394
      %2398 = vset.pattern.permute.xlu0 0
      %2399 = vperm.xlu0 %2398, %v2323
      %v2400 = vpop.permute.xlu0 %2399
      %2403 = vset.pattern.permute.xlu0 0
      %2404 = vperm.xlu0 %2403, %v2324
      %v2405 = vpop.permute.xlu0 %2404
      %2408 = vset.pattern.permute.xlu0 0
      %2409 = vperm.xlu0 %2408, %v2325
      %v2410 = vpop.permute.xlu0 %2409
      %2412 = vxpose.xlu0.c.b16.start [1/8] %v2330, 128
      %2413 = vxpose.xlu0.c.b16.cont [2/8] %v2331, 128
      %2414 = vxpose.xlu0.c.b16.cont [3/8] 0, 128
      %2415 = vxpose.xlu0.c.b16.cont [4/8] 0, 128
      %2416 = vxpose.xlu0.c.b16.cont [5/8] 0, 128
      %2417 = vxpose.xlu0.c.b16.cont [6/8] 0, 128
      %2418 = vxpose.xlu0.c.b16.cont [7/8] 0, 128
      %2419 = vxpose.xlu0.c.b16.end [8/8] 0, 128
      %v2420 = vpop.trf.xlu0
      %v2421 = vpop.trf.xlu0
      %v2422 = vpop.trf.xlu0
      %v2423 = vpop.trf.xlu0
      %v2424 = vpop.trf.xlu0
      %v2425 = vpop.trf.xlu0
      %v2426 = vpop.trf.xlu0
      %v2427 = vpop.trf.xlu0
      %v2429 = vsel %vm663, %v2420, 0
      %v2432 = vsel %vm663, %v2421, 0
      %v2435 = vsel %vm663, %v2422, 0
      %v2438 = vsel %vm663, %v2423, 0
      %v2441 = vsel %vm663, %v2424, 0
      %v2444 = vsel %vm663, %v2425, 0
      %v2447 = vsel %vm663, %v2426, 0
      %v2450 = vsel %vm663, %v2427, 0
      %2452 = vmatpush.bf16.msra.mxu0 0
      %2453 = vmatpush.bf16.msra.mxu0 0
      %2454 = vmatpush.bf16.msra.mxu0 0
      %2455 = vmatpush.bf16.msra.mxu0 0
      %2456 = vmatpush.bf16.msra.mxu0 0
      %2457 = vmatpush.bf16.msra.mxu0 0
      %2458 = vmatpush.bf16.msra.mxu0 %v660
      %2459 = vmatpush.bf16.msra.mxu0 %v659
      %2460 = vmatmul.bf16.gmra.mxu0 %v2429
      %v2461 = vpop.f32.mrf.mxu0
      %v2462 = vadd.f32 %v2335, %v2461
      %v2463 = vpop.f32.mrf.mxu0
      %v2464 = vadd.f32 %v2340, %v2463
      %2465 = vmatmul.bf16.gmra.mxu0 %v2432
      %v2466 = vpop.f32.mrf.mxu0
      %v2467 = vadd.f32 %v2345, %v2466
      %v2468 = vpop.f32.mrf.mxu0
      %v2469 = vadd.f32 %v2350, %v2468
      %2470 = vmatmul.bf16.gmra.mxu0 %v2435
      %v2471 = vpop.f32.mrf.mxu0
      %v2472 = vadd.f32 %v2355, %v2471
      %v2473 = vpop.f32.mrf.mxu0
      %v2474 = vadd.f32 %v2360, %v2473
      %2475 = vmatmul.bf16.gmra.mxu0 %v2438
      %v2476 = vpop.f32.mrf.mxu0
      %v2477 = vadd.f32 %v2365, %v2476
      %v2478 = vpop.f32.mrf.mxu0
      %v2479 = vadd.f32 %v2370, %v2478
      %2480 = vmatmul.bf16.gmra.mxu0 %v2441
      %v2481 = vpop.f32.mrf.mxu0
      %v2482 = vadd.f32 %v2375, %v2481
      %v2483 = vpop.f32.mrf.mxu0
      %v2484 = vadd.f32 %v2380, %v2483
      %2485 = vmatmul.bf16.gmra.mxu0 %v2444
      %v2486 = vpop.f32.mrf.mxu0
      %v2487 = vadd.f32 %v2385, %v2486
      %v2488 = vpop.f32.mrf.mxu0
      %v2489 = vadd.f32 %v2390, %v2488
      %2490 = vmatmul.bf16.gmra.mxu0 %v2447
      %v2491 = vpop.f32.mrf.mxu0
      %v2492 = vadd.f32 %v2395, %v2491
      %v2493 = vpop.f32.mrf.mxu0
      %v2494 = vadd.f32 %v2400, %v2493
      %2495 = vmatmul.bf16.gmra.mxu0 %v2450
      %v2496 = vpop.f32.mrf.mxu0
      %v2497 = vadd.f32 %v2405, %v2496
      %v2498 = vpop.f32.mrf.mxu0
      %v2499 = vadd.f32 %v2410, %v2498
      %2500 = vdwg.mxu0
      %v2501 = vmax.f32 %v2462, 0.0
      %v2502 = vmax.f32 %v2464, 0.0
      %v2503 = vmax.f32 %v2467, 0.0
      %v2504 = vmax.f32 %v2469, 0.0
      %v2505 = vmax.f32 %v2472, 0.0
      %v2506 = vmax.f32 %v2474, 0.0
      %v2507 = vmax.f32 %v2477, 0.0
      %v2508 = vmax.f32 %v2479, 0.0
      %v2509 = vmax.f32 %v2482, 0.0
      %v2510 = vmax.f32 %v2484, 0.0
      %v2511 = vmax.f32 %v2487, 0.0
      %v2512 = vmax.f32 %v2489, 0.0
      %v2513 = vmax.f32 %v2492, 0.0
      %v2514 = vmax.f32 %v2494, 0.0
      %v2515 = vmax.f32 %v2497, 0.0
      %v2516 = vmax.f32 %v2499, 0.0
      %v2517 = vpack.c.bf16 %v2502, %v2501
      %v2518 = vpack.c.bf16 %v2504, %v2503
      %v2519 = vpack.c.bf16 %v2506, %v2505
      %v2520 = vpack.c.bf16 %v2508, %v2507
      %v2521 = vpack.c.bf16 %v2510, %v2509
      %v2522 = vpack.c.bf16 %v2512, %v2511
      %v2523 = vpack.c.bf16 %v2514, %v2513
      %v2524 = vpack.c.bf16 %v2516, %v2515
      %2525 = vmatpush.bf16.xpose.msra.mxu0 %v800
      %2526 = vmatpush.bf16.xpose.msra.mxu0 %v799
      %2527 = vmatpush.bf16.xpose.msra.mxu0 %v798
      %2528 = vmatpush.bf16.xpose.msra.mxu0 %v797
      %2529 = vmatpush.bf16.xpose.msra.mxu0 %v796
      %2530 = vmatpush.bf16.xpose.msra.mxu0 %v795
      %2531 = vmatpush.bf16.xpose.msra.mxu0 %v794
      %2532 = vmatpush.bf16.xpose.msra.mxu0 %v793
      %2533 = vmatmul.bf16.gmra.mxu0 %v2517
      %v2534 = vpop.f32.mrf.mxu0
      %v2535 = vadd.f32 0.0, %v2534
      %v2536 = vpop.f32.mrf.mxu0
      %v2537 = vadd.f32 0.0, %v2536
      %2538 = vmatmul.bf16.gmra.mxu0 %v2518
      %v2539 = vpop.f32.mrf.mxu0
      %v2540 = vadd.f32 0.0, %v2539
      %v2541 = vpop.f32.mrf.mxu0
      %v2542 = vadd.f32 0.0, %v2541
      %2543 = vmatmul.bf16.gmra.mxu0 %v2519
      %v2544 = vpop.f32.mrf.mxu0
      %v2545 = vadd.f32 0.0, %v2544
      %v2546 = vpop.f32.mrf.mxu0
      %v2547 = vadd.f32 0.0, %v2546
      %2548 = vmatmul.bf16.gmra.mxu0 %v2520
      %v2549 = vpop.f32.mrf.mxu0
      %v2550 = vadd.f32 0.0, %v2549
      %v2551 = vpop.f32.mrf.mxu0
      %v2552 = vadd.f32 0.0, %v2551
      %2553 = vmatmul.bf16.gmra.mxu0 %v2521
      %v2554 = vpop.f32.mrf.mxu0
      %v2555 = vadd.f32 0.0, %v2554
      %v2556 = vpop.f32.mrf.mxu0
      %v2557 = vadd.f32 0.0, %v2556
      %2558 = vmatmul.bf16.gmra.mxu0 %v2522
      %v2559 = vpop.f32.mrf.mxu0
      %v2560 = vadd.f32 0.0, %v2559
      %v2561 = vpop.f32.mrf.mxu0
      %v2562 = vadd.f32 0.0, %v2561
      %2563 = vmatmul.bf16.gmra.mxu0 %v2523
      %v2564 = vpop.f32.mrf.mxu0
      %v2565 = vadd.f32 0.0, %v2564
      %v2566 = vpop.f32.mrf.mxu0
      %v2567 = vadd.f32 0.0, %v2566
      %2568 = vmatmul.bf16.gmra.mxu0 %v2524
      %v2569 = vpop.f32.mrf.mxu0
      %v2570 = vadd.f32 0.0, %v2569
      %v2571 = vpop.f32.mrf.mxu0
      %v2572 = vadd.f32 0.0, %v2571
      %2573 = vdwg.mxu0
      %v2574 = vpack.c.bf16 %v2327, %v2327
      %v2575 = vpack.c.bf16 %v2537, %v2535
      %v2576 = vpack.c.bf16 %v2542, %v2540
      %v2577 = vpack.c.bf16 %v2547, %v2545
      %v2578 = vpack.c.bf16 %v2552, %v2550
      %v2579 = vpack.c.bf16 %v2557, %v2555
      %v2580 = vpack.c.bf16 %v2562, %v2560
      %v2581 = vpack.c.bf16 %v2567, %v2565
      %v2582 = vpack.c.bf16 %v2572, %v2570
      %2584 = vset.pattern.permute.xlu0 0
      %2585 = vperm.xlu0 %2584, %v2329
      %v2586 = vpop.permute.xlu0 %2585
      %2588 = vmatpush.bf16.msra.mxu0 %v2582
      %2589 = vmatpush.bf16.msra.mxu0 %v2581
      %2590 = vmatpush.bf16.msra.mxu0 %v2580
      %2591 = vmatpush.bf16.msra.mxu0 %v2579
      %2592 = vmatpush.bf16.msra.mxu0 %v2578
      %2593 = vmatpush.bf16.msra.mxu0 %v2577
      %2594 = vmatpush.bf16.msra.mxu0 %v2576
      %2595 = vmatpush.bf16.msra.mxu0 %v2575
      %2596 = vmatmul.bf16.gmra.mxu0 %v2574
      %v2597 = vpop.f32.mrf.mxu0
      %v2598 = vadd.f32 %v2586, %v2597
      %v2599 = vpop.f32.mrf.mxu0
      %2600 = vdwg.mxu0
      %v2601 = vrot.slane %v2598, 4
      %v2602 = vmax.f32 %v2598, %v2601
      %v2603 = vrot.slane %v2602, 2
      %v2604 = vmax.f32 %v2602, %v2603
      %v2605 = vrot.slane %v2604, 1
      %v2606 = vmax.f32 %v2604, %v2605
      %v2607 = vsub.f32 %v2598, %v2606
      %v2608 = vmul.f32 %v2607, 1.442695
      %v2609 = vpow.pop %v2608
      %v2610 = vrot.slane %v2609, 4
      %v2611 = vadd.f32 %v2609, %v2610
      %v2612 = vrot.slane %v2611, 2
      %v2613 = vadd.f32 %v2611, %v2612
      %v2614 = vrot.slane %v2613, 1
      %v2615 = vadd.f32 %v2613, %v2614
      %v2616 = vlog2.pop %v2615
      %v2617 = vmul.f32 %v2616, 0.6931472
      %v2618 = vsub.f32 %v2607, %v2617
      %v2619 = vrcp.pop %v2615
      %v2620 = vmul.f32 %v2609, %v2619
      %v2621 = vsub.f32 %v2620, %v530
      %v2623 = vperm.slane %v529, 0
      %v2625 = vmul.f32 %v2621, %v2623
      %v2626 = vpack.c.bf16 %v2625, %v2625
      %2627 = vmatpush.bf16.msra.mxu0 %v800
      %2628 = vmatpush.bf16.msra.mxu0 %v799
      %2629 = vmatpush.bf16.msra.mxu0 %v798
      %2630 = vmatpush.bf16.msra.mxu0 %v797
      %2631 = vmatpush.bf16.msra.mxu0 %v796
      %2632 = vmatpush.bf16.msra.mxu0 %v795
      %2633 = vmatpush.bf16.msra.mxu0 %v794
      %2634 = vmatpush.bf16.msra.mxu0 %v793
      %2635 = vmatmul.bf16.gmra.mxu0 %v2626
      %v2636 = vpop.f32.mrf.mxu0
      %v2637 = vadd.f32 0.0, %v2636
      %v2638 = vpop.f32.mrf.mxu0
      %2639 = vdwg.mxu0
      %v2640 = vpack.c.bf16 %v2637, %v2637
      %2641 = vmatpush.bf16.xpose.msra.mxu0 %v2524
      %2642 = vmatpush.bf16.xpose.msra.mxu0 %v2523
      %2643 = vmatpush.bf16.xpose.msra.mxu0 %v2522
      %2644 = vmatpush.bf16.xpose.msra.mxu0 %v2521
      %2645 = vmatpush.bf16.xpose.msra.mxu0 %v2520
      %2646 = vmatpush.bf16.xpose.msra.mxu0 %v2519
      %2647 = vmatpush.bf16.xpose.msra.mxu0 %v2518
      %2648 = vmatpush.bf16.xpose.msra.mxu0 %v2517
      %2649 = vmatmul.bf16.gmra.mxu0 %v2640
      %v2650 = vpop.f32.mrf.mxu0
      %v2651 = vadd.f32 0.0, %v2650
      %v2652 = vpop.f32.mrf.mxu0
      %2653 = vdwg.mxu0
      %2654 = vadd.xlane.f32.xlu0 %v2625
      %v2655 = vpop.xlane.xlu0 %2654
      %2656 = vxpose.xlu0.c.b16.start [1/8] %v2574, 128
      %2657 = vxpose.xlu0.c.b16.cont [2/8] 0, 128
      %2658 = vxpose.xlu0.c.b16.cont [3/8] 0, 128
      %2659 = vxpose.xlu0.c.b16.cont [4/8] 0, 128
      %2660 = vxpose.xlu0.c.b16.cont [5/8] 0, 128
      %2661 = vxpose.xlu0.c.b16.cont [6/8] 0, 128
      %2662 = vxpose.xlu0.c.b16.cont [7/8] 0, 128
      %2663 = vxpose.xlu0.c.b16.end [8/8] 0, 128
      %v2664 = vpop.trf.xlu0
      %v2665 = vpop.trf.xlu0
      %v2666 = vpop.trf.xlu0
      %v2667 = vpop.trf.xlu0
      %v2668 = vpop.trf.xlu0
      %v2669 = vpop.trf.xlu0
      %v2670 = vpop.trf.xlu0
      %v2671 = vpop.trf.xlu0
      %v2673 = vsel %vm956, %v2664, 0
      %v2676 = vsel %vm956, %v2665, 0
      %v2679 = vsel %vm956, %v2666, 0
      %v2682 = vsel %vm956, %v2667, 0
      %v2685 = vsel %vm956, %v2668, 0
      %v2688 = vsel %vm956, %v2669, 0
      %v2691 = vsel %vm956, %v2670, 0
      %v2694 = vsel %vm956, %v2671, 0
      %v2697 = vsel %vm981, %v2640, 0
      %2699 = vmatpush.bf16.msra.mxu0 0
      %2700 = vmatpush.bf16.msra.mxu0 0
      %2701 = vmatpush.bf16.msra.mxu0 0
      %2702 = vmatpush.bf16.msra.mxu0 0
      %2703 = vmatpush.bf16.msra.mxu0 0
      %2704 = vmatpush.bf16.msra.mxu0 0
      %2705 = vmatpush.bf16.msra.mxu0 0
      %2706 = vmatpush.bf16.msra.mxu0 %v2697
      %2707 = vmatmul.bf16.gmra.mxu0 %v2673
      %v2708 = vpop.f32.mrf.mxu0
      %v2709 = vadd.f32 0.0, %v2708
      %v2710 = vpop.f32.mrf.mxu0
      %v2711 = vadd.f32 0.0, %v2710
      %2712 = vmatmul.bf16.gmra.mxu0 %v2676
      %v2713 = vpop.f32.mrf.mxu0
      %v2714 = vadd.f32 0.0, %v2713
      %v2715 = vpop.f32.mrf.mxu0
      %v2716 = vadd.f32 0.0, %v2715
      %2717 = vmatmul.bf16.gmra.mxu0 %v2679
      %v2718 = vpop.f32.mrf.mxu0
      %v2719 = vadd.f32 0.0, %v2718
      %v2720 = vpop.f32.mrf.mxu0
      %v2721 = vadd.f32 0.0, %v2720
      %2722 = vmatmul.bf16.gmra.mxu0 %v2682
      %v2723 = vpop.f32.mrf.mxu0
      %v2724 = vadd.f32 0.0, %v2723
      %v2725 = vpop.f32.mrf.mxu0
      %v2726 = vadd.f32 0.0, %v2725
      %2727 = vmatmul.bf16.gmra.mxu0 %v2685
      %v2728 = vpop.f32.mrf.mxu0
      %v2729 = vadd.f32 0.0, %v2728
      %v2730 = vpop.f32.mrf.mxu0
      %v2731 = vadd.f32 0.0, %v2730
      %2732 = vmatmul.bf16.gmra.mxu0 %v2688
      %v2733 = vpop.f32.mrf.mxu0
      %v2734 = vadd.f32 0.0, %v2733
      %v2735 = vpop.f32.mrf.mxu0
      %v2736 = vadd.f32 0.0, %v2735
      %2737 = vmatmul.bf16.gmra.mxu0 %v2691
      %v2738 = vpop.f32.mrf.mxu0
      %v2739 = vadd.f32 0.0, %v2738
      %v2740 = vpop.f32.mrf.mxu0
      %v2741 = vadd.f32 0.0, %v2740
      %2742 = vmatmul.bf16.gmra.mxu0 %v2694
      %v2743 = vpop.f32.mrf.mxu0
      %v2744 = vadd.f32 0.0, %v2743
      %v2745 = vpop.f32.mrf.mxu0
      %v2746 = vadd.f32 0.0, %v2745
      %2747 = vdwg.mxu0
      %vm2748 = vcmp.gt.f32.partialorder %v2462, 0.0
      %vm2749 = vcmp.gt.f32.partialorder %v2464, 0.0
      %vm2750 = vcmp.gt.f32.partialorder %v2467, 0.0
      %vm2751 = vcmp.gt.f32.partialorder %v2469, 0.0
      %vm2752 = vcmp.gt.f32.partialorder %v2472, 0.0
      %vm2753 = vcmp.gt.f32.partialorder %v2474, 0.0
      %vm2754 = vcmp.gt.f32.partialorder %v2477, 0.0
      %vm2755 = vcmp.gt.f32.partialorder %v2479, 0.0
      %vm2756 = vcmp.gt.f32.partialorder %v2482, 0.0
      %vm2757 = vcmp.gt.f32.partialorder %v2484, 0.0
      %vm2758 = vcmp.gt.f32.partialorder %v2487, 0.0
      %vm2759 = vcmp.gt.f32.partialorder %v2489, 0.0
      %vm2760 = vcmp.gt.f32.partialorder %v2492, 0.0
      %vm2761 = vcmp.gt.f32.partialorder %v2494, 0.0
      %vm2762 = vcmp.gt.f32.partialorder %v2497, 0.0
      %vm2763 = vcmp.gt.f32.partialorder %v2499, 0.0
      %v2764 = vsel %vm2748, %v2709, 0.0
      %v2765 = vsel %vm2749, %v2711, 0.0
      %v2766 = vsel %vm2750, %v2714, 0.0
      %v2767 = vsel %vm2751, %v2716, 0.0
      %v2768 = vsel %vm2752, %v2719, 0.0
      %v2769 = vsel %vm2753, %v2721, 0.0
      %v2770 = vsel %vm2754, %v2724, 0.0
      %v2771 = vsel %vm2755, %v2726, 0.0
      %v2772 = vsel %vm2756, %v2729, 0.0
      %v2773 = vsel %vm2757, %v2731, 0.0
      %v2774 = vsel %vm2758, %v2734, 0.0
      %v2775 = vsel %vm2759, %v2736, 0.0
      %v2776 = vsel %vm2760, %v2739, 0.0
      %v2777 = vsel %vm2761, %v2741, 0.0
      %v2778 = vsel %vm2762, %v2744, 0.0
      %v2779 = vsel %vm2763, %v2746, 0.0
      %v2780 = vpack.c.bf16 %v2765, %v2764
      %v2781 = vpack.c.bf16 %v2767, %v2766
      %v2782 = vpack.c.bf16 %v2769, %v2768
      %v2783 = vpack.c.bf16 %v2771, %v2770
      %v2784 = vpack.c.bf16 %v2773, %v2772
      %v2785 = vpack.c.bf16 %v2775, %v2774
      %v2786 = vpack.c.bf16 %v2777, %v2776
      %v2787 = vpack.c.bf16 %v2779, %v2778
      %2788 = vmatpush.bf16.xpose.msra.mxu0 %v2787
      %2789 = vmatpush.bf16.xpose.msra.mxu0 %v2786
      %2790 = vmatpush.bf16.xpose.msra.mxu0 %v2785
      %2791 = vmatpush.bf16.xpose.msra.mxu0 %v2784
      %2792 = vmatpush.bf16.xpose.msra.mxu0 %v2783
      %2793 = vmatpush.bf16.xpose.msra.mxu0 %v2782
      %2794 = vmatpush.bf16.xpose.msra.mxu0 %v2781
      %2795 = vmatpush.bf16.xpose.msra.mxu0 %v2780
      %2796 = vmatmul.bf16.gmra.mxu0 %v659
      %v2797 = vpop.f32.mrf.mxu0
      %v2798 = vadd.f32 0.0, %v2797
      %v2799 = vpop.f32.mrf.mxu0
      %v2800 = vadd.f32 0.0, %v2799
      %2801 = vmatmul.bf16.gmra.mxu0 %v660
      %v2802 = vpop.f32.mrf.mxu0
      %v2803 = vadd.f32 0.0, %v2802
      %v2804 = vpop.f32.mrf.mxu0
      %v2805 = vadd.f32 0.0, %v2804
      %2806 = vdwg.mxu0
      %2807 = vadd.xlane.f32.xlu0 %v2764
      %v2808 = vpop.xlane.xlu0 %2807
      %2809 = vadd.xlane.f32.xlu0 %v2765
      %v2810 = vpop.xlane.xlu0 %2809
      %2811 = vadd.xlane.f32.xlu0 %v2766
      %v2812 = vpop.xlane.xlu0 %2811
      %2813 = vadd.xlane.f32.xlu0 %v2767
      %v2814 = vpop.xlane.xlu0 %2813
      %2815 = vadd.xlane.f32.xlu0 %v2768
      %v2816 = vpop.xlane.xlu0 %2815
      %2817 = vadd.xlane.f32.xlu0 %v2769
      %v2818 = vpop.xlane.xlu0 %2817
      %2819 = vadd.xlane.f32.xlu0 %v2770
      %v2820 = vpop.xlane.xlu0 %2819
      %2821 = vadd.xlane.f32.xlu0 %v2771
      %v2822 = vpop.xlane.xlu0 %2821
      %2823 = vadd.xlane.f32.xlu0 %v2772
      %v2824 = vpop.xlane.xlu0 %2823
      %2825 = vadd.xlane.f32.xlu0 %v2773
      %v2826 = vpop.xlane.xlu0 %2825
      %2827 = vadd.xlane.f32.xlu0 %v2774
      %v2828 = vpop.xlane.xlu0 %2827
      %2829 = vadd.xlane.f32.xlu0 %v2775
      %v2830 = vpop.xlane.xlu0 %2829
      %2831 = vadd.xlane.f32.xlu0 %v2776
      %v2832 = vpop.xlane.xlu0 %2831
      %2833 = vadd.xlane.f32.xlu0 %v2777
      %v2834 = vpop.xlane.xlu0 %2833
      %2835 = vadd.xlane.f32.xlu0 %v2778
      %v2836 = vpop.xlane.xlu0 %2835
      %2837 = vadd.xlane.f32.xlu0 %v2779
      %v2838 = vpop.xlane.xlu0 %2837
      %v2839 = vmul.f32 %v530, %v2618
      %v2840 = vrot.slane %v2839, 4
      %v2841 = vadd.f32 %v2839, %v2840
      %v2842 = vrot.slane %v2841, 2
      %v2843 = vadd.f32 %v2841, %v2842
      %v2844 = vrot.slane %v2843, 1
      %v2845 = vadd.f32 %v2843, %v2844
      %v2846 = vmul.f32 %v529, %v2845
      %v2847 = vsel %vm1133, %v2846, 0.0
      %2848 = vadd.xlane.f32.xlu0 %v2847
      %v2849 = vpop.xlane.xlu0 %2848
      %v2850 = vrot.slane %v2849, 4
      %v2851 = vadd.f32 %v2849, %v2850
      %v2852 = vrot.slane %v2851, 2
      %v2853 = vadd.f32 %v2851, %v2852
      %v2854 = vrot.slane %v2853, 1
      %v2855 = vadd.f32 %v2853, %v2854
      %s2856 = vtos %v2855
      %v2857 = vstv %s2856
      %v2858 = vsub.f32 0.0, %v2857
      %vm2859 = vcmask 7168
      %v2860 = vsel %vm2859, %v1145, %v1715
      %vm2861 = vcmask 15360
      %v2862 = vsel %vm2861, %v2860, %v2285
      %vm2863 = vcmask 23552
      %v2864 = vsel %vm2863, %v2862, %v2858
      %vm2865 = vcmask 24576
      %2866 = vst.msk [vmem:[%s488] sm:$0x1] %vm2865, %v2864
      %2867 = vst [vmem:[%s493] sm:$0xff] %v2798
      %2868 = vst [vmem:[%s493 + $0x8] sm:$0xff] %v2800
      %2869 = vst [vmem:[%s493 + $0x10] sm:$0xff] %v2803
      %2870 = vst [vmem:[%s493 + $0x18] sm:$0xff] %v2805
      %2871 = vst.msk [vmem:[%s498] sm:$0xff] %vm2859, %v2808
      %2872 = vst.msk [vmem:[%s498 + $0x8] sm:$0xff] %vm2859, %v2810
      %2873 = vst.msk [vmem:[%s498 + $0x10] sm:$0xff] %vm2859, %v2812
      %2874 = vst.msk [vmem:[%s498 + $0x18] sm:$0xff] %vm2859, %v2814
      %2875 = vst.msk [vmem:[%s498 + $0x20] sm:$0xff] %vm2859, %v2816
      %2876 = vst.msk [vmem:[%s498 + $0x28] sm:$0xff] %vm2859, %v2818
      %2877 = vst.msk [vmem:[%s498 + $0x30] sm:$0xff] %vm2859, %v2820
      %2878 = vst.msk [vmem:[%s498 + $0x38] sm:$0xff] %vm2859, %v2822
      %2879 = vst.msk [vmem:[%s498 + $0x40] sm:$0xff] %vm2859, %v2824
      %2880 = vst.msk [vmem:[%s498 + $0x48] sm:$0xff] %vm2859, %v2826
      %2881 = vst.msk [vmem:[%s498 + $0x50] sm:$0xff] %vm2859, %v2828
      %2882 = vst.msk [vmem:[%s498 + $0x58] sm:$0xff] %vm2859, %v2830
      %2883 = vst.msk [vmem:[%s498 + $0x60] sm:$0xff] %vm2859, %v2832
      %2884 = vst.msk [vmem:[%s498 + $0x68] sm:$0xff] %vm2859, %v2834
      %2885 = vst.msk [vmem:[%s498 + $0x70] sm:$0xff] %vm2859, %v2836
      %2886 = vst.msk [vmem:[%s498 + $0x78] sm:$0xff] %vm2859, %v2838
      %2887 = vst [vmem:[%s502] sm:$0xff] %v2651
      %2888 = vst.msk [vmem:[%s506] sm:$0xff] %vm2859, %v2655
      %p2889 = scmp.lt.s32.totalorder %s25, 2
      %s2890 = scalar_select %p2889, %s25, 2
      %s2891 = scalar_lea.vmem %s9, %s2890
      %p2892 = scmp.lt.s32.totalorder %s25, 2
      %s2893 = scalar_select %p2892, %s25, 2
      %s2894 = smul.addr %s2893, 4
      %s2895 = smul.addr %s2894, 8
      %s2896 = scalar_lea.vmem %s10, %s2895
      %p2897 = scmp.lt.s32.totalorder %s25, 2
      %s2898 = scalar_select %p2897, %s25, 2
      %s2899 = smul.addr %s2898, 16
      %s2900 = smul.addr %s2899, 8
      %s2901 = scalar_lea.vmem %s11, %s2900
      %p2902 = scmp.lt.s32.totalorder %s25, 2
      %s2903 = scalar_select %p2902, %s25, 2
      %s2904 = smul.addr %s2903, 8
      %s2905 = scalar_lea.vmem %s12, %s2904
      %p2906 = scmp.lt.s32.totalorder %s25, 2
      %s2907 = scalar_select %p2906, %s25, 2
      %s2908 = smul.addr %s2907, 8
      %s2909 = scalar_lea.vmem %s13, %s2908
      // Predicated region
      $region57: #{local_update_gcn_forward.1} parent=55 // pred_check
        %p2910 = pneg %p247
      $region58: #{local_update_gcn_forward.1} parent=55 // pred_check_branch
        %2912 = sbr.rel (%p2910) target = $region60
      $region59: #{local_update_gcn_forward.1} parent=55 // pred_region
        _
      $region60: #{local_update_gcn_forward.1} parent=55 // pred_fallthru
        _
      // Predicated region
      $region61: #{local_update_gcn_forward.1} parent=55 // pred_check
        %p2913 = pneg %p273
      $region62: #{local_update_gcn_forward.1} parent=55 // pred_check_branch
        %2915 = sbr.rel (%p2913) target = $region64
      $region63: #{local_update_gcn_forward.1} parent=55 // pred_region
        _
      $region64: #{local_update_gcn_forward.1} parent=55 // pred_fallthru
        _
      // Predicated region
      $region65: #{local_update_gcn_forward.1} parent=55 // pred_check
        %p2916 = pneg %p299
      $region66: #{local_update_gcn_forward.1} parent=55 // pred_check_branch
        %2918 = sbr.rel (%p2916) target = $region68
      $region67: #{local_update_gcn_forward.1} parent=55 // pred_region
        _
      $region68: #{local_update_gcn_forward.1} parent=55 // pred_fallthru
        _
      // Predicated region
      $region69: #{local_update_gcn_forward.1} parent=55 // pred_check
        %p2919 = pneg %p325
      $region70: #{local_update_gcn_forward.1} parent=55 // pred_check_branch
        %2921 = sbr.rel (%p2919) target = $region72
      $region71: #{local_update_gcn_forward.1} parent=55 // pred_region
        _
      $region72: #{local_update_gcn_forward.1} parent=55 // pred_fallthru
        _
      // Predicated region
      $region73: #{local_update_gcn_forward.1} parent=55 // pred_check
        %p2922 = pneg %p351
      $region74: #{local_update_gcn_forward.1} parent=55 // pred_check_branch
        %2924 = sbr.rel (%p2922) target = $region76
      $region75: #{local_update_gcn_forward.1} parent=55 // pred_region
        _
      $region76: #{local_update_gcn_forward.1} parent=55 // pred_fallthru
        _
    $region56: #{local_update_gcn_forward.1} parent=5 // pred_fallthru
      _
    %p2925 = scmp.le.s32.totalorder 2, %s20
    // Predicated region
    $region77: #{local_update_gcn_forward.1} parent=5 // pred_check
      %p2926 = pneg %p2925
    $region78: #{local_update_gcn_forward.1} parent=5 // pred_check_branch
      %2928 = sbr.rel (%p2926) target = $region80
    $region79: #{local_update_gcn_forward.1} parent=5 // pred_region
      %s2929 = ssub.s32 %s20, 2
      // Predicated region
      $region81: #{local_update_gcn_forward.1} parent=79 // pred_check
        %p2930 = pneg %p253
      $region82: #{local_update_gcn_forward.1} parent=79 // pred_check_branch
        %2932 = sbr.rel (%p2930) target = $region84
      $region83: #{local_update_gcn_forward.1} parent=79 // pred_region
        %p2933 = scmp.lt.s32.totalorder %s26, 2
        %s2934 = scalar_select %p2933, %s26, 2
        %s2935 = scalar_lea.vmem %s9, %s2934
      $region84: #{local_update_gcn_forward.1} parent=79 // pred_fallthru
        _
      // Predicated region
      $region85: #{local_update_gcn_forward.1} parent=79 // pred_check
        %p2936 = pneg %p279
      $region86: #{local_update_gcn_forward.1} parent=79 // pred_check_branch
        %2938 = sbr.rel (%p2936) target = $region88
      $region87: #{local_update_gcn_forward.1} parent=79 // pred_region
        %p2939 = scmp.lt.s32.totalorder %s26, 2
        %s2940 = scalar_select %p2939, %s26, 2
        %s2941 = smul.addr %s2940, 4
        %s2942 = smul.addr %s2941, 8
        %s2943 = scalar_lea.vmem %s10, %s2942
      $region88: #{local_update_gcn_forward.1} parent=79 // pred_fallthru
        _
      // Predicated region
      $region89: #{local_update_gcn_forward.1} parent=79 // pred_check
        %p2944 = pneg %p305
      $region90: #{local_update_gcn_forward.1} parent=79 // pred_check_branch
        %2946 = sbr.rel (%p2944) target = $region92
      $region91: #{local_update_gcn_forward.1} parent=79 // pred_region
        %p2947 = scmp.lt.s32.totalorder %s26, 2
        %s2948 = scalar_select %p2947, %s26, 2
        %s2949 = smul.addr %s2948, 16
        %s2950 = smul.addr %s2949, 8
        %s2951 = scalar_lea.vmem %s11, %s2950
      $region92: #{local_update_gcn_forward.1} parent=79 // pred_fallthru
        _
      // Predicated region
      $region93: #{local_update_gcn_forward.1} parent=79 // pred_check
        %p2952 = pneg %p331
      $region94: #{local_update_gcn_forward.1} parent=79 // pred_check_branch
        %2954 = sbr.rel (%p2952) target = $region96
      $region95: #{local_update_gcn_forward.1} parent=79 // pred_region
        %p2955 = scmp.lt.s32.totalorder %s26, 2
        %s2956 = scalar_select %p2955, %s26, 2
        %s2957 = smul.addr %s2956, 8
        %s2958 = scalar_lea.vmem %s12, %s2957
      $region96: #{local_update_gcn_forward.1} parent=79 // pred_fallthru
        _
      // Predicated region
      $region97: #{local_update_gcn_forward.1} parent=79 // pred_check
        %p2959 = pneg %p357
      $region98: #{local_update_gcn_forward.1} parent=79 // pred_check_branch
        %2961 = sbr.rel (%p2959) target = $region100
      $region99: #{local_update_gcn_forward.1} parent=79 // pred_region
        %p2962 = scmp.lt.s32.totalorder %s26, 2
        %s2963 = scalar_select %p2962, %s26, 2
        %s2964 = smul.addr %s2963, 8
        %s2965 = scalar_lea.vmem %s13, %s2964
      $region100: #{local_update_gcn_forward.1} parent=79 // pred_fallthru
        _
    $region80: #{local_update_gcn_forward.1} parent=5 // pred_fallthru
      _
  $region6: #{local_update_gcn_forward.1} parent=0 // loop_footer
    %s24 = sadd.s32 1, %s20
  $region7: #{local_update_gcn_forward.1} parent=0 // loop_footer_branch
    %19 = sbr.rel target = $region3
  $region8: #{local_update_gcn_forward.1} parent=0 // loop_exit
    _

</llo_original>
